<compile_context>
chip_gen: v7x
topology: tpu7x:2x2x1
jax: 0.10.0
libtpu: 0.0.40
codegen_flags: <defaults>
</compile_context>

<pallas_src>
import jax
import jax.numpy as jnp
import numpy as np
from jax.experimental import pallas as pl
from jax.experimental.pallas import tpu as pltpu

# ----- hyperparameters (mirror MS_SSIM_L1_LOSS.__init__ defaults) -----
CHANNEL = 3
SIGMAS = (0.5, 1.0, 2.0, 4.0, 8.0)
DATA_RANGE = 1.0
K1, K2 = 0.01, 0.03
ALPHA = 0.025
COMPENSATION = 200.0
C1 = (K1 * DATA_RANGE) ** 2
C2 = (K2 * DATA_RANGE) ** 2
PAD = int(2 * SIGMAS[-1])          # 16
FSIZE = int(4 * SIGMAS[-1] + 1)    # 33
NS = len(SIGMAS)

# Folded loss constants:
#   sum_px(loss_mix) = CA * sum_px(1 - lM*PIcs) + CB * sum_c sum_px(conv(|x_c-y_c|))
CA = COMPENSATION * ALPHA
CB = COMPENSATION * (1.0 - ALPHA) / (DATA_RANGE * CHANNEL)


def _build_channel_sigma_table():
    """Unique (sigma_index, multiplicity) pairs per input channel.

    Reproduces the PyTorch grouped-conv pairing exactly: output channel o uses
    input channel o // NS and sigma index o // CHANNEL; repeats are preserved
    as integer powers (so l.prod(dim=1) * cs.prod(dim=1) is identical).
    """
    table = []
    for c in range(CHANNEL):
        counts = {}
        for o in range(CHANNEL * NS):
            if o // NS == c:
                s = o // CHANNEL
                counts[s] = counts.get(s, 0) + 1
        table.append(tuple(sorted(counts.items())))
    return tuple(table)


CH_SIGMAS = _build_channel_sigma_table()      # ((0,3),(1,2)) / ((1,1),(2,3),(3,1)) / ((3,2),(4,3))
NSIG_TOTAL = sum(len(p) for p in CH_SIGMAS)   # 7 unique (channel, sigma) pairs


# ----- Gaussian filter / band-matrix construction (plain JAX glue) -----
def gauss_1d(size, sigma):
    coords = jnp.arange(size, dtype=jnp.float32) - size // 2
    g = jnp.exp(-(coords ** 2) / (2.0 * sigma ** 2))
    return g / jnp.sum(g)


def band_matrix_clipped(dim, g):
    # A[i, j] = g[(j - i) + PAD] for |j - i| <= PAD, else 0.   Shape (dim, dim).
    # A @ x  ==  same-size zero-padded correlation of x with g (PyTorch conv2d).
    flen = g.shape[0]
    ii = jnp.arange(dim)[:, None]
    jj = jnp.arange(dim)[None, :]
    d = jj - ii + PAD
    ok = (d >= 0) & (d < flen)
    return jnp.where(ok, g[jnp.clip(d, 0, flen - 1)], 0.0).astype(jnp.float32)


# ----- Pallas kernel -----
def _fdiv(num, den):
    # EUP approximate reciprocal + one Newton-Raphson refinement (~f32 exact).
    r = pl.reciprocal(den, approx=True)
    r = r * (2.0 - den * r)
    return num * r


def ms_ssim_l1_kernel(x_ref, y_ref, ah_ref, awtcat_ref, wg_ref, out_ref):
    # x_ref, y_ref : (C, H, W)        unpadded images of this batch element
    # ah_ref       : (NS, H, H)       clipped vertical Gaussian band matrices
    # awtcat_ref   : (W, NSIG*W)      per-(channel,sigma) column groups of AwT
    # wg_ref       : (H, W)           CB-scaled rank-1 weights for the L1 term
    # out_ref      : (1, 8, 128)      per-batch partial loss sum (broadcast)
    H = ah_ref.shape[1]
    W = wg_ref.shape[1]

    lm_pics = jnp.ones((H, W), jnp.float32)   # running prod of (l*cs)^mult
    dsum = jnp.zeros((H, W), jnp.float32)     # sum_c |x_c - y_c|

    col = 0
    for c in range(CHANNEL):
        xc = x_ref[c]
        yc = y_ref[c]
        xy = xc * yc
        sq = xc * xc + yc * yc
        dsum = dsum + jnp.abs(xc - yc)

        sig_list = CH_SIGMAS[c]
        k_c = len(sig_list)

        # Horizontal conv of {x, y, x*y, x^2+y^2} for every sigma of this
        # channel in ONE matmul: (4H, W) @ (W, k_c*W) -> (4H, k_c*W).
        r = jnp.concatenate([xc, yc, xy, sq], axis=0)                  # (4H, W)
        awt_c = awtcat_ref[:, col * W:(col + k_c) * W]                 # (W, k_c*W)
        u = jnp.dot(r, awt_c, preferred_element_type=jnp.float32)      # (4H, k_c*W)

        for j, (s, mult) in enumerate(sig_list):
            a = ah_ref[s]                                              # (H, H)
            t = u[:, j * W:(j + 1) * W]                                # (4H, W)
            mux = jnp.dot(a, t[0 * H:1 * H, :], preferred_element_type=jnp.float32)
            muy = jnp.dot(a, t[1 * H:2 * H, :], preferred_element_type=jnp.float32)
            exy = jnp.dot(a, t[2 * H:3 * H, :], preferred_element_type=jnp.float32)
            esq = jnp.dot(a, t[3 * H:4 * H, :], preferred_element_type=jnp.float32)

            mux2 = mux * mux
            muy2 = muy * muy
            muxy = mux * muy
            mu2s = mux2 + muy2
            # l, cs for this unique (channel, sigma) pair
            l = _fdiv(2.0 * muxy + C1, mu2s + C1)
            cs = _fdiv(2.0 * (exy - muxy) + C2, (esq - mu2s) + C2)
            lcs = l * cs
            p = lcs
            for _ in range(mult - 1):     # preserve PyTorch repeat counts
                p = p * lcs
            lm_pics = lm_pics * p
        col += k_c

    # CA * sum_px(1 - lM*PIcs) + CB * sum_c sum_px(conv(|x_c-y_c|, g_last))
    #   = CA*H*W + sum_px( dsum * wg - CA * lm_pics )       (wg is CB-scaled)
    partial = CA * float(H * W) + jnp.sum(dsum * wg_ref[...] - CA * lm_pics)
    out_ref[...] = jnp.zeros(out_ref.shape, jnp.float32) + partial


# ----- wrapper -----
def ms_ssim_l1_loss(x, y):
    B, C, H, W = x.shape
    assert C == CHANNEL

    x2 = x.astype(jnp.float32).reshape(B * C, H, W)
    y2 = y.astype(jnp.float32).reshape(B * C, H, W)

    g1ds = [gauss_1d(FSIZE, s) for s in SIGMAS]
    ah = jnp.stack([band_matrix_clipped(H, g) for g in g1ds])          # (NS, H, H)
    awt = jnp.stack([band_matrix_clipped(W, g).T for g in g1ds])       # (NS, W, W)

    # Column-concatenated AwT's, grouped per channel in CH_SIGMAS order.
    awtcat = jnp.concatenate(
        [awt[s] for pairs in CH_SIGMAS for (s, _) in pairs], axis=1)   # (W, NSIG_TOTAL*W)

    # CB-scaled rank-1 reduction weights for the gaussian-L1 term (largest
    # sigma only):  sum_ij (Ah D AwT)_ij == sum_kl D_kl colsum(Ah)_k rowsum(AwT)_l
    wg = CB * jnp.outer(jnp.sum(ah[NS - 1], axis=0),
                        jnp.sum(awt[NS - 1], axis=1))                  # (H, W)

    out = pl.pallas_call(
        ms_ssim_l1_kernel,
        out_shape=jax.ShapeDtypeStruct((B, 8, 128), jnp.float32),
        grid_spec=pltpu.PrefetchScalarGridSpec(
            num_scalar_prefetch=0,
            grid=(B,),
            in_specs=[
                pl.BlockSpec((C, H, W), lambda b: (b, 0, 0)),
                pl.BlockSpec((C, H, W), lambda b: (b, 0, 0)),
                pl.BlockSpec((NS, H, H), lambda b: (0, 0, 0)),
                pl.BlockSpec((W, NSIG_TOTAL * W), lambda b: (0, 0)),
                pl.BlockSpec((H, W), lambda b: (0, 0)),
            ],
            out_specs=pl.BlockSpec((1, 8, 128), lambda b: (b, 0, 0)),
        ),
        compiler_params=pltpu.CompilerParams(dimension_semantics=("parallel",)),
    )(x2, y2, ah, awtcat, wg)

    # final .mean() over (B, H, W)
    return jnp.sum(out[:, 0, 0]) / (B * H * W)


# ----- pure-JAX reference (mirrors the PyTorch forward) for a sanity check -----
def reference_loss(x, y):
    g1ds = [gauss_1d(FSIZE, s) for s in SIGMAS]
    g_masks = jnp.zeros((CHANNEL * NS, 1, FSIZE, FSIZE), jnp.float32)
    for idx, g in enumerate(g1ds):
        g2d = jnp.outer(g, g)
        for c in range(CHANNEL):
            g_masks = g_masks.at[CHANNEL * idx + c, 0].set(g2d)

    def gconv(im, w):
        return jax.lax.conv_general_dilated(
            im, w, (1, 1), [(PAD, PAD), (PAD, PAD)],
            dimension_numbers=("NCHW", "OIHW", "NCHW"),
            feature_group_count=CHANNEL)

    x = x.astype(jnp.float32)
    y = y.astype(jnp.float32)
    mux = gconv(x, g_masks)
    muy = gconv(y, g_masks)
    mux2, muy2, muxy = mux * mux, muy * muy, mux * muy
    sigx2 = gconv(x * x, g_masks) - mux2
    sigy2 = gconv(y * y, g_masks) - muy2
    sigxy = gconv(x * y, g_masks) - muxy
    l = (2 * muxy + C1) / (mux2 + muy2 + C1)
    cs = (2 * sigxy + C2) / (sigx2 + sigy2 + C2)
    lM = jnp.prod(l, axis=1)
    pics = jnp.prod(cs, axis=1)
    loss_ms_ssim = 1.0 - lM * pics
    loss_l1 = jnp.abs(x - y)
    gl1 = gconv(loss_l1, g_masks[-CHANNEL:]).mean(axis=1)
    loss_mix = COMPENSATION * (ALPHA * loss_ms_ssim + (1.0 - ALPHA) * gl1 / DATA_RANGE)
    return loss_mix.mean()


if __name__ == "__main__":
    key = jax.random.PRNGKey(0)
    kx, ky = jax.random.split(key)
    B, C, H, W = 2, 3, 16, 16
    x = jax.random.uniform(kx, (B, C, H, W), dtype=jnp.float32)
    y = jax.random.uniform(ky, (B, C, H, W), dtype=jnp.float32)

    out = ms_ssim_l1_loss(x, y)
    jax.block_until_ready(out)

    ref = reference_loss(x, y)
    np.testing.assert_allclose(np.array(out), np.array(ref), rtol=2e-3, atol=2e-4)
    print("KERNEL_OK")
</pallas_src>

<mosaic_0001>
module attributes {stable_mosaic.version = 11 : i64} {
  func.func @ms_ssim_l1_kernel(%arg0: i32, %arg1: memref<3x16x16xf32, #tpu.memory_space<vmem>>, %arg2: memref<3x16x16xf32, #tpu.memory_space<vmem>>, %arg3: memref<5x16x16xf32, #tpu.memory_space<vmem>>, %arg4: memref<16x112xf32, #tpu.memory_space<vmem>>, %arg5: memref<16x16xf32, #tpu.memory_space<vmem>>, %arg6: memref<1x8x128xf32, #tpu.memory_space<vmem>>) attributes {dimension_semantics = [#tpu.dimension_semantics<parallel>], iteration_bounds = array<i64: 2>, scalar_prefetch = 0 : i64, scratch_operands = 0 : i64, tpu.core_type = #tpu.core_type<tc>, window_params = [{transform_indices = @transform_0, window_bounds = array<i64: 3, 16, 16>}, {transform_indices = @transform_1, window_bounds = array<i64: 3, 16, 16>}, {pipeline_mode = #tpu.pipeline_mode<synchronous>, transform_indices = @transform_2, window_bounds = array<i64: 5, 16, 16>}, {pipeline_mode = #tpu.pipeline_mode<synchronous>, transform_indices = @transform_3, window_bounds = array<i64: 16, 112>}, {pipeline_mode = #tpu.pipeline_mode<synchronous>, transform_indices = @transform_4, window_bounds = array<i64: 16, 16>}, {transform_indices = @transform_5, window_bounds = array<i64: 1, 8, 128>}]} {
    %cst = arith.constant 1.000000e+00 : f32
    %0 = vector.broadcast %cst : f32 to vector<16x16xf32>
    %cst_0 = arith.constant 0.000000e+00 : f32
    %1 = vector.broadcast %cst_0 : f32 to vector<16x16xf32>
    %c0 = arith.constant 0 : index
    %c0_1 = arith.constant 0 : index
    %c0_2 = arith.constant 0 : index
    %2 = vector.load %arg1[%c0, %c0_1, %c0_2] : memref<3x16x16xf32, #tpu.memory_space<vmem>>, vector<1x16x16xf32>
    %3 = vector.shape_cast %2 : vector<1x16x16xf32> to vector<16x16xf32>
    %c0_3 = arith.constant 0 : index
    %c0_4 = arith.constant 0 : index
    %c0_5 = arith.constant 0 : index
    %4 = vector.load %arg2[%c0_3, %c0_4, %c0_5] : memref<3x16x16xf32, #tpu.memory_space<vmem>>, vector<1x16x16xf32>
    %5 = vector.shape_cast %4 : vector<1x16x16xf32> to vector<16x16xf32>
    %6 = arith.mulf %3, %5 : vector<16x16xf32>
    %7 = arith.mulf %3, %3 : vector<16x16xf32>
    %8 = arith.mulf %5, %5 : vector<16x16xf32>
    %9 = arith.addf %7, %8 : vector<16x16xf32>
    %10 = arith.subf %3, %5 : vector<16x16xf32>
    %11 = math.absf %10 : vector<16x16xf32>
    %12 = arith.addf %1, %11 : vector<16x16xf32>
    %13 = tpu.concatenate %3, %5, %6, %9 in 0 : vector<16x16xf32>, vector<16x16xf32>, vector<16x16xf32>, vector<16x16xf32> -> vector<64x16xf32>
    %c0_6 = arith.constant 0 : index
    %c0_7 = arith.constant 0 : index
    %14 = vector.load %arg4[%c0_6, %c0_7] : memref<16x112xf32, #tpu.memory_space<vmem>>, vector<16x32xf32>
    %cst_8 = arith.constant dense<0.000000e+00> : vector<64x32xf32>
    %15 = tpu.matmul %13, %14, %cst_8 {dimension_numbers = #tpu.dot_dimension_numbers<[1], [0], [0], [1], [0, 0, 1, 1], [], []>} : vector<64x16xf32>, vector<16x32xf32>, vector<64x32xf32> -> vector<64x32xf32>
    %c0_9 = arith.constant 0 : index
    %c0_10 = arith.constant 0 : index
    %c0_11 = arith.constant 0 : index
    %16 = vector.load %arg3[%c0_9, %c0_10, %c0_11] : memref<5x16x16xf32, #tpu.memory_space<vmem>>, vector<1x16x16xf32>
    %17 = vector.shape_cast %16 : vector<1x16x16xf32> to vector<16x16xf32>
    %18 = vector.extract_strided_slice %15 {offsets = [0, 0], sizes = [64, 16], strides = [1, 1]} : vector<64x32xf32> to vector<64x16xf32>
    %19 = vector.extract_strided_slice %18 {offsets = [0, 0], sizes = [16, 16], strides = [1, 1]} : vector<64x16xf32> to vector<16x16xf32>
    %cst_12 = arith.constant dense<0.000000e+00> : vector<16x16xf32>
    %20 = tpu.matmul %17, %19, %cst_12 {dimension_numbers = #tpu.dot_dimension_numbers<[1], [0], [0], [1], [0, 0, 1, 1], [], []>} : vector<16x16xf32>, vector<16x16xf32>, vector<16x16xf32> -> vector<16x16xf32>
    %21 = vector.extract_strided_slice %18 {offsets = [16, 0], sizes = [16, 16], strides = [1, 1]} : vector<64x16xf32> to vector<16x16xf32>
    %cst_13 = arith.constant dense<0.000000e+00> : vector<16x16xf32>
    %22 = tpu.matmul %17, %21, %cst_13 {dimension_numbers = #tpu.dot_dimension_numbers<[1], [0], [0], [1], [0, 0, 1, 1], [], []>} : vector<16x16xf32>, vector<16x16xf32>, vector<16x16xf32> -> vector<16x16xf32>
    %23 = vector.extract_strided_slice %18 {offsets = [32, 0], sizes = [16, 16], strides = [1, 1]} : vector<64x16xf32> to vector<16x16xf32>
    %cst_14 = arith.constant dense<0.000000e+00> : vector<16x16xf32>
    %24 = tpu.matmul %17, %23, %cst_14 {dimension_numbers = #tpu.dot_dimension_numbers<[1], [0], [0], [1], [0, 0, 1, 1], [], []>} : vector<16x16xf32>, vector<16x16xf32>, vector<16x16xf32> -> vector<16x16xf32>
    %25 = vector.extract_strided_slice %18 {offsets = [48, 0], sizes = [16, 16], strides = [1, 1]} : vector<64x16xf32> to vector<16x16xf32>
    %cst_15 = arith.constant dense<0.000000e+00> : vector<16x16xf32>
    %26 = tpu.matmul %17, %25, %cst_15 {dimension_numbers = #tpu.dot_dimension_numbers<[1], [0], [0], [1], [0, 0, 1, 1], [], []>} : vector<16x16xf32>, vector<16x16xf32>, vector<16x16xf32> -> vector<16x16xf32>
    %27 = arith.mulf %20, %20 : vector<16x16xf32>
    %28 = arith.mulf %22, %22 : vector<16x16xf32>
    %29 = arith.mulf %20, %22 : vector<16x16xf32>
    %30 = arith.addf %27, %28 : vector<16x16xf32>
    %cst_16 = arith.constant 2.000000e+00 : f32
    %31 = vector.broadcast %cst_16 : f32 to vector<16x16xf32>
    %32 = arith.mulf %31, %29 : vector<16x16xf32>
    %cst_17 = arith.constant 9.99999974E-5 : f32
    %33 = vector.broadcast %cst_17 : f32 to vector<16x16xf32>
    %34 = arith.addf %32, %33 : vector<16x16xf32>
    %cst_18 = arith.constant 9.99999974E-5 : f32
    %35 = vector.broadcast %cst_18 : f32 to vector<16x16xf32>
    %36 = arith.addf %30, %35 : vector<16x16xf32>
    %37 = tpu.reciprocal %36 {approx = true} : vector<16x16xf32> -> vector<16x16xf32>
    %38 = arith.mulf %36, %37 : vector<16x16xf32>
    %cst_19 = arith.constant 2.000000e+00 : f32
    %39 = vector.broadcast %cst_19 : f32 to vector<16x16xf32>
    %40 = arith.subf %39, %38 : vector<16x16xf32>
    %41 = arith.mulf %37, %40 : vector<16x16xf32>
    %42 = arith.mulf %34, %41 : vector<16x16xf32>
    %43 = arith.subf %24, %29 : vector<16x16xf32>
    %cst_20 = arith.constant 2.000000e+00 : f32
    %44 = vector.broadcast %cst_20 : f32 to vector<16x16xf32>
    %45 = arith.mulf %44, %43 : vector<16x16xf32>
    %cst_21 = arith.constant 8.99999984E-4 : f32
    %46 = vector.broadcast %cst_21 : f32 to vector<16x16xf32>
    %47 = arith.addf %45, %46 : vector<16x16xf32>
    %48 = arith.subf %26, %30 : vector<16x16xf32>
    %cst_22 = arith.constant 8.99999984E-4 : f32
    %49 = vector.broadcast %cst_22 : f32 to vector<16x16xf32>
    %50 = arith.addf %48, %49 : vector<16x16xf32>
    %51 = tpu.reciprocal %50 {approx = true} : vector<16x16xf32> -> vector<16x16xf32>
    %52 = arith.mulf %50, %51 : vector<16x16xf32>
    %cst_23 = arith.constant 2.000000e+00 : f32
    %53 = vector.broadcast %cst_23 : f32 to vector<16x16xf32>
    %54 = arith.subf %53, %52 : vector<16x16xf32>
    %55 = arith.mulf %51, %54 : vector<16x16xf32>
    %56 = arith.mulf %47, %55 : vector<16x16xf32>
    %57 = arith.mulf %42, %56 : vector<16x16xf32>
    %58 = arith.mulf %57, %57 : vector<16x16xf32>
    %59 = arith.mulf %58, %57 : vector<16x16xf32>
    %60 = arith.mulf %0, %59 : vector<16x16xf32>
    %c1 = arith.constant 1 : index
    %c0_24 = arith.constant 0 : index
    %c0_25 = arith.constant 0 : index
    %61 = vector.load %arg3[%c1, %c0_24, %c0_25] : memref<5x16x16xf32, #tpu.memory_space<vmem>>, vector<1x16x16xf32>
    %62 = vector.shape_cast %61 : vector<1x16x16xf32> to vector<16x16xf32>
    %63 = vector.extract_strided_slice %15 {offsets = [0, 16], sizes = [64, 16], strides = [1, 1]} : vector<64x32xf32> to vector<64x16xf32>
    %64 = vector.extract_strided_slice %63 {offsets = [0, 0], sizes = [16, 16], strides = [1, 1]} : vector<64x16xf32> to vector<16x16xf32>
    %cst_26 = arith.constant dense<0.000000e+00> : vector<16x16xf32>
    %65 = tpu.matmul %62, %64, %cst_26 {dimension_numbers = #tpu.dot_dimension_numbers<[1], [0], [0], [1], [0, 0, 1, 1], [], []>} : vector<16x16xf32>, vector<16x16xf32>, vector<16x16xf32> -> vector<16x16xf32>
    %66 = vector.extract_strided_slice %63 {offsets = [16, 0], sizes = [16, 16], strides = [1, 1]} : vector<64x16xf32> to vector<16x16xf32>
    %cst_27 = arith.constant dense<0.000000e+00> : vector<16x16xf32>
    %67 = tpu.matmul %62, %66, %cst_27 {dimension_numbers = #tpu.dot_dimension_numbers<[1], [0], [0], [1], [0, 0, 1, 1], [], []>} : vector<16x16xf32>, vector<16x16xf32>, vector<16x16xf32> -> vector<16x16xf32>
    %68 = vector.extract_strided_slice %63 {offsets = [32, 0], sizes = [16, 16], strides = [1, 1]} : vector<64x16xf32> to vector<16x16xf32>
    %cst_28 = arith.constant dense<0.000000e+00> : vector<16x16xf32>
    %69 = tpu.matmul %62, %68, %cst_28 {dimension_numbers = #tpu.dot_dimension_numbers<[1], [0], [0], [1], [0, 0, 1, 1], [], []>} : vector<16x16xf32>, vector<16x16xf32>, vector<16x16xf32> -> vector<16x16xf32>
    %70 = vector.extract_strided_slice %63 {offsets = [48, 0], sizes = [16, 16], strides = [1, 1]} : vector<64x16xf32> to vector<16x16xf32>
    %cst_29 = arith.constant dense<0.000000e+00> : vector<16x16xf32>
    %71 = tpu.matmul %62, %70, %cst_29 {dimension_numbers = #tpu.dot_dimension_numbers<[1], [0], [0], [1], [0, 0, 1, 1], [], []>} : vector<16x16xf32>, vector<16x16xf32>, vector<16x16xf32> -> vector<16x16xf32>
    %72 = arith.mulf %65, %65 : vector<16x16xf32>
    %73 = arith.mulf %67, %67 : vector<16x16xf32>
    %74 = arith.mulf %65, %67 : vector<16x16xf32>
    %75 = arith.addf %72, %73 : vector<16x16xf32>
    %cst_30 = arith.constant 2.000000e+00 : f32
    %76 = vector.broadcast %cst_30 : f32 to vector<16x16xf32>
    %77 = arith.mulf %76, %74 : vector<16x16xf32>
    %cst_31 = arith.constant 9.99999974E-5 : f32
    %78 = vector.broadcast %cst_31 : f32 to vector<16x16xf32>
    %79 = arith.addf %77, %78 : vector<16x16xf32>
    %cst_32 = arith.constant 9.99999974E-5 : f32
    %80 = vector.broadcast %cst_32 : f32 to vector<16x16xf32>
    %81 = arith.addf %75, %80 : vector<16x16xf32>
    %82 = tpu.reciprocal %81 {approx = true} : vector<16x16xf32> -> vector<16x16xf32>
    %83 = arith.mulf %81, %82 : vector<16x16xf32>
    %cst_33 = arith.constant 2.000000e+00 : f32
    %84 = vector.broadcast %cst_33 : f32 to vector<16x16xf32>
    %85 = arith.subf %84, %83 : vector<16x16xf32>
    %86 = arith.mulf %82, %85 : vector<16x16xf32>
    %87 = arith.mulf %79, %86 : vector<16x16xf32>
    %88 = arith.subf %69, %74 : vector<16x16xf32>
    %cst_34 = arith.constant 2.000000e+00 : f32
    %89 = vector.broadcast %cst_34 : f32 to vector<16x16xf32>
    %90 = arith.mulf %89, %88 : vector<16x16xf32>
    %cst_35 = arith.constant 8.99999984E-4 : f32
    %91 = vector.broadcast %cst_35 : f32 to vector<16x16xf32>
    %92 = arith.addf %90, %91 : vector<16x16xf32>
    %93 = arith.subf %71, %75 : vector<16x16xf32>
    %cst_36 = arith.constant 8.99999984E-4 : f32
    %94 = vector.broadcast %cst_36 : f32 to vector<16x16xf32>
    %95 = arith.addf %93, %94 : vector<16x16xf32>
    %96 = tpu.reciprocal %95 {approx = true} : vector<16x16xf32> -> vector<16x16xf32>
    %97 = arith.mulf %95, %96 : vector<16x16xf32>
    %cst_37 = arith.constant 2.000000e+00 : f32
    %98 = vector.broadcast %cst_37 : f32 to vector<16x16xf32>
    %99 = arith.subf %98, %97 : vector<16x16xf32>
    %100 = arith.mulf %96, %99 : vector<16x16xf32>
    %101 = arith.mulf %92, %100 : vector<16x16xf32>
    %102 = arith.mulf %87, %101 : vector<16x16xf32>
    %103 = arith.mulf %102, %102 : vector<16x16xf32>
    %104 = arith.mulf %60, %103 : vector<16x16xf32>
    %c1_38 = arith.constant 1 : index
    %c0_39 = arith.constant 0 : index
    %c0_40 = arith.constant 0 : index
    %105 = vector.load %arg1[%c1_38, %c0_39, %c0_40] : memref<3x16x16xf32, #tpu.memory_space<vmem>>, vector<1x16x16xf32>
    %106 = vector.shape_cast %105 : vector<1x16x16xf32> to vector<16x16xf32>
    %c1_41 = arith.constant 1 : index
    %c0_42 = arith.constant 0 : index
    %c0_43 = arith.constant 0 : index
    %107 = vector.load %arg2[%c1_41, %c0_42, %c0_43] : memref<3x16x16xf32, #tpu.memory_space<vmem>>, vector<1x16x16xf32>
    %108 = vector.shape_cast %107 : vector<1x16x16xf32> to vector<16x16xf32>
    %109 = arith.mulf %106, %108 : vector<16x16xf32>
    %110 = arith.mulf %106, %106 : vector<16x16xf32>
    %111 = arith.mulf %108, %108 : vector<16x16xf32>
    %112 = arith.addf %110, %111 : vector<16x16xf32>
    %113 = arith.subf %106, %108 : vector<16x16xf32>
    %114 = math.absf %113 : vector<16x16xf32>
    %115 = arith.addf %12, %114 : vector<16x16xf32>
    %116 = tpu.concatenate %106, %108, %109, %112 in 0 : vector<16x16xf32>, vector<16x16xf32>, vector<16x16xf32>, vector<16x16xf32> -> vector<64x16xf32>
    %c0_44 = arith.constant 0 : index
    %c32 = arith.constant 32 : index
    %117 = vector.load %arg4[%c0_44, %c32] : memref<16x112xf32, #tpu.memory_space<vmem>>, vector<16x48xf32>
    %cst_45 = arith.constant dense<0.000000e+00> : vector<64x48xf32>
    %118 = tpu.matmul %116, %117, %cst_45 {dimension_numbers = #tpu.dot_dimension_numbers<[1], [0], [0], [1], [0, 0, 1, 1], [], []>} : vector<64x16xf32>, vector<16x48xf32>, vector<64x48xf32> -> vector<64x48xf32>
    %c1_46 = arith.constant 1 : index
    %c0_47 = arith.constant 0 : index
    %c0_48 = arith.constant 0 : index
    %119 = vector.load %arg3[%c1_46, %c0_47, %c0_48] : memref<5x16x16xf32, #tpu.memory_space<vmem>>, vector<1x16x16xf32>
    %120 = vector.shape_cast %119 : vector<1x16x16xf32> to vector<16x16xf32>
    %121 = vector.extract_strided_slice %118 {offsets = [0, 0], sizes = [64, 16], strides = [1, 1]} : vector<64x48xf32> to vector<64x16xf32>
    %122 = vector.extract_strided_slice %121 {offsets = [0, 0], sizes = [16, 16], strides = [1, 1]} : vector<64x16xf32> to vector<16x16xf32>
    %cst_49 = arith.constant dense<0.000000e+00> : vector<16x16xf32>
    %123 = tpu.matmul %120, %122, %cst_49 {dimension_numbers = #tpu.dot_dimension_numbers<[1], [0], [0], [1], [0, 0, 1, 1], [], []>} : vector<16x16xf32>, vector<16x16xf32>, vector<16x16xf32> -> vector<16x16xf32>
    %124 = vector.extract_strided_slice %121 {offsets = [16, 0], sizes = [16, 16], strides = [1, 1]} : vector<64x16xf32> to vector<16x16xf32>
    %cst_50 = arith.constant dense<0.000000e+00> : vector<16x16xf32>
    %125 = tpu.matmul %120, %124, %cst_50 {dimension_numbers = #tpu.dot_dimension_numbers<[1], [0], [0], [1], [0, 0, 1, 1], [], []>} : vector<16x16xf32>, vector<16x16xf32>, vector<16x16xf32> -> vector<16x16xf32>
    %126 = vector.extract_strided_slice %121 {offsets = [32, 0], sizes = [16, 16], strides = [1, 1]} : vector<64x16xf32> to vector<16x16xf32>
    %cst_51 = arith.constant dense<0.000000e+00> : vector<16x16xf32>
    %127 = tpu.matmul %120, %126, %cst_51 {dimension_numbers = #tpu.dot_dimension_numbers<[1], [0], [0], [1], [0, 0, 1, 1], [], []>} : vector<16x16xf32>, vector<16x16xf32>, vector<16x16xf32> -> vector<16x16xf32>
    %128 = vector.extract_strided_slice %121 {offsets = [48, 0], sizes = [16, 16], strides = [1, 1]} : vector<64x16xf32> to vector<16x16xf32>
    %cst_52 = arith.constant dense<0.000000e+00> : vector<16x16xf32>
    %129 = tpu.matmul %120, %128, %cst_52 {dimension_numbers = #tpu.dot_dimension_numbers<[1], [0], [0], [1], [0, 0, 1, 1], [], []>} : vector<16x16xf32>, vector<16x16xf32>, vector<16x16xf32> -> vector<16x16xf32>
    %130 = arith.mulf %123, %123 : vector<16x16xf32>
    %131 = arith.mulf %125, %125 : vector<16x16xf32>
    %132 = arith.mulf %123, %125 : vector<16x16xf32>
    %133 = arith.addf %130, %131 : vector<16x16xf32>
    %cst_53 = arith.constant 2.000000e+00 : f32
    %134 = vector.broadcast %cst_53 : f32 to vector<16x16xf32>
    %135 = arith.mulf %134, %132 : vector<16x16xf32>
    %cst_54 = arith.constant 9.99999974E-5 : f32
    %136 = vector.broadcast %cst_54 : f32 to vector<16x16xf32>
    %137 = arith.addf %135, %136 : vector<16x16xf32>
    %cst_55 = arith.constant 9.99999974E-5 : f32
    %138 = vector.broadcast %cst_55 : f32 to vector<16x16xf32>
    %139 = arith.addf %133, %138 : vector<16x16xf32>
    %140 = tpu.reciprocal %139 {approx = true} : vector<16x16xf32> -> vector<16x16xf32>
    %141 = arith.mulf %139, %140 : vector<16x16xf32>
    %cst_56 = arith.constant 2.000000e+00 : f32
    %142 = vector.broadcast %cst_56 : f32 to vector<16x16xf32>
    %143 = arith.subf %142, %141 : vector<16x16xf32>
    %144 = arith.mulf %140, %143 : vector<16x16xf32>
    %145 = arith.mulf %137, %144 : vector<16x16xf32>
    %146 = arith.subf %127, %132 : vector<16x16xf32>
    %cst_57 = arith.constant 2.000000e+00 : f32
    %147 = vector.broadcast %cst_57 : f32 to vector<16x16xf32>
    %148 = arith.mulf %147, %146 : vector<16x16xf32>
    %cst_58 = arith.constant 8.99999984E-4 : f32
    %149 = vector.broadcast %cst_58 : f32 to vector<16x16xf32>
    %150 = arith.addf %148, %149 : vector<16x16xf32>
    %151 = arith.subf %129, %133 : vector<16x16xf32>
    %cst_59 = arith.constant 8.99999984E-4 : f32
    %152 = vector.broadcast %cst_59 : f32 to vector<16x16xf32>
    %153 = arith.addf %151, %152 : vector<16x16xf32>
    %154 = tpu.reciprocal %153 {approx = true} : vector<16x16xf32> -> vector<16x16xf32>
    %155 = arith.mulf %153, %154 : vector<16x16xf32>
    %cst_60 = arith.constant 2.000000e+00 : f32
    %156 = vector.broadcast %cst_60 : f32 to vector<16x16xf32>
    %157 = arith.subf %156, %155 : vector<16x16xf32>
    %158 = arith.mulf %154, %157 : vector<16x16xf32>
    %159 = arith.mulf %150, %158 : vector<16x16xf32>
    %160 = arith.mulf %145, %159 : vector<16x16xf32>
    %161 = arith.mulf %104, %160 : vector<16x16xf32>
    %c2 = arith.constant 2 : index
    %c0_61 = arith.constant 0 : index
    %c0_62 = arith.constant 0 : index
    %162 = vector.load %arg3[%c2, %c0_61, %c0_62] : memref<5x16x16xf32, #tpu.memory_space<vmem>>, vector<1x16x16xf32>
    %163 = vector.shape_cast %162 : vector<1x16x16xf32> to vector<16x16xf32>
    %164 = vector.extract_strided_slice %118 {offsets = [0, 16], sizes = [64, 16], strides = [1, 1]} : vector<64x48xf32> to vector<64x16xf32>
    %165 = vector.extract_strided_slice %164 {offsets = [0, 0], sizes = [16, 16], strides = [1, 1]} : vector<64x16xf32> to vector<16x16xf32>
    %cst_63 = arith.constant dense<0.000000e+00> : vector<16x16xf32>
    %166 = tpu.matmul %163, %165, %cst_63 {dimension_numbers = #tpu.dot_dimension_numbers<[1], [0], [0], [1], [0, 0, 1, 1], [], []>} : vector<16x16xf32>, vector<16x16xf32>, vector<16x16xf32> -> vector<16x16xf32>
    %167 = vector.extract_strided_slice %164 {offsets = [16, 0], sizes = [16, 16], strides = [1, 1]} : vector<64x16xf32> to vector<16x16xf32>
    %cst_64 = arith.constant dense<0.000000e+00> : vector<16x16xf32>
    %168 = tpu.matmul %163, %167, %cst_64 {dimension_numbers = #tpu.dot_dimension_numbers<[1], [0], [0], [1], [0, 0, 1, 1], [], []>} : vector<16x16xf32>, vector<16x16xf32>, vector<16x16xf32> -> vector<16x16xf32>
    %169 = vector.extract_strided_slice %164 {offsets = [32, 0], sizes = [16, 16], strides = [1, 1]} : vector<64x16xf32> to vector<16x16xf32>
    %cst_65 = arith.constant dense<0.000000e+00> : vector<16x16xf32>
    %170 = tpu.matmul %163, %169, %cst_65 {dimension_numbers = #tpu.dot_dimension_numbers<[1], [0], [0], [1], [0, 0, 1, 1], [], []>} : vector<16x16xf32>, vector<16x16xf32>, vector<16x16xf32> -> vector<16x16xf32>
    %171 = vector.extract_strided_slice %164 {offsets = [48, 0], sizes = [16, 16], strides = [1, 1]} : vector<64x16xf32> to vector<16x16xf32>
    %cst_66 = arith.constant dense<0.000000e+00> : vector<16x16xf32>
    %172 = tpu.matmul %163, %171, %cst_66 {dimension_numbers = #tpu.dot_dimension_numbers<[1], [0], [0], [1], [0, 0, 1, 1], [], []>} : vector<16x16xf32>, vector<16x16xf32>, vector<16x16xf32> -> vector<16x16xf32>
    %173 = arith.mulf %166, %166 : vector<16x16xf32>
    %174 = arith.mulf %168, %168 : vector<16x16xf32>
    %175 = arith.mulf %166, %168 : vector<16x16xf32>
    %176 = arith.addf %173, %174 : vector<16x16xf32>
    %cst_67 = arith.constant 2.000000e+00 : f32
    %177 = vector.broadcast %cst_67 : f32 to vector<16x16xf32>
    %178 = arith.mulf %177, %175 : vector<16x16xf32>
    %cst_68 = arith.constant 9.99999974E-5 : f32
    %179 = vector.broadcast %cst_68 : f32 to vector<16x16xf32>
    %180 = arith.addf %178, %179 : vector<16x16xf32>
    %cst_69 = arith.constant 9.99999974E-5 : f32
    %181 = vector.broadcast %cst_69 : f32 to vector<16x16xf32>
    %182 = arith.addf %176, %181 : vector<16x16xf32>
    %183 = tpu.reciprocal %182 {approx = true} : vector<16x16xf32> -> vector<16x16xf32>
    %184 = arith.mulf %182, %183 : vector<16x16xf32>
    %cst_70 = arith.constant 2.000000e+00 : f32
    %185 = vector.broadcast %cst_70 : f32 to vector<16x16xf32>
    %186 = arith.subf %185, %184 : vector<16x16xf32>
    %187 = arith.mulf %183, %186 : vector<16x16xf32>
    %188 = arith.mulf %180, %187 : vector<16x16xf32>
    %189 = arith.subf %170, %175 : vector<16x16xf32>
    %cst_71 = arith.constant 2.000000e+00 : f32
    %190 = vector.broadcast %cst_71 : f32 to vector<16x16xf32>
    %191 = arith.mulf %190, %189 : vector<16x16xf32>
    %cst_72 = arith.constant 8.99999984E-4 : f32
    %192 = vector.broadcast %cst_72 : f32 to vector<16x16xf32>
    %193 = arith.addf %191, %192 : vector<16x16xf32>
    %194 = arith.subf %172, %176 : vector<16x16xf32>
    %cst_73 = arith.constant 8.99999984E-4 : f32
    %195 = vector.broadcast %cst_73 : f32 to vector<16x16xf32>
    %196 = arith.addf %194, %195 : vector<16x16xf32>
    %197 = tpu.reciprocal %196 {approx = true} : vector<16x16xf32> -> vector<16x16xf32>
    %198 = arith.mulf %196, %197 : vector<16x16xf32>
    %cst_74 = arith.constant 2.000000e+00 : f32
    %199 = vector.broadcast %cst_74 : f32 to vector<16x16xf32>
    %200 = arith.subf %199, %198 : vector<16x16xf32>
    %201 = arith.mulf %197, %200 : vector<16x16xf32>
    %202 = arith.mulf %193, %201 : vector<16x16xf32>
    %203 = arith.mulf %188, %202 : vector<16x16xf32>
    %204 = arith.mulf %203, %203 : vector<16x16xf32>
    %205 = arith.mulf %204, %203 : vector<16x16xf32>
    %206 = arith.mulf %161, %205 : vector<16x16xf32>
    %c3 = arith.constant 3 : index
    %c0_75 = arith.constant 0 : index
    %c0_76 = arith.constant 0 : index
    %207 = vector.load %arg3[%c3, %c0_75, %c0_76] : memref<5x16x16xf32, #tpu.memory_space<vmem>>, vector<1x16x16xf32>
    %208 = vector.shape_cast %207 : vector<1x16x16xf32> to vector<16x16xf32>
    %209 = vector.extract_strided_slice %118 {offsets = [0, 32], sizes = [64, 16], strides = [1, 1]} : vector<64x48xf32> to vector<64x16xf32>
    %210 = vector.extract_strided_slice %209 {offsets = [0, 0], sizes = [16, 16], strides = [1, 1]} : vector<64x16xf32> to vector<16x16xf32>
    %cst_77 = arith.constant dense<0.000000e+00> : vector<16x16xf32>
    %211 = tpu.matmul %208, %210, %cst_77 {dimension_numbers = #tpu.dot_dimension_numbers<[1], [0], [0], [1], [0, 0, 1, 1], [], []>} : vector<16x16xf32>, vector<16x16xf32>, vector<16x16xf32> -> vector<16x16xf32>
    %212 = vector.extract_strided_slice %209 {offsets = [16, 0], sizes = [16, 16], strides = [1, 1]} : vector<64x16xf32> to vector<16x16xf32>
    %cst_78 = arith.constant dense<0.000000e+00> : vector<16x16xf32>
    %213 = tpu.matmul %208, %212, %cst_78 {dimension_numbers = #tpu.dot_dimension_numbers<[1], [0], [0], [1], [0, 0, 1, 1], [], []>} : vector<16x16xf32>, vector<16x16xf32>, vector<16x16xf32> -> vector<16x16xf32>
    %214 = vector.extract_strided_slice %209 {offsets = [32, 0], sizes = [16, 16], strides = [1, 1]} : vector<64x16xf32> to vector<16x16xf32>
    %cst_79 = arith.constant dense<0.000000e+00> : vector<16x16xf32>
    %215 = tpu.matmul %208, %214, %cst_79 {dimension_numbers = #tpu.dot_dimension_numbers<[1], [0], [0], [1], [0, 0, 1, 1], [], []>} : vector<16x16xf32>, vector<16x16xf32>, vector<16x16xf32> -> vector<16x16xf32>
    %216 = vector.extract_strided_slice %209 {offsets = [48, 0], sizes = [16, 16], strides = [1, 1]} : vector<64x16xf32> to vector<16x16xf32>
    %cst_80 = arith.constant dense<0.000000e+00> : vector<16x16xf32>
    %217 = tpu.matmul %208, %216, %cst_80 {dimension_numbers = #tpu.dot_dimension_numbers<[1], [0], [0], [1], [0, 0, 1, 1], [], []>} : vector<16x16xf32>, vector<16x16xf32>, vector<16x16xf32> -> vector<16x16xf32>
    %218 = arith.mulf %211, %211 : vector<16x16xf32>
    %219 = arith.mulf %213, %213 : vector<16x16xf32>
    %220 = arith.mulf %211, %213 : vector<16x16xf32>
    %221 = arith.addf %218, %219 : vector<16x16xf32>
    %cst_81 = arith.constant 2.000000e+00 : f32
    %222 = vector.broadcast %cst_81 : f32 to vector<16x16xf32>
    %223 = arith.mulf %222, %220 : vector<16x16xf32>
    %cst_82 = arith.constant 9.99999974E-5 : f32
    %224 = vector.broadcast %cst_82 : f32 to vector<16x16xf32>
    %225 = arith.addf %223, %224 : vector<16x16xf32>
    %cst_83 = arith.constant 9.99999974E-5 : f32
    %226 = vector.broadcast %cst_83 : f32 to vector<16x16xf32>
    %227 = arith.addf %221, %226 : vector<16x16xf32>
    %228 = tpu.reciprocal %227 {approx = true} : vector<16x16xf32> -> vector<16x16xf32>
    %229 = arith.mulf %227, %228 : vector<16x16xf32>
    %cst_84 = arith.constant 2.000000e+00 : f32
    %230 = vector.broadcast %cst_84 : f32 to vector<16x16xf32>
    %231 = arith.subf %230, %229 : vector<16x16xf32>
    %232 = arith.mulf %228, %231 : vector<16x16xf32>
    %233 = arith.mulf %225, %232 : vector<16x16xf32>
    %234 = arith.subf %215, %220 : vector<16x16xf32>
    %cst_85 = arith.constant 2.000000e+00 : f32
    %235 = vector.broadcast %cst_85 : f32 to vector<16x16xf32>
    %236 = arith.mulf %235, %234 : vector<16x16xf32>
    %cst_86 = arith.constant 8.99999984E-4 : f32
    %237 = vector.broadcast %cst_86 : f32 to vector<16x16xf32>
    %238 = arith.addf %236, %237 : vector<16x16xf32>
    %239 = arith.subf %217, %221 : vector<16x16xf32>
    %cst_87 = arith.constant 8.99999984E-4 : f32
    %240 = vector.broadcast %cst_87 : f32 to vector<16x16xf32>
    %241 = arith.addf %239, %240 : vector<16x16xf32>
    %242 = tpu.reciprocal %241 {approx = true} : vector<16x16xf32> -> vector<16x16xf32>
    %243 = arith.mulf %241, %242 : vector<16x16xf32>
    %cst_88 = arith.constant 2.000000e+00 : f32
    %244 = vector.broadcast %cst_88 : f32 to vector<16x16xf32>
    %245 = arith.subf %244, %243 : vector<16x16xf32>
    %246 = arith.mulf %242, %245 : vector<16x16xf32>
    %247 = arith.mulf %238, %246 : vector<16x16xf32>
    %248 = arith.mulf %233, %247 : vector<16x16xf32>
    %249 = arith.mulf %206, %248 : vector<16x16xf32>
    %c2_89 = arith.constant 2 : index
    %c0_90 = arith.constant 0 : index
    %c0_91 = arith.constant 0 : index
    %250 = vector.load %arg1[%c2_89, %c0_90, %c0_91] : memref<3x16x16xf32, #tpu.memory_space<vmem>>, vector<1x16x16xf32>
    %251 = vector.shape_cast %250 : vector<1x16x16xf32> to vector<16x16xf32>
    %c2_92 = arith.constant 2 : index
    %c0_93 = arith.constant 0 : index
    %c0_94 = arith.constant 0 : index
    %252 = vector.load %arg2[%c2_92, %c0_93, %c0_94] : memref<3x16x16xf32, #tpu.memory_space<vmem>>, vector<1x16x16xf32>
    %253 = vector.shape_cast %252 : vector<1x16x16xf32> to vector<16x16xf32>
    %254 = arith.mulf %251, %253 : vector<16x16xf32>
    %255 = arith.mulf %251, %251 : vector<16x16xf32>
    %256 = arith.mulf %253, %253 : vector<16x16xf32>
    %257 = arith.addf %255, %256 : vector<16x16xf32>
    %258 = arith.subf %251, %253 : vector<16x16xf32>
    %259 = math.absf %258 : vector<16x16xf32>
    %260 = arith.addf %115, %259 : vector<16x16xf32>
    %261 = tpu.concatenate %251, %253, %254, %257 in 0 : vector<16x16xf32>, vector<16x16xf32>, vector<16x16xf32>, vector<16x16xf32> -> vector<64x16xf32>
    %c0_95 = arith.constant 0 : index
    %c80 = arith.constant 80 : index
    %262 = vector.load %arg4[%c0_95, %c80] : memref<16x112xf32, #tpu.memory_space<vmem>>, vector<16x32xf32>
    %cst_96 = arith.constant dense<0.000000e+00> : vector<64x32xf32>
    %263 = tpu.matmul %261, %262, %cst_96 {dimension_numbers = #tpu.dot_dimension_numbers<[1], [0], [0], [1], [0, 0, 1, 1], [], []>} : vector<64x16xf32>, vector<16x32xf32>, vector<64x32xf32> -> vector<64x32xf32>
    %c3_97 = arith.constant 3 : index
    %c0_98 = arith.constant 0 : index
    %c0_99 = arith.constant 0 : index
    %264 = vector.load %arg3[%c3_97, %c0_98, %c0_99] : memref<5x16x16xf32, #tpu.memory_space<vmem>>, vector<1x16x16xf32>
    %265 = vector.shape_cast %264 : vector<1x16x16xf32> to vector<16x16xf32>
    %266 = vector.extract_strided_slice %263 {offsets = [0, 0], sizes = [64, 16], strides = [1, 1]} : vector<64x32xf32> to vector<64x16xf32>
    %267 = vector.extract_strided_slice %266 {offsets = [0, 0], sizes = [16, 16], strides = [1, 1]} : vector<64x16xf32> to vector<16x16xf32>
    %cst_100 = arith.constant dense<0.000000e+00> : vector<16x16xf32>
    %268 = tpu.matmul %265, %267, %cst_100 {dimension_numbers = #tpu.dot_dimension_numbers<[1], [0], [0], [1], [0, 0, 1, 1], [], []>} : vector<16x16xf32>, vector<16x16xf32>, vector<16x16xf32> -> vector<16x16xf32>
    %269 = vector.extract_strided_slice %266 {offsets = [16, 0], sizes = [16, 16], strides = [1, 1]} : vector<64x16xf32> to vector<16x16xf32>
    %cst_101 = arith.constant dense<0.000000e+00> : vector<16x16xf32>
    %270 = tpu.matmul %265, %269, %cst_101 {dimension_numbers = #tpu.dot_dimension_numbers<[1], [0], [0], [1], [0, 0, 1, 1], [], []>} : vector<16x16xf32>, vector<16x16xf32>, vector<16x16xf32> -> vector<16x16xf32>
    %271 = vector.extract_strided_slice %266 {offsets = [32, 0], sizes = [16, 16], strides = [1, 1]} : vector<64x16xf32> to vector<16x16xf32>
    %cst_102 = arith.constant dense<0.000000e+00> : vector<16x16xf32>
    %272 = tpu.matmul %265, %271, %cst_102 {dimension_numbers = #tpu.dot_dimension_numbers<[1], [0], [0], [1], [0, 0, 1, 1], [], []>} : vector<16x16xf32>, vector<16x16xf32>, vector<16x16xf32> -> vector<16x16xf32>
    %273 = vector.extract_strided_slice %266 {offsets = [48, 0], sizes = [16, 16], strides = [1, 1]} : vector<64x16xf32> to vector<16x16xf32>
    %cst_103 = arith.constant dense<0.000000e+00> : vector<16x16xf32>
    %274 = tpu.matmul %265, %273, %cst_103 {dimension_numbers = #tpu.dot_dimension_numbers<[1], [0], [0], [1], [0, 0, 1, 1], [], []>} : vector<16x16xf32>, vector<16x16xf32>, vector<16x16xf32> -> vector<16x16xf32>
    %275 = arith.mulf %268, %268 : vector<16x16xf32>
    %276 = arith.mulf %270, %270 : vector<16x16xf32>
    %277 = arith.mulf %268, %270 : vector<16x16xf32>
    %278 = arith.addf %275, %276 : vector<16x16xf32>
    %cst_104 = arith.constant 2.000000e+00 : f32
    %279 = vector.broadcast %cst_104 : f32 to vector<16x16xf32>
    %280 = arith.mulf %279, %277 : vector<16x16xf32>
    %cst_105 = arith.constant 9.99999974E-5 : f32
    %281 = vector.broadcast %cst_105 : f32 to vector<16x16xf32>
    %282 = arith.addf %280, %281 : vector<16x16xf32>
    %cst_106 = arith.constant 9.99999974E-5 : f32
    %283 = vector.broadcast %cst_106 : f32 to vector<16x16xf32>
    %284 = arith.addf %278, %283 : vector<16x16xf32>
    %285 = tpu.reciprocal %284 {approx = true} : vector<16x16xf32> -> vector<16x16xf32>
    %286 = arith.mulf %284, %285 : vector<16x16xf32>
    %cst_107 = arith.constant 2.000000e+00 : f32
    %287 = vector.broadcast %cst_107 : f32 to vector<16x16xf32>
    %288 = arith.subf %287, %286 : vector<16x16xf32>
    %289 = arith.mulf %285, %288 : vector<16x16xf32>
    %290 = arith.mulf %282, %289 : vector<16x16xf32>
    %291 = arith.subf %272, %277 : vector<16x16xf32>
    %cst_108 = arith.constant 2.000000e+00 : f32
    %292 = vector.broadcast %cst_108 : f32 to vector<16x16xf32>
    %293 = arith.mulf %292, %291 : vector<16x16xf32>
    %cst_109 = arith.constant 8.99999984E-4 : f32
    %294 = vector.broadcast %cst_109 : f32 to vector<16x16xf32>
    %295 = arith.addf %293, %294 : vector<16x16xf32>
    %296 = arith.subf %274, %278 : vector<16x16xf32>
    %cst_110 = arith.constant 8.99999984E-4 : f32
    %297 = vector.broadcast %cst_110 : f32 to vector<16x16xf32>
    %298 = arith.addf %296, %297 : vector<16x16xf32>
    %299 = tpu.reciprocal %298 {approx = true} : vector<16x16xf32> -> vector<16x16xf32>
    %300 = arith.mulf %298, %299 : vector<16x16xf32>
    %cst_111 = arith.constant 2.000000e+00 : f32
    %301 = vector.broadcast %cst_111 : f32 to vector<16x16xf32>
    %302 = arith.subf %301, %300 : vector<16x16xf32>
    %303 = arith.mulf %299, %302 : vector<16x16xf32>
    %304 = arith.mulf %295, %303 : vector<16x16xf32>
    %305 = arith.mulf %290, %304 : vector<16x16xf32>
    %306 = arith.mulf %305, %305 : vector<16x16xf32>
    %307 = arith.mulf %249, %306 : vector<16x16xf32>
    %c4 = arith.constant 4 : index
    %c0_112 = arith.constant 0 : index
    %c0_113 = arith.constant 0 : index
    %308 = vector.load %arg3[%c4, %c0_112, %c0_113] : memref<5x16x16xf32, #tpu.memory_space<vmem>>, vector<1x16x16xf32>
    %309 = vector.shape_cast %308 : vector<1x16x16xf32> to vector<16x16xf32>
    %310 = vector.extract_strided_slice %263 {offsets = [0, 16], sizes = [64, 16], strides = [1, 1]} : vector<64x32xf32> to vector<64x16xf32>
    %311 = vector.extract_strided_slice %310 {offsets = [0, 0], sizes = [16, 16], strides = [1, 1]} : vector<64x16xf32> to vector<16x16xf32>
    %cst_114 = arith.constant dense<0.000000e+00> : vector<16x16xf32>
    %312 = tpu.matmul %309, %311, %cst_114 {dimension_numbers = #tpu.dot_dimension_numbers<[1], [0], [0], [1], [0, 0, 1, 1], [], []>} : vector<16x16xf32>, vector<16x16xf32>, vector<16x16xf32> -> vector<16x16xf32>
    %313 = vector.extract_strided_slice %310 {offsets = [16, 0], sizes = [16, 16], strides = [1, 1]} : vector<64x16xf32> to vector<16x16xf32>
    %cst_115 = arith.constant dense<0.000000e+00> : vector<16x16xf32>
    %314 = tpu.matmul %309, %313, %cst_115 {dimension_numbers = #tpu.dot_dimension_numbers<[1], [0], [0], [1], [0, 0, 1, 1], [], []>} : vector<16x16xf32>, vector<16x16xf32>, vector<16x16xf32> -> vector<16x16xf32>
    %315 = vector.extract_strided_slice %310 {offsets = [32, 0], sizes = [16, 16], strides = [1, 1]} : vector<64x16xf32> to vector<16x16xf32>
    %cst_116 = arith.constant dense<0.000000e+00> : vector<16x16xf32>
    %316 = tpu.matmul %309, %315, %cst_116 {dimension_numbers = #tpu.dot_dimension_numbers<[1], [0], [0], [1], [0, 0, 1, 1], [], []>} : vector<16x16xf32>, vector<16x16xf32>, vector<16x16xf32> -> vector<16x16xf32>
    %317 = vector.extract_strided_slice %310 {offsets = [48, 0], sizes = [16, 16], strides = [1, 1]} : vector<64x16xf32> to vector<16x16xf32>
    %cst_117 = arith.constant dense<0.000000e+00> : vector<16x16xf32>
    %318 = tpu.matmul %309, %317, %cst_117 {dimension_numbers = #tpu.dot_dimension_numbers<[1], [0], [0], [1], [0, 0, 1, 1], [], []>} : vector<16x16xf32>, vector<16x16xf32>, vector<16x16xf32> -> vector<16x16xf32>
    %319 = arith.mulf %312, %312 : vector<16x16xf32>
    %320 = arith.mulf %314, %314 : vector<16x16xf32>
    %321 = arith.mulf %312, %314 : vector<16x16xf32>
    %322 = arith.addf %319, %320 : vector<16x16xf32>
    %cst_118 = arith.constant 2.000000e+00 : f32
    %323 = vector.broadcast %cst_118 : f32 to vector<16x16xf32>
    %324 = arith.mulf %323, %321 : vector<16x16xf32>
    %cst_119 = arith.constant 9.99999974E-5 : f32
    %325 = vector.broadcast %cst_119 : f32 to vector<16x16xf32>
    %326 = arith.addf %324, %325 : vector<16x16xf32>
    %cst_120 = arith.constant 9.99999974E-5 : f32
    %327 = vector.broadcast %cst_120 : f32 to vector<16x16xf32>
    %328 = arith.addf %322, %327 : vector<16x16xf32>
    %329 = tpu.reciprocal %328 {approx = true} : vector<16x16xf32> -> vector<16x16xf32>
    %330 = arith.mulf %328, %329 : vector<16x16xf32>
    %cst_121 = arith.constant 2.000000e+00 : f32
    %331 = vector.broadcast %cst_121 : f32 to vector<16x16xf32>
    %332 = arith.subf %331, %330 : vector<16x16xf32>
    %333 = arith.mulf %329, %332 : vector<16x16xf32>
    %334 = arith.mulf %326, %333 : vector<16x16xf32>
    %335 = arith.subf %316, %321 : vector<16x16xf32>
    %cst_122 = arith.constant 2.000000e+00 : f32
    %336 = vector.broadcast %cst_122 : f32 to vector<16x16xf32>
    %337 = arith.mulf %336, %335 : vector<16x16xf32>
    %cst_123 = arith.constant 8.99999984E-4 : f32
    %338 = vector.broadcast %cst_123 : f32 to vector<16x16xf32>
    %339 = arith.addf %337, %338 : vector<16x16xf32>
    %340 = arith.subf %318, %322 : vector<16x16xf32>
    %cst_124 = arith.constant 8.99999984E-4 : f32
    %341 = vector.broadcast %cst_124 : f32 to vector<16x16xf32>
    %342 = arith.addf %340, %341 : vector<16x16xf32>
    %343 = tpu.reciprocal %342 {approx = true} : vector<16x16xf32> -> vector<16x16xf32>
    %344 = arith.mulf %342, %343 : vector<16x16xf32>
    %cst_125 = arith.constant 2.000000e+00 : f32
    %345 = vector.broadcast %cst_125 : f32 to vector<16x16xf32>
    %346 = arith.subf %345, %344 : vector<16x16xf32>
    %347 = arith.mulf %343, %346 : vector<16x16xf32>
    %348 = arith.mulf %339, %347 : vector<16x16xf32>
    %349 = arith.mulf %334, %348 : vector<16x16xf32>
    %350 = arith.mulf %349, %349 : vector<16x16xf32>
    %351 = arith.mulf %350, %349 : vector<16x16xf32>
    %352 = arith.mulf %307, %351 : vector<16x16xf32>
    %c0_126 = arith.constant 0 : index
    %c0_127 = arith.constant 0 : index
    %353 = vector.load %arg5[%c0_126, %c0_127] : memref<16x16xf32, #tpu.memory_space<vmem>>, vector<16x16xf32>
    %354 = arith.mulf %260, %353 : vector<16x16xf32>
    %cst_128 = arith.constant 5.000000e+00 : f32
    %355 = vector.broadcast %cst_128 : f32 to vector<16x16xf32>
    %356 = arith.mulf %355, %352 : vector<16x16xf32>
    %357 = arith.subf %354, %356 : vector<16x16xf32>
    %358 = vector.shape_cast %357 : vector<16x16xf32> to vector<1x16x16xf32>
    %cst_129 = arith.constant dense<0.000000e+00> : vector<1xf32>
    %359 = vector.multi_reduction <add>, %358, %cst_129 [1, 2] : vector<1x16x16xf32> to vector<1xf32>
    %360 = vector.shape_cast %359 : vector<1xf32> to vector<1x1x1xf32>
    %361 = vector.extract %360[0, 0, 0] : f32 from vector<1x1x1xf32>
    %cst_130 = arith.constant 1.280000e+03 : f32
    %362 = arith.addf %cst_130, %361 : f32
    %cst_131 = arith.constant 0.000000e+00 : f32
    %363 = vector.broadcast %cst_131 : f32 to vector<1x8x128xf32>
    %364 = vector.broadcast %362 : f32 to vector<1x8x128xf32>
    %365 = arith.addf %363, %364 : vector<1x8x128xf32>
    %c0_132 = arith.constant 0 : index
    %c0_133 = arith.constant 0 : index
    %c0_134 = arith.constant 0 : index
    %366 = vector.load %arg6[%c0_132, %c0_133, %c0_134] : memref<1x8x128xf32, #tpu.memory_space<vmem>>, vector<1x8x128xf32>
    tpu.vector_store %arg6[%c0_132, %c0_133, %c0_134], %365 {strides = array<i32>} : memref<1x8x128xf32, #tpu.memory_space<vmem>>, vector<1x8x128xf32>,
    return
  }
  func.func @transform_0(%arg0: i32) -> (i32, i32, i32) {
    %c0_i32 = arith.constant 0 : i32
    %c0_i32_0 = arith.constant 0 : i32
    %c0_i32_1 = arith.constant 0 : i32
    return %arg0, %c0_i32, %c0_i32_0 : i32, i32, i32
  }
  func.func @transform_1(%arg0: i32) -> (i32, i32, i32) {
    %c0_i32 = arith.constant 0 : i32
    %c0_i32_0 = arith.constant 0 : i32
    %c0_i32_1 = arith.constant 0 : i32
    return %arg0, %c0_i32, %c0_i32_0 : i32, i32, i32
  }
  func.func @transform_2(%arg0: i32) -> (i32, i32, i32) {
    %c0_i32 = arith.constant 0 : i32
    %c0_i32_0 = arith.constant 0 : i32
    %c0_i32_1 = arith.constant 0 : i32
    %c0_i32_2 = arith.constant 0 : i32
    return %c0_i32, %c0_i32_0, %c0_i32_1 : i32, i32, i32
  }
  func.func @transform_3(%arg0: i32) -> (i32, i32) {
    %c0_i32 = arith.constant 0 : i32
    %c0_i32_0 = arith.constant 0 : i32
    %c0_i32_1 = arith.constant 0 : i32
    return %c0_i32, %c0_i32_0 : i32, i32
  }
  func.func @transform_4(%arg0: i32) -> (i32, i32) {
    %c0_i32 = arith.constant 0 : i32
    %c0_i32_0 = arith.constant 0 : i32
    %c0_i32_1 = arith.constant 0 : i32
    return %c0_i32, %c0_i32_0 : i32, i32
  }
  func.func @transform_5(%arg0: i32) -> (i32, i32, i32) {
    %c0_i32 = arith.constant 0 : i32
    %c0_i32_0 = arith.constant 0 : i32
    %c0_i32_1 = arith.constant 0 : i32
    return %arg0, %c0_i32, %c0_i32_0 : i32, i32, i32
  }
}

</mosaic_0001>

<llo_original>
// kernel: tpu_custom_call.1
$region0: #{tpu_custom_call.1}
  #allocation0 [shape = 'u32[]', space=smem, size = 0x4, offset = 0x4, fixed_abs, tag = 'smem constant byte address 0x4 - core index']
  #allocation1 [shape = 'u32[144,128]{1,0:T(1,128)}', space=vmem, size = 0x12000, scoped, tag = 'internal scratch']
  %s0 = inlined_call_operand.hbm [shape: f32[6,16,16], index: 0, kind: input, shape index: {}]
  %s1 = inlined_call_operand.hbm [shape: f32[6,16,16], index: 1, kind: input, shape index: {}]
  %s2 = inlined_call_operand.hbm [shape: f32[5,16,16], index: 2, kind: input, shape index: {}]
  %s3 = inlined_call_operand.hbm [shape: f32[16,112], index: 3, kind: input, shape index: {}]
  %s4 = inlined_call_operand.hbm [shape: f32[16,16], index: 4, kind: input, shape index: {}]
  %s5 = inlined_call_operand.hbm [shape: f32[2,8,128], index: 5, kind: output, shape index: {}]
  %s6 = sld [smem:[#allocation0]]
  $region73: #{tpu_custom_call.1} parent=0
    _
  %s8 = ssub.s32 1, %s6
  %s9 = scalar_select 0, %s8, %s6
  $region1: #{tpu_custom_call.1} parent=0
    #allocation2 [shape = 'u8[49152]{0}', space=vmem, size = 0xc000, scoped, tag = 'input window, operand 0']
    #allocation3 [shape = 's32[2]{0}', space=sflag, size = 0x8, scoped, tag = 'scoped memory for tpu_custom_call.1']
    #allocation4 [shape = 's32[2]{0}', space=sflag, size = 0x8, scoped, tag = 'scoped memory for tpu_custom_call.1']
    #allocation5 [shape = 'u8[49152]{0}', space=vmem, size = 0xc000, scoped, tag = 'input window, operand 1']
    #allocation6 [shape = 's32[2]{0}', space=sflag, size = 0x8, scoped, tag = 'scoped memory for tpu_custom_call.1']
    #allocation7 [shape = 'u8[40960]{0}', space=vmem, size = 0xa000, scoped, tag = 'input window, operand 2, single buffered']
    #allocation8 [shape = 'u8[8192]{0}', space=vmem, size = 0x2000, scoped, tag = 'input window, operand 3, single buffered']
    #allocation9 [shape = 's32[1]{0}', space=sflag, size = 0x4, scoped, tag = 'scoped memory for tpu_custom_call.1']
    #allocation10 [shape = 'u8[8192]{0}', space=vmem, size = 0x2000, scoped, tag = 'input window, operand 4, single buffered']
    #allocation11 [shape = 'u8[8192]{0}', space=vmem, size = 0x2000, scoped, tag = 'output window, operand 0']
    %10 = vsyncpa [#allocation3], 0
    %s11 = scalar_lea.sflag [#allocation3], 1
    %12 = vsyncpa %s11, 0
    %13 = vsyncpa [#allocation6], 0
    %s14 = scalar_lea.sflag [#allocation6], 1
    %15 = vsyncpa %s14, 0
    %16 = vsyncpa [#allocation9], 0
    %17 = vsyncpa [#allocation4], 0
    %s18 = scalar_lea.sflag [#allocation4], 1
    %19 = vsyncpa %s18, 0
    loop: start=0, step=1, limit=4
    $region2: #{tpu_custom_call.1} parent=1 // loop_pre_header
      _
    $region3: #{tpu_custom_call.1} parent=1 // loop_header
      %s21 = sphi 0, %s25
      %p22 = scmp.ge.s32.totalorder %s21, 4
      %s31 = sphi 0, %s33
      %s34 = sphi 0, %s31
      %s35 = sphi 0, %s34
      %s51 = sphi 0, %s35
      %s57 = sphi 0, %s59
      %s60 = sphi 0, %s57
      %s61 = sphi 0, %s60
      %s77 = sphi 0, %s61
      %s81 = sphi 0, %s81
      %s83 = sphi 0, %s81
      %s84 = sphi 0, %s83
      %s98 = sphi 0, %s84
      %s102 = sphi 0, %s102
      %s104 = sphi 0, %s102
      %s105 = sphi 0, %s104
      %s119 = sphi 0, %s105
      %s123 = sphi 0, %s123
      %s125 = sphi 0, %s123
      %s126 = sphi 0, %s125
      %s140 = sphi 0, %s126
      %s146 = sphi 0, %s148
      %s149 = sphi 0, %s146
      %s150 = sphi 0, %s149
      %s166 = sphi 0, %s150
    $region4: #{tpu_custom_call.1} parent=1 // loop_header_branch
      %24 = sbr.rel (%p22) target = $region8
    $region5: #{tpu_custom_call.1} parent=1 // loop_body
      %s26 = ssub.s32 %s21, 1
      %s27 = ssub.s32 %s21, 2
      %s28 = sadd.s32 %s21, 1
      %s29 = ssub.s32 %s21, %s28
      %p30 = scmp.eq.s32.totalorder %s29, 0
      %s32 = sadd.s32 %s31, 1
      %s33 = scalar_select %p30, %s31, %s32
      %p36 = pneg %p30
      %p37 = scmp.eq.s32.totalorder %s21, 1
      %p38 = por %p36, %p37
      %p39 = scmp.ne.s32.totalorder %s31, %s34
      %p40 = scmp.eq.s32.totalorder %s21, 0
      %p41 = por %p39, %p40
      %p42 = scmp.ne.s32.totalorder %s31, %s34
      %p43 = scmp.eq.s32.totalorder %s26, 1
      %p44 = por %p42, %p43
      %p45 = scmp.ne.s32.totalorder %s34, %s35
      %p46 = scmp.eq.s32.totalorder %s26, 0
      %p47 = por %p45, %p46
      %p48 = scmp.ne.s32.totalorder %s34, %s35
      %p49 = scmp.eq.s32.totalorder %s27, 1
      %p50 = por %p48, %p49
      %p52 = scmp.ne.s32.totalorder %s35, %s51
      %p53 = scmp.eq.s32.totalorder %s27, 0
      %p54 = por %p52, %p53
      %s55 = ssub.s32 %s21, %s28
      %p56 = scmp.eq.s32.totalorder %s55, 0
      %s58 = sadd.s32 %s57, 1
      %s59 = scalar_select %p56, %s57, %s58
      %p62 = pneg %p56
      %p63 = scmp.eq.s32.totalorder %s21, 1
      %p64 = por %p62, %p63
      %p65 = scmp.ne.s32.totalorder %s57, %s60
      %p66 = scmp.eq.s32.totalorder %s21, 0
      %p67 = por %p65, %p66
      %p68 = scmp.ne.s32.totalorder %s57, %s60
      %p69 = scmp.eq.s32.totalorder %s26, 1
      %p70 = por %p68, %p69
      %p71 = scmp.ne.s32.totalorder %s60, %s61
      %p72 = scmp.eq.s32.totalorder %s26, 0
      %p73 = por %p71, %p72
      %p74 = scmp.ne.s32.totalorder %s60, %s61
      %p75 = scmp.eq.s32.totalorder %s27, 1
      %p76 = por %p74, %p75
      %p78 = scmp.ne.s32.totalorder %s61, %s77
      %p79 = scmp.eq.s32.totalorder %s27, 0
      %p80 = por %p78, %p79
      %s82 = sadd.s32 %s81, 1
      %p85 = scmp.eq.s32.totalorder %s21, 1
      %p86 = scmp.ne.s32.totalorder %s81, %s83
      %p87 = scmp.eq.s32.totalorder %s21, 0
      %p88 = por %p86, %p87
      %p89 = scmp.ne.s32.totalorder %s81, %s83
      %p90 = scmp.eq.s32.totalorder %s26, 1
      %p91 = por %p89, %p90
      %p92 = scmp.ne.s32.totalorder %s83, %s84
      %p93 = scmp.eq.s32.totalorder %s26, 0
      %p94 = por %p92, %p93
      %p95 = scmp.ne.s32.totalorder %s83, %s84
      %p96 = scmp.eq.s32.totalorder %s27, 1
      %p97 = por %p95, %p96
      %p99 = scmp.ne.s32.totalorder %s84, %s98
      %p100 = scmp.eq.s32.totalorder %s27, 0
      %p101 = por %p99, %p100
      %s103 = sadd.s32 %s102, 1
      %p106 = scmp.eq.s32.totalorder %s21, 1
      %p107 = scmp.ne.s32.totalorder %s102, %s104
      %p108 = scmp.eq.s32.totalorder %s21, 0
      %p109 = por %p107, %p108
      %p110 = scmp.ne.s32.totalorder %s102, %s104
      %p111 = scmp.eq.s32.totalorder %s26, 1
      %p112 = por %p110, %p111
      %p113 = scmp.ne.s32.totalorder %s104, %s105
      %p114 = scmp.eq.s32.totalorder %s26, 0
      %p115 = por %p113, %p114
      %p116 = scmp.ne.s32.totalorder %s104, %s105
      %p117 = scmp.eq.s32.totalorder %s27, 1
      %p118 = por %p116, %p117
      %p120 = scmp.ne.s32.totalorder %s105, %s119
      %p121 = scmp.eq.s32.totalorder %s27, 0
      %p122 = por %p120, %p121
      %s124 = sadd.s32 %s123, 1
      %p127 = scmp.eq.s32.totalorder %s21, 1
      %p128 = scmp.ne.s32.totalorder %s123, %s125
      %p129 = scmp.eq.s32.totalorder %s21, 0
      %p130 = por %p128, %p129
      %p131 = scmp.ne.s32.totalorder %s123, %s125
      %p132 = scmp.eq.s32.totalorder %s26, 1
      %p133 = por %p131, %p132
      %p134 = scmp.ne.s32.totalorder %s125, %s126
      %p135 = scmp.eq.s32.totalorder %s26, 0
      %p136 = por %p134, %p135
      %p137 = scmp.ne.s32.totalorder %s125, %s126
      %p138 = scmp.eq.s32.totalorder %s27, 1
      %p139 = por %p137, %p138
      %p141 = scmp.ne.s32.totalorder %s126, %s140
      %p142 = scmp.eq.s32.totalorder %s27, 0
      %p143 = por %p141, %p142
      %s144 = ssub.s32 %s21, %s28
      %p145 = scmp.eq.s32.totalorder %s144, 0
      %s147 = sadd.s32 %s146, 1
      %s148 = scalar_select %p145, %s146, %s147
      %p151 = pneg %p145
      %p152 = scmp.eq.s32.totalorder %s21, 1
      %p153 = por %p151, %p152
      %p154 = scmp.ne.s32.totalorder %s146, %s149
      %p155 = scmp.eq.s32.totalorder %s21, 0
      %p156 = por %p154, %p155
      %p157 = scmp.ne.s32.totalorder %s146, %s149
      %p158 = scmp.eq.s32.totalorder %s26, 1
      %p159 = por %p157, %p158
      %p160 = scmp.ne.s32.totalorder %s149, %s150
      %p161 = scmp.eq.s32.totalorder %s26, 0
      %p162 = por %p160, %p161
      %p163 = scmp.ne.s32.totalorder %s149, %s150
      %p164 = scmp.eq.s32.totalorder %s27, 1
      %p165 = por %p163, %p164
      %p167 = scmp.ne.s32.totalorder %s150, %s166
      %p168 = scmp.eq.s32.totalorder %s27, 0
      %p169 = por %p167, %p168
      %p170 = scmp.le.s32.totalorder 1, %s21
      %p171 = scmp.lt.s32.totalorder %s21, 3
      %p172 = pnand %p170, %p171
      %p173 = pneg %p172
      // Predicated region
      $region9: #{tpu_custom_call.1} parent=5 // pred_check
        _
      $region10: #{tpu_custom_call.1} parent=5 // pred_check_branch
        %175 = sbr.rel (%p172) target = $region12
      $region11: #{tpu_custom_call.1} parent=5 // pred_region
        %s176 = ssub.s32 %s21, 1
        // Predicated region
        $region13: #{tpu_custom_call.1} parent=11 // pred_check
          %p177 = pneg %p94
        $region14: #{tpu_custom_call.1} parent=11 // pred_check_branch
          %179 = sbr.rel (%p177) target = $region16
        $region15: #{tpu_custom_call.1} parent=11 // pred_region
          %s181 = ssub.s32 1280, 1280
          %182 = vsyncadd [#allocation6], %s181
          %s183 = sshll.u32 [#allocation7], 4
          %s184 = int_to_ptr.vmem [resolvable:$true] %s183
          %189 = dma.hbm_to_vmem [thread:$0]  %s2, 1280, %s184, [#allocation6], 128, 128, 8
        $region16: #{tpu_custom_call.1} parent=11 // pred_fallthru
          _
        // Predicated region
        $region17: #{tpu_custom_call.1} parent=11 // pred_check
          %p190 = pneg %p115
        $region18: #{tpu_custom_call.1} parent=11 // pred_check_branch
          %192 = sbr.rel (%p190) target = $region20
        $region19: #{tpu_custom_call.1} parent=11 // pred_region
          %s194 = ssub.s32 256, 256
          %195 = vsyncadd [#allocation9], %s194
          %s196 = sshll.u32 [#allocation8], 4
          %s197 = int_to_ptr.vmem [resolvable:$true] %s196
          %202 = dma.hbm_to_vmem [thread:$0]  %s3, 256, %s197, [#allocation9], 128, 128, 8
        $region20: #{tpu_custom_call.1} parent=11 // pred_fallthru
          _
        // Predicated region
        $region21: #{tpu_custom_call.1} parent=11 // pred_check
          %p203 = pneg %p136
        $region22: #{tpu_custom_call.1} parent=11 // pred_check_branch
          %205 = sbr.rel (%p203) target = $region24
        $region23: #{tpu_custom_call.1} parent=11 // pred_region
          %s207 = ssub.s32 256, 256
          %208 = vsyncadd [#allocation9], %s207
          %s209 = sshll.u32 [#allocation10], 4
          %s210 = int_to_ptr.vmem [resolvable:$true] %s209
          %215 = dma.hbm_to_vmem [thread:$0]  %s4, 256, %s210, [#allocation9], 128, 128, 8
        $region24: #{tpu_custom_call.1} parent=11 // pred_fallthru
          _
      $region12: #{tpu_custom_call.1} parent=5 // pred_fallthru
        _
      %p216 = scmp.lt.s32.totalorder %s21, 2
      // Predicated region
      $region25: #{tpu_custom_call.1} parent=5 // pred_check
        %p217 = pneg %p216
      $region26: #{tpu_custom_call.1} parent=5 // pred_check_branch
        %219 = sbr.rel (%p217) target = $region28
      $region27: #{tpu_custom_call.1} parent=5 // pred_region
        // Predicated region
        $region29: #{tpu_custom_call.1} parent=27 // pred_check
          %p220 = pneg %p41
        $region30: #{tpu_custom_call.1} parent=27 // pred_check_branch
          %222 = sbr.rel (%p220) target = $region32
        $region31: #{tpu_custom_call.1} parent=27 // pred_region
          %s223 = sand.u32 %s31, 1
          %s224 = scalar_lea.sflag [#allocation3], %s223
          %s225 = sand.u32 %s31, 1
          %s226 = smul.addr %s225, 48
          %s227 = scalar_lea.vmem [#allocation2], %s226
          %s228 = smul.u32 3, %s21
          %s230 = ssub.s32 768, 768
          %231 = vsyncadd %s224, %s230
          %s232 = smul.addr %s228, 2
          %s233 = smul.addr %s232, 128
          %s234 = scalar_lea.hbm %s0, %s233
          %s235 = sshll.u32 %s227, 4
          %s236 = int_to_ptr.vmem [resolvable:$true] %s235
          %241 = dma.hbm_to_vmem [thread:$0]  %s234, 768, %s236, %s224, 128, 128, 8
        $region32: #{tpu_custom_call.1} parent=27 // pred_fallthru
          _
        // Predicated region
        $region33: #{tpu_custom_call.1} parent=27 // pred_check
          %p242 = pneg %p67
        $region34: #{tpu_custom_call.1} parent=27 // pred_check_branch
          %244 = sbr.rel (%p242) target = $region36
        $region35: #{tpu_custom_call.1} parent=27 // pred_region
          %s245 = sand.u32 %s21, 1
          %s246 = scalar_lea.sflag [#allocation6], %s245
          %s247 = sand.u32 %s57, 1
          %s248 = smul.addr %s247, 48
          %s249 = scalar_lea.vmem [#allocation5], %s248
          %s250 = smul.u32 3, %s21
          %s252 = ssub.s32 768, 768
          %253 = vsyncadd %s246, %s252
          %s254 = smul.addr %s250, 2
          %s255 = smul.addr %s254, 128
          %s256 = scalar_lea.hbm %s1, %s255
          %s257 = sshll.u32 %s249, 4
          %s258 = int_to_ptr.vmem [resolvable:$true] %s257
          %263 = dma.hbm_to_vmem [thread:$0]  %s256, 768, %s258, %s246, 128, 128, 8
        $region36: #{tpu_custom_call.1} parent=27 // pred_fallthru
          _
      $region28: #{tpu_custom_call.1} parent=5 // pred_fallthru
        _
      %p264 = scmp.le.s32.totalorder 1, %s21
      %p265 = scmp.lt.s32.totalorder %s21, 3
      %p266 = pnand %p264, %p265
      %p267 = pneg %p266
      // Predicated region
      $region37: #{tpu_custom_call.1} parent=5 // pred_check
        _
      $region38: #{tpu_custom_call.1} parent=5 // pred_check_branch
        %269 = sbr.rel (%p266) target = $region40
      $region39: #{tpu_custom_call.1} parent=5 // pred_region
        %s270 = ssub.s32 %s21, 1
        %s271 = sand.u32 %s34, 1
        %s272 = scalar_lea.sflag [#allocation3], %s271
        %s273 = sand.u32 %s34, 1
        %s274 = smul.addr %s273, 48
        %s275 = scalar_lea.vmem [#allocation2], %s274
        // Predicated region
        $region41: #{tpu_custom_call.1} parent=39 // pred_check
          %p276 = pneg %p47
        $region42: #{tpu_custom_call.1} parent=39 // pred_check_branch
          %278 = sbr.rel (%p276) target = $region44
        $region43: #{tpu_custom_call.1} parent=39 // pred_region
          %279 = dma.done %s272, 768
        $region44: #{tpu_custom_call.1} parent=39 // pred_fallthru
          _
        %s280 = sand.u32 %s26, 1
        %s281 = scalar_lea.sflag [#allocation6], %s280
        %s282 = sand.u32 %s60, 1
        %s283 = smul.addr %s282, 48
        %s284 = scalar_lea.vmem [#allocation5], %s283
        // Predicated region
        $region45: #{tpu_custom_call.1} parent=39 // pred_check
          %p285 = pneg %p73
        $region46: #{tpu_custom_call.1} parent=39 // pred_check_branch
          %287 = sbr.rel (%p285) target = $region48
        $region47: #{tpu_custom_call.1} parent=39 // pred_region
          %288 = dma.done %s281, 768
        $region48: #{tpu_custom_call.1} parent=39 // pred_fallthru
          _
        // Predicated region
        $region49: #{tpu_custom_call.1} parent=39 // pred_check
          %p289 = pneg %p94
        $region50: #{tpu_custom_call.1} parent=39 // pred_check_branch
          %291 = sbr.rel (%p289) target = $region52
        $region51: #{tpu_custom_call.1} parent=39 // pred_region
          %292 = dma.done [#allocation6], 1280
        $region52: #{tpu_custom_call.1} parent=39 // pred_fallthru
          _
        // Predicated region
        $region53: #{tpu_custom_call.1} parent=39 // pred_check
          %p293 = pneg %p115
        $region54: #{tpu_custom_call.1} parent=39 // pred_check_branch
          %295 = sbr.rel (%p293) target = $region56
        $region55: #{tpu_custom_call.1} parent=39 // pred_region
          %296 = dma.done [#allocation9], 256
        $region56: #{tpu_custom_call.1} parent=39 // pred_fallthru
          _
        // Predicated region
        $region57: #{tpu_custom_call.1} parent=39 // pred_check
          %p297 = pneg %p136
        $region58: #{tpu_custom_call.1} parent=39 // pred_check_branch
          %299 = sbr.rel (%p297) target = $region60
        $region59: #{tpu_custom_call.1} parent=39 // pred_region
          %300 = dma.done [#allocation9], 256
        $region60: #{tpu_custom_call.1} parent=39 // pred_fallthru
          _
        %s301 = sand.u32 %s34, 1
        %s302 = scalar_lea.sflag [#allocation3], %s301
        %s303 = sand.u32 %s34, 1
        %s304 = smul.addr %s303, 48
        %s305 = scalar_lea.vmem [#allocation2], %s304
        %p306 = pneg %p47
        %p307 = pneg %p44
        %s308 = sand.u32 %s26, 1
        %s309 = scalar_lea.sflag [#allocation6], %s308
        %s310 = sand.u32 %s60, 1
        %s311 = smul.addr %s310, 48
        %s312 = scalar_lea.vmem [#allocation5], %s311
        %p313 = pneg %p73
        %p314 = pneg %p70
        %p315 = pneg %p94
        %p316 = pneg %p91
        %p317 = pneg %p115
        %p318 = pneg %p112
        %p319 = pneg %p136
        %p320 = pneg %p133
        %p321 = pneg %p162
        %p322 = pneg %p159
        %s323 = sand.u32 %s149, 1
        %s324 = scalar_lea.sflag [#allocation4], %s323
        %s325 = sand.u32 %s149, 1
        %s326 = smul.addr %s325, 8
        %s327 = scalar_lea.vmem [#allocation11], %s326
        %s328 = smul.u32 3, %s26
        %s329 = smul.u32 3, %s26
        %v330 = vld [vmem:[%s275] sm:$0xff]
        %v331 = vld [vmem:[%s275 + $0x8] sm:$0xff]
        %v332 = vld [vmem:[%s284] sm:$0xff]
        %v333 = vld [vmem:[%s284 + $0x8] sm:$0xff]
        %v334 = vmul.f32 %v330, %v332
        %v335 = vmul.f32 %v331, %v333
        %v336 = vmul.f32 %v330, %v330
        %v337 = vmul.f32 %v331, %v331
        %v338 = vmul.f32 %v332, %v332
        %v339 = vmul.f32 %v333, %v333
        %v340 = vadd.f32 %v336, %v338
        %v341 = vadd.f32 %v337, %v339
        %v342 = vsub.f32 %v330, %v332
        %v343 = vsub.f32 %v331, %v333
        %v344 = vand.u32 2147483647, %v342
        %v345 = vand.u32 2147483647, %v343
        %v346 = vadd.f32 %v344, 0.0
        %v347 = vadd.f32 %v345, 0.0
        %v348 = vld [vmem:[#allocation8] sm:$0xff]
        %v349 = vld [vmem:[#allocation8 + $0x8] sm:$0xff]
        %vm350 = vcmask 130048
        %v352 = vsel %vm350, %v330, 0
        %v355 = vsel %vm350, %v331, 0
        %v358 = vsel %vm350, %v332, 0
        %v361 = vsel %vm350, %v333, 0
        %v364 = vsel %vm350, %v334, 0
        %v367 = vsel %vm350, %v335, 0
        %v370 = vsel %vm350, %v340, 0
        %v373 = vsel %vm350, %v341, 0
        %375 = vmatprep.subr.mxu0 0.0
        %376 = vmatpush1.msra.mxu0 %v348
        %377 = vmatprep.subr.mxu0 0.0
        %378 = vmatpush1.msra.mxu0 %v349
        %379 = vmatprep.subr.mxu0 0.0
        %380 = vmatpush1.msra.mxu0 0.0
        %381 = vmatprep.subr.mxu0 0.0
        %382 = vmatpush1.msra.mxu0 0.0
        %383 = vmatprep.subr.mxu0 0.0
        %384 = vmatpush1.msra.mxu0 0.0
        %385 = vmatprep.subr.mxu0 0.0
        %386 = vmatpush1.msra.mxu0 0.0
        %387 = vmatprep.subr.mxu0 0.0
        %388 = vmatpush1.msra.mxu0 0.0
        %389 = vmatprep.subr.mxu0 0.0
        %390 = vmatpush1.msra.mxu0 0.0
        %391 = vmatprep.subr.mxu0 0.0
        %392 = vmatpush1.msra.mxu0 0.0
        %393 = vmatprep.subr.mxu0 0.0
        %394 = vmatpush1.msra.mxu0 0.0
        %395 = vmatprep.subr.mxu0 0.0
        %396 = vmatpush1.msra.mxu0 0.0
        %397 = vmatprep.subr.mxu0 0.0
        %398 = vmatpush1.msra.mxu0 0.0
        %399 = vmatprep.subr.mxu0 0.0
        %400 = vmatpush1.msra.mxu0 0.0
        %401 = vmatprep.subr.mxu0 0.0
        %402 = vmatpush1.msra.mxu0 0.0
        %403 = vmatprep.subr.mxu0 0.0
        %404 = vmatpush1.msra.mxu0 0.0
        %405 = vmatprep.subr.mxu0 0.0
        %406 = vmatpush1.msra.mxu0 0.0
        %407 = vmatprep.subr.mxu0 0.0
        %408 = vmatpush1.msra.mxu0 0.0
        %409 = vmatprep.subr.mxu0 0.0
        %410 = vmatpush1.msra.mxu0 0.0
        %411 = vmatprep.subr.mxu0 0.0
        %412 = vmatpush1.msra.mxu0 0.0
        %413 = vmatprep.subr.mxu0 0.0
        %414 = vmatpush1.msra.mxu0 0.0
        %415 = vmatprep.subr.mxu0 0.0
        %416 = vmatpush1.msra.mxu0 0.0
        %417 = vmatprep.subr.mxu0 0.0
        %418 = vmatpush1.msra.mxu0 0.0
        %419 = vmatprep.subr.mxu0 0.0
        %420 = vmatpush1.msra.mxu0 0.0
        %421 = vmatprep.subr.mxu0 0.0
        %422 = vmatpush1.msra.mxu0 0.0
        %423 = vmatprep.subr.mxu0 0.0
        %424 = vmatpush1.msra.mxu0 0.0
        %425 = vmatprep.subr.mxu0 0.0
        %426 = vmatpush1.msra.mxu0 0.0
        %427 = vmatprep.subr.mxu0 0.0
        %428 = vmatpush1.msra.mxu0 0.0
        %429 = vmatprep.subr.mxu0 0.0
        %430 = vmatpush1.msra.mxu0 0.0
        %431 = vmatprep.subr.mxu0 0.0
        %432 = vmatpush1.msra.mxu0 0.0
        %433 = vmatprep.subr.mxu0 0.0
        %434 = vmatpush1.msra.mxu0 0.0
        %435 = vmatprep.subr.mxu0 0.0
        %436 = vmatpush1.msra.mxu0 0.0
        %437 = vmatprep.subr.mxu0 0.0
        %438 = vmatpush1.msra.mxu0 0.0
        %439 = vmatprep.mubr.f32.mxu0 0.0
        %440 = vmatmul.mubr.f32.gmra.mrb[0].mxu0 %v352
        %v441 = vpop.f32.mrb[0].mxu0
        %v442 = vadd.f32 0.0, %v441
        %v443 = vpop.f32.mrb[0].mxu0
        %444 = vmatprep.mubr.f32.mxu0 0.0
        %445 = vmatmul.mubr.f32.gmra.mrb[0].mxu0 %v355
        %v446 = vpop.f32.mrb[0].mxu0
        %v447 = vadd.f32 0.0, %v446
        %v448 = vpop.f32.mrb[0].mxu0
        %449 = vmatprep.mubr.f32.mxu0 0.0
        %450 = vmatmul.mubr.f32.gmra.mrb[0].mxu0 %v358
        %v451 = vpop.f32.mrb[0].mxu0
        %v452 = vadd.f32 0.0, %v451
        %v453 = vpop.f32.mrb[0].mxu0
        %454 = vmatprep.mubr.f32.mxu0 0.0
        %455 = vmatmul.mubr.f32.gmra.mrb[0].mxu0 %v361
        %v456 = vpop.f32.mrb[0].mxu0
        %v457 = vadd.f32 0.0, %v456
        %v458 = vpop.f32.mrb[0].mxu0
        %459 = vmatprep.mubr.f32.mxu0 0.0
        %460 = vmatmul.mubr.f32.gmra.mrb[0].mxu0 %v364
        %v461 = vpop.f32.mrb[0].mxu0
        %v462 = vadd.f32 0.0, %v461
        %v463 = vpop.f32.mrb[0].mxu0
        %464 = vmatprep.mubr.f32.mxu0 0.0
        %465 = vmatmul.mubr.f32.gmra.mrb[0].mxu0 %v367
        %v466 = vpop.f32.mrb[0].mxu0
        %v467 = vadd.f32 0.0, %v466
        %v468 = vpop.f32.mrb[0].mxu0
        %469 = vmatprep.mubr.f32.mxu0 0.0
        %470 = vmatmul.mubr.f32.gmra.mrb[0].mxu0 %v370
        %v471 = vpop.f32.mrb[0].mxu0
        %v472 = vadd.f32 0.0, %v471
        %v473 = vpop.f32.mrb[0].mxu0
        %474 = vmatprep.mubr.f32.mxu0 0.0
        %475 = vmatmul.mubr.f32.gmra.mrb[0].mxu0 %v373
        %v476 = vpop.f32.mrb[0].mxu0
        %v477 = vadd.f32 0.0, %v476
        %v478 = vpop.f32.mrb[0].mxu0
        %479 = vdwg.mxu0
        %v480 = vld [vmem:[#allocation7] sm:$0xff]
        %v481 = vld [vmem:[#allocation7 + $0x8] sm:$0xff]
        %v483 = vsel %vm350, %v480, 0
        %v486 = vsel %vm350, %v481, 0
        %488 = vmatprep.subr.mxu0 0.0
        %489 = vmatpush1.msra.mxu0 %v442
        %490 = vmatprep.subr.mxu0 0.0
        %491 = vmatpush1.msra.mxu0 %v447
        %492 = vmatprep.subr.mxu0 0.0
        %493 = vmatpush1.msra.mxu0 0.0
        %494 = vmatprep.subr.mxu0 0.0
        %495 = vmatpush1.msra.mxu0 0.0
        %496 = vmatprep.subr.mxu0 0.0
        %497 = vmatpush1.msra.mxu0 0.0
        %498 = vmatprep.subr.mxu0 0.0
        %499 = vmatpush1.msra.mxu0 0.0
        %500 = vmatprep.subr.mxu0 0.0
        %501 = vmatpush1.msra.mxu0 0.0
        %502 = vmatprep.subr.mxu0 0.0
        %503 = vmatpush1.msra.mxu0 0.0
        %504 = vmatprep.subr.mxu0 0.0
        %505 = vmatpush1.msra.mxu0 0.0
        %506 = vmatprep.subr.mxu0 0.0
        %507 = vmatpush1.msra.mxu0 0.0
        %508 = vmatprep.subr.mxu0 0.0
        %509 = vmatpush1.msra.mxu0 0.0
        %510 = vmatprep.subr.mxu0 0.0
        %511 = vmatpush1.msra.mxu0 0.0
        %512 = vmatprep.subr.mxu0 0.0
        %513 = vmatpush1.msra.mxu0 0.0
        %514 = vmatprep.subr.mxu0 0.0
        %515 = vmatpush1.msra.mxu0 0.0
        %516 = vmatprep.subr.mxu0 0.0
        %517 = vmatpush1.msra.mxu0 0.0
        %518 = vmatprep.subr.mxu0 0.0
        %519 = vmatpush1.msra.mxu0 0.0
        %520 = vmatprep.subr.mxu0 0.0
        %521 = vmatpush1.msra.mxu0 0.0
        %522 = vmatprep.subr.mxu0 0.0
        %523 = vmatpush1.msra.mxu0 0.0
        %524 = vmatprep.subr.mxu0 0.0
        %525 = vmatpush1.msra.mxu0 0.0
        %526 = vmatprep.subr.mxu0 0.0
        %527 = vmatpush1.msra.mxu0 0.0
        %528 = vmatprep.subr.mxu0 0.0
        %529 = vmatpush1.msra.mxu0 0.0
        %530 = vmatprep.subr.mxu0 0.0
        %531 = vmatpush1.msra.mxu0 0.0
        %532 = vmatprep.subr.mxu0 0.0
        %533 = vmatpush1.msra.mxu0 0.0
        %534 = vmatprep.subr.mxu0 0.0
        %535 = vmatpush1.msra.mxu0 0.0
        %536 = vmatprep.subr.mxu0 0.0
        %537 = vmatpush1.msra.mxu0 0.0
        %538 = vmatprep.subr.mxu0 0.0
        %539 = vmatpush1.msra.mxu0 0.0
        %540 = vmatprep.subr.mxu0 0.0
        %541 = vmatpush1.msra.mxu0 0.0
        %542 = vmatprep.subr.mxu0 0.0
        %543 = vmatpush1.msra.mxu0 0.0
        %544 = vmatprep.subr.mxu0 0.0
        %545 = vmatpush1.msra.mxu0 0.0
        %546 = vmatprep.subr.mxu0 0.0
        %547 = vmatpush1.msra.mxu0 0.0
        %548 = vmatprep.subr.mxu0 0.0
        %549 = vmatpush1.msra.mxu0 0.0
        %550 = vmatprep.subr.mxu0 0.0
        %551 = vmatpush1.msra.mxu0 0.0
        %552 = vmatprep.mubr.f32.mxu0 0.0
        %553 = vmatmul.mubr.f32.gmra.mrb[0].mxu0 %v483
        %v554 = vpop.f32.mrb[0].mxu0
        %v555 = vadd.f32 0.0, %v554
        %v556 = vpop.f32.mrb[0].mxu0
        %557 = vmatprep.mubr.f32.mxu0 0.0
        %558 = vmatmul.mubr.f32.gmra.mrb[0].mxu0 %v486
        %v559 = vpop.f32.mrb[0].mxu0
        %v560 = vadd.f32 0.0, %v559
        %v561 = vpop.f32.mrb[0].mxu0
        %562 = vdwg.mxu0
        %563 = vmatprep.subr.mxu0 0.0
        %564 = vmatpush1.msra.mxu0 %v452
        %565 = vmatprep.subr.mxu0 0.0
        %566 = vmatpush1.msra.mxu0 %v457
        %567 = vmatprep.subr.mxu0 0.0
        %568 = vmatpush1.msra.mxu0 0.0
        %569 = vmatprep.subr.mxu0 0.0
        %570 = vmatpush1.msra.mxu0 0.0
        %571 = vmatprep.subr.mxu0 0.0
        %572 = vmatpush1.msra.mxu0 0.0
        %573 = vmatprep.subr.mxu0 0.0
        %574 = vmatpush1.msra.mxu0 0.0
        %575 = vmatprep.subr.mxu0 0.0
        %576 = vmatpush1.msra.mxu0 0.0
        %577 = vmatprep.subr.mxu0 0.0
        %578 = vmatpush1.msra.mxu0 0.0
        %579 = vmatprep.subr.mxu0 0.0
        %580 = vmatpush1.msra.mxu0 0.0
        %581 = vmatprep.subr.mxu0 0.0
        %582 = vmatpush1.msra.mxu0 0.0
        %583 = vmatprep.subr.mxu0 0.0
        %584 = vmatpush1.msra.mxu0 0.0
        %585 = vmatprep.subr.mxu0 0.0
        %586 = vmatpush1.msra.mxu0 0.0
        %587 = vmatprep.subr.mxu0 0.0
        %588 = vmatpush1.msra.mxu0 0.0
        %589 = vmatprep.subr.mxu0 0.0
        %590 = vmatpush1.msra.mxu0 0.0
        %591 = vmatprep.subr.mxu0 0.0
        %592 = vmatpush1.msra.mxu0 0.0
        %593 = vmatprep.subr.mxu0 0.0
        %594 = vmatpush1.msra.mxu0 0.0
        %595 = vmatprep.subr.mxu0 0.0
        %596 = vmatpush1.msra.mxu0 0.0
        %597 = vmatprep.subr.mxu0 0.0
        %598 = vmatpush1.msra.mxu0 0.0
        %599 = vmatprep.subr.mxu0 0.0
        %600 = vmatpush1.msra.mxu0 0.0
        %601 = vmatprep.subr.mxu0 0.0
        %602 = vmatpush1.msra.mxu0 0.0
        %603 = vmatprep.subr.mxu0 0.0
        %604 = vmatpush1.msra.mxu0 0.0
        %605 = vmatprep.subr.mxu0 0.0
        %606 = vmatpush1.msra.mxu0 0.0
        %607 = vmatprep.subr.mxu0 0.0
        %608 = vmatpush1.msra.mxu0 0.0
        %609 = vmatprep.subr.mxu0 0.0
        %610 = vmatpush1.msra.mxu0 0.0
        %611 = vmatprep.subr.mxu0 0.0
        %612 = vmatpush1.msra.mxu0 0.0
        %613 = vmatprep.subr.mxu0 0.0
        %614 = vmatpush1.msra.mxu0 0.0
        %615 = vmatprep.subr.mxu0 0.0
        %616 = vmatpush1.msra.mxu0 0.0
        %617 = vmatprep.subr.mxu0 0.0
        %618 = vmatpush1.msra.mxu0 0.0
        %619 = vmatprep.subr.mxu0 0.0
        %620 = vmatpush1.msra.mxu0 0.0
        %621 = vmatprep.subr.mxu0 0.0
        %622 = vmatpush1.msra.mxu0 0.0
        %623 = vmatprep.subr.mxu0 0.0
        %624 = vmatpush1.msra.mxu0 0.0
        %625 = vmatprep.subr.mxu0 0.0
        %626 = vmatpush1.msra.mxu0 0.0
        %627 = vmatprep.mubr.f32.mxu0 0.0
        %628 = vmatmul.mubr.f32.gmra.mrb[0].mxu0 %v483
        %v629 = vpop.f32.mrb[0].mxu0
        %v630 = vadd.f32 0.0, %v629
        %v631 = vpop.f32.mrb[0].mxu0
        %632 = vmatprep.mubr.f32.mxu0 0.0
        %633 = vmatmul.mubr.f32.gmra.mrb[0].mxu0 %v486
        %v634 = vpop.f32.mrb[0].mxu0
        %v635 = vadd.f32 0.0, %v634
        %v636 = vpop.f32.mrb[0].mxu0
        %637 = vdwg.mxu0
        %638 = vmatprep.subr.mxu0 0.0
        %639 = vmatpush1.msra.mxu0 %v462
        %640 = vmatprep.subr.mxu0 0.0
        %641 = vmatpush1.msra.mxu0 %v467
        %642 = vmatprep.subr.mxu0 0.0
        %643 = vmatpush1.msra.mxu0 0.0
        %644 = vmatprep.subr.mxu0 0.0
        %645 = vmatpush1.msra.mxu0 0.0
        %646 = vmatprep.subr.mxu0 0.0
        %647 = vmatpush1.msra.mxu0 0.0
        %648 = vmatprep.subr.mxu0 0.0
        %649 = vmatpush1.msra.mxu0 0.0
        %650 = vmatprep.subr.mxu0 0.0
        %651 = vmatpush1.msra.mxu0 0.0
        %652 = vmatprep.subr.mxu0 0.0
        %653 = vmatpush1.msra.mxu0 0.0
        %654 = vmatprep.subr.mxu0 0.0
        %655 = vmatpush1.msra.mxu0 0.0
        %656 = vmatprep.subr.mxu0 0.0
        %657 = vmatpush1.msra.mxu0 0.0
        %658 = vmatprep.subr.mxu0 0.0
        %659 = vmatpush1.msra.mxu0 0.0
        %660 = vmatprep.subr.mxu0 0.0
        %661 = vmatpush1.msra.mxu0 0.0
        %662 = vmatprep.subr.mxu0 0.0
        %663 = vmatpush1.msra.mxu0 0.0
        %664 = vmatprep.subr.mxu0 0.0
        %665 = vmatpush1.msra.mxu0 0.0
        %666 = vmatprep.subr.mxu0 0.0
        %667 = vmatpush1.msra.mxu0 0.0
        %668 = vmatprep.subr.mxu0 0.0
        %669 = vmatpush1.msra.mxu0 0.0
        %670 = vmatprep.subr.mxu0 0.0
        %671 = vmatpush1.msra.mxu0 0.0
        %672 = vmatprep.subr.mxu0 0.0
        %673 = vmatpush1.msra.mxu0 0.0
        %674 = vmatprep.subr.mxu0 0.0
        %675 = vmatpush1.msra.mxu0 0.0
        %676 = vmatprep.subr.mxu0 0.0
        %677 = vmatpush1.msra.mxu0 0.0
        %678 = vmatprep.subr.mxu0 0.0
        %679 = vmatpush1.msra.mxu0 0.0
        %680 = vmatprep.subr.mxu0 0.0
        %681 = vmatpush1.msra.mxu0 0.0
        %682 = vmatprep.subr.mxu0 0.0
        %683 = vmatpush1.msra.mxu0 0.0
        %684 = vmatprep.subr.mxu0 0.0
        %685 = vmatpush1.msra.mxu0 0.0
        %686 = vmatprep.subr.mxu0 0.0
        %687 = vmatpush1.msra.mxu0 0.0
        %688 = vmatprep.subr.mxu0 0.0
        %689 = vmatpush1.msra.mxu0 0.0
        %690 = vmatprep.subr.mxu0 0.0
        %691 = vmatpush1.msra.mxu0 0.0
        %692 = vmatprep.subr.mxu0 0.0
        %693 = vmatpush1.msra.mxu0 0.0
        %694 = vmatprep.subr.mxu0 0.0
        %695 = vmatpush1.msra.mxu0 0.0
        %696 = vmatprep.subr.mxu0 0.0
        %697 = vmatpush1.msra.mxu0 0.0
        %698 = vmatprep.subr.mxu0 0.0
        %699 = vmatpush1.msra.mxu0 0.0
        %700 = vmatprep.subr.mxu0 0.0
        %701 = vmatpush1.msra.mxu0 0.0
        %702 = vmatprep.mubr.f32.mxu0 0.0
        %703 = vmatmul.mubr.f32.gmra.mrb[0].mxu0 %v483
        %v704 = vpop.f32.mrb[0].mxu0
        %v705 = vadd.f32 0.0, %v704
        %v706 = vpop.f32.mrb[0].mxu0
        %707 = vmatprep.mubr.f32.mxu0 0.0
        %708 = vmatmul.mubr.f32.gmra.mrb[0].mxu0 %v486
        %v709 = vpop.f32.mrb[0].mxu0
        %v710 = vadd.f32 0.0, %v709
        %v711 = vpop.f32.mrb[0].mxu0
        %712 = vdwg.mxu0
        %713 = vmatprep.subr.mxu0 0.0
        %714 = vmatpush1.msra.mxu0 %v472
        %715 = vmatprep.subr.mxu0 0.0
        %716 = vmatpush1.msra.mxu0 %v477
        %717 = vmatprep.subr.mxu0 0.0
        %718 = vmatpush1.msra.mxu0 0.0
        %719 = vmatprep.subr.mxu0 0.0
        %720 = vmatpush1.msra.mxu0 0.0
        %721 = vmatprep.subr.mxu0 0.0
        %722 = vmatpush1.msra.mxu0 0.0
        %723 = vmatprep.subr.mxu0 0.0
        %724 = vmatpush1.msra.mxu0 0.0
        %725 = vmatprep.subr.mxu0 0.0
        %726 = vmatpush1.msra.mxu0 0.0
        %727 = vmatprep.subr.mxu0 0.0
        %728 = vmatpush1.msra.mxu0 0.0
        %729 = vmatprep.subr.mxu0 0.0
        %730 = vmatpush1.msra.mxu0 0.0
        %731 = vmatprep.subr.mxu0 0.0
        %732 = vmatpush1.msra.mxu0 0.0
        %733 = vmatprep.subr.mxu0 0.0
        %734 = vmatpush1.msra.mxu0 0.0
        %735 = vmatprep.subr.mxu0 0.0
        %736 = vmatpush1.msra.mxu0 0.0
        %737 = vmatprep.subr.mxu0 0.0
        %738 = vmatpush1.msra.mxu0 0.0
        %739 = vmatprep.subr.mxu0 0.0
        %740 = vmatpush1.msra.mxu0 0.0
        %741 = vmatprep.subr.mxu0 0.0
        %742 = vmatpush1.msra.mxu0 0.0
        %743 = vmatprep.subr.mxu0 0.0
        %744 = vmatpush1.msra.mxu0 0.0
        %745 = vmatprep.subr.mxu0 0.0
        %746 = vmatpush1.msra.mxu0 0.0
        %747 = vmatprep.subr.mxu0 0.0
        %748 = vmatpush1.msra.mxu0 0.0
        %749 = vmatprep.subr.mxu0 0.0
        %750 = vmatpush1.msra.mxu0 0.0
        %751 = vmatprep.subr.mxu0 0.0
        %752 = vmatpush1.msra.mxu0 0.0
        %753 = vmatprep.subr.mxu0 0.0
        %754 = vmatpush1.msra.mxu0 0.0
        %755 = vmatprep.subr.mxu0 0.0
        %756 = vmatpush1.msra.mxu0 0.0
        %757 = vmatprep.subr.mxu0 0.0
        %758 = vmatpush1.msra.mxu0 0.0
        %759 = vmatprep.subr.mxu0 0.0
        %760 = vmatpush1.msra.mxu0 0.0
        %761 = vmatprep.subr.mxu0 0.0
        %762 = vmatpush1.msra.mxu0 0.0
        %763 = vmatprep.subr.mxu0 0.0
        %764 = vmatpush1.msra.mxu0 0.0
        %765 = vmatprep.subr.mxu0 0.0
        %766 = vmatpush1.msra.mxu0 0.0
        %767 = vmatprep.subr.mxu0 0.0
        %768 = vmatpush1.msra.mxu0 0.0
        %769 = vmatprep.subr.mxu0 0.0
        %770 = vmatpush1.msra.mxu0 0.0
        %771 = vmatprep.subr.mxu0 0.0
        %772 = vmatpush1.msra.mxu0 0.0
        %773 = vmatprep.subr.mxu0 0.0
        %774 = vmatpush1.msra.mxu0 0.0
        %775 = vmatprep.subr.mxu0 0.0
        %776 = vmatpush1.msra.mxu0 0.0
        %777 = vmatprep.mubr.f32.mxu0 0.0
        %778 = vmatmul.mubr.f32.gmra.mrb[0].mxu0 %v483
        %v779 = vpop.f32.mrb[0].mxu0
        %v780 = vadd.f32 0.0, %v779
        %v781 = vpop.f32.mrb[0].mxu0
        %782 = vmatprep.mubr.f32.mxu0 0.0
        %783 = vmatmul.mubr.f32.gmra.mrb[0].mxu0 %v486
        %v784 = vpop.f32.mrb[0].mxu0
        %v785 = vadd.f32 0.0, %v784
        %v786 = vpop.f32.mrb[0].mxu0
        %787 = vdwg.mxu0
        %v788 = vmul.f32 %v555, %v555
        %v789 = vmul.f32 %v560, %v560
        %v790 = vmul.f32 %v630, %v630
        %v791 = vmul.f32 %v635, %v635
        %v792 = vmul.f32 %v555, %v630
        %v793 = vmul.f32 %v560, %v635
        %v794 = vadd.f32 %v788, %v790
        %v795 = vadd.f32 %v789, %v791
        %v796 = vmul.f32 %v792, 2.0
        %v797 = vmul.f32 %v793, 2.0
        %v798 = vadd.f32 %v796, 0.0001
        %v799 = vadd.f32 %v797, 0.0001
        %v800 = vadd.f32 %v794, 0.0001
        %v801 = vadd.f32 %v795, 0.0001
        %v802 = vrcp.pop %v800
        %v803 = vrcp.pop %v801
        %v804 = vmul.f32 %v800, %v802
        %v805 = vmul.f32 %v801, %v803
        %v806 = vsub.f32 2.0, %v804
        %v807 = vsub.f32 2.0, %v805
        %v808 = vmul.f32 %v802, %v806
        %v809 = vmul.f32 %v803, %v807
        %v810 = vmul.f32 %v798, %v808
        %v811 = vmul.f32 %v799, %v809
        %v812 = vsub.f32 %v705, %v792
        %v813 = vsub.f32 %v710, %v793
        %v814 = vmul.f32 %v812, 2.0
        %v815 = vmul.f32 %v813, 2.0
        %v816 = vadd.f32 %v814, 0.0009
        %v817 = vadd.f32 %v815, 0.0009
        %v818 = vsub.f32 %v780, %v794
        %v819 = vsub.f32 %v785, %v795
        %v820 = vadd.f32 %v818, 0.0009
        %v821 = vadd.f32 %v819, 0.0009
        %v822 = vrcp.pop %v820
        %v823 = vrcp.pop %v821
        %v824 = vmul.f32 %v820, %v822
        %v825 = vmul.f32 %v821, %v823
        %v826 = vsub.f32 2.0, %v824
        %v827 = vsub.f32 2.0, %v825
        %v828 = vmul.f32 %v822, %v826
        %v829 = vmul.f32 %v823, %v827
        %v830 = vmul.f32 %v816, %v828
        %v831 = vmul.f32 %v817, %v829
        %v832 = vmul.f32 %v810, %v830
        %v833 = vmul.f32 %v811, %v831
        %v834 = vmul.f32 %v832, %v832
        %v835 = vmul.f32 %v833, %v833
        %v836 = vmul.f32 %v834, %v832
        %v837 = vmul.f32 %v835, %v833
        %s838 = scalar_lea.vmem [#allocation7], 16
        %v839 = vld [vmem:[%s838] sm:$0xff]
        %v840 = vld [vmem:[%s838 + $0x8] sm:$0xff]
        %843 = vrot.lane.b32.xlu0 %v442, 112
        %v844 = vpop.permute.xlu0 %843
        %845 = vrot.lane.b32.xlu0 %v447, 112
        %v846 = vpop.permute.xlu0 %845
        %v850 = vsel %vm350, %v839, 0
        %v853 = vsel %vm350, %v840, 0
        %855 = vmatprep.subr.mxu0 0.0
        %856 = vmatpush1.msra.mxu0 %v844
        %857 = vmatprep.subr.mxu0 0.0
        %858 = vmatpush1.msra.mxu0 %v846
        %859 = vmatprep.subr.mxu0 0.0
        %860 = vmatpush1.msra.mxu0 0.0
        %861 = vmatprep.subr.mxu0 0.0
        %862 = vmatpush1.msra.mxu0 0.0
        %863 = vmatprep.subr.mxu0 0.0
        %864 = vmatpush1.msra.mxu0 0.0
        %865 = vmatprep.subr.mxu0 0.0
        %866 = vmatpush1.msra.mxu0 0.0
        %867 = vmatprep.subr.mxu0 0.0
        %868 = vmatpush1.msra.mxu0 0.0
        %869 = vmatprep.subr.mxu0 0.0
        %870 = vmatpush1.msra.mxu0 0.0
        %871 = vmatprep.subr.mxu0 0.0
        %872 = vmatpush1.msra.mxu0 0.0
        %873 = vmatprep.subr.mxu0 0.0
        %874 = vmatpush1.msra.mxu0 0.0
        %875 = vmatprep.subr.mxu0 0.0
        %876 = vmatpush1.msra.mxu0 0.0
        %877 = vmatprep.subr.mxu0 0.0
        %878 = vmatpush1.msra.mxu0 0.0
        %879 = vmatprep.subr.mxu0 0.0
        %880 = vmatpush1.msra.mxu0 0.0
        %881 = vmatprep.subr.mxu0 0.0
        %882 = vmatpush1.msra.mxu0 0.0
        %883 = vmatprep.subr.mxu0 0.0
        %884 = vmatpush1.msra.mxu0 0.0
        %885 = vmatprep.subr.mxu0 0.0
        %886 = vmatpush1.msra.mxu0 0.0
        %887 = vmatprep.subr.mxu0 0.0
        %888 = vmatpush1.msra.mxu0 0.0
        %889 = vmatprep.subr.mxu0 0.0
        %890 = vmatpush1.msra.mxu0 0.0
        %891 = vmatprep.subr.mxu0 0.0
        %892 = vmatpush1.msra.mxu0 0.0
        %893 = vmatprep.subr.mxu0 0.0
        %894 = vmatpush1.msra.mxu0 0.0
        %895 = vmatprep.subr.mxu0 0.0
        %896 = vmatpush1.msra.mxu0 0.0
        %897 = vmatprep.subr.mxu0 0.0
        %898 = vmatpush1.msra.mxu0 0.0
        %899 = vmatprep.subr.mxu0 0.0
        %900 = vmatpush1.msra.mxu0 0.0
        %901 = vmatprep.subr.mxu0 0.0
        %902 = vmatpush1.msra.mxu0 0.0
        %903 = vmatprep.subr.mxu0 0.0
        %904 = vmatpush1.msra.mxu0 0.0
        %905 = vmatprep.subr.mxu0 0.0
        %906 = vmatpush1.msra.mxu0 0.0
        %907 = vmatprep.subr.mxu0 0.0
        %908 = vmatpush1.msra.mxu0 0.0
        %909 = vmatprep.subr.mxu0 0.0
        %910 = vmatpush1.msra.mxu0 0.0
        %911 = vmatprep.subr.mxu0 0.0
        %912 = vmatpush1.msra.mxu0 0.0
        %913 = vmatprep.subr.mxu0 0.0
        %914 = vmatpush1.msra.mxu0 0.0
        %915 = vmatprep.subr.mxu0 0.0
        %916 = vmatpush1.msra.mxu0 0.0
        %917 = vmatprep.subr.mxu0 0.0
        %918 = vmatpush1.msra.mxu0 0.0
        %919 = vmatprep.mubr.f32.mxu0 0.0
        %920 = vmatmul.mubr.f32.gmra.mrb[0].mxu0 %v850
        %v921 = vpop.f32.mrb[0].mxu0
        %v922 = vadd.f32 0.0, %v921
        %v923 = vpop.f32.mrb[0].mxu0
        %924 = vmatprep.mubr.f32.mxu0 0.0
        %925 = vmatmul.mubr.f32.gmra.mrb[0].mxu0 %v853
        %v926 = vpop.f32.mrb[0].mxu0
        %v927 = vadd.f32 0.0, %v926
        %v928 = vpop.f32.mrb[0].mxu0
        %929 = vdwg.mxu0
        %932 = vrot.lane.b32.xlu0 %v452, 112
        %v933 = vpop.permute.xlu0 %932
        %934 = vrot.lane.b32.xlu0 %v457, 112
        %v935 = vpop.permute.xlu0 %934
        %938 = vmatprep.subr.mxu0 0.0
        %939 = vmatpush1.msra.mxu0 %v933
        %940 = vmatprep.subr.mxu0 0.0
        %941 = vmatpush1.msra.mxu0 %v935
        %942 = vmatprep.subr.mxu0 0.0
        %943 = vmatpush1.msra.mxu0 0.0
        %944 = vmatprep.subr.mxu0 0.0
        %945 = vmatpush1.msra.mxu0 0.0
        %946 = vmatprep.subr.mxu0 0.0
        %947 = vmatpush1.msra.mxu0 0.0
        %948 = vmatprep.subr.mxu0 0.0
        %949 = vmatpush1.msra.mxu0 0.0
        %950 = vmatprep.subr.mxu0 0.0
        %951 = vmatpush1.msra.mxu0 0.0
        %952 = vmatprep.subr.mxu0 0.0
        %953 = vmatpush1.msra.mxu0 0.0
        %954 = vmatprep.subr.mxu0 0.0
        %955 = vmatpush1.msra.mxu0 0.0
        %956 = vmatprep.subr.mxu0 0.0
        %957 = vmatpush1.msra.mxu0 0.0
        %958 = vmatprep.subr.mxu0 0.0
        %959 = vmatpush1.msra.mxu0 0.0
        %960 = vmatprep.subr.mxu0 0.0
        %961 = vmatpush1.msra.mxu0 0.0
        %962 = vmatprep.subr.mxu0 0.0
        %963 = vmatpush1.msra.mxu0 0.0
        %964 = vmatprep.subr.mxu0 0.0
        %965 = vmatpush1.msra.mxu0 0.0
        %966 = vmatprep.subr.mxu0 0.0
        %967 = vmatpush1.msra.mxu0 0.0
        %968 = vmatprep.subr.mxu0 0.0
        %969 = vmatpush1.msra.mxu0 0.0
        %970 = vmatprep.subr.mxu0 0.0
        %971 = vmatpush1.msra.mxu0 0.0
        %972 = vmatprep.subr.mxu0 0.0
        %973 = vmatpush1.msra.mxu0 0.0
        %974 = vmatprep.subr.mxu0 0.0
        %975 = vmatpush1.msra.mxu0 0.0
        %976 = vmatprep.subr.mxu0 0.0
        %977 = vmatpush1.msra.mxu0 0.0
        %978 = vmatprep.subr.mxu0 0.0
        %979 = vmatpush1.msra.mxu0 0.0
        %980 = vmatprep.subr.mxu0 0.0
        %981 = vmatpush1.msra.mxu0 0.0
        %982 = vmatprep.subr.mxu0 0.0
        %983 = vmatpush1.msra.mxu0 0.0
        %984 = vmatprep.subr.mxu0 0.0
        %985 = vmatpush1.msra.mxu0 0.0
        %986 = vmatprep.subr.mxu0 0.0
        %987 = vmatpush1.msra.mxu0 0.0
        %988 = vmatprep.subr.mxu0 0.0
        %989 = vmatpush1.msra.mxu0 0.0
        %990 = vmatprep.subr.mxu0 0.0
        %991 = vmatpush1.msra.mxu0 0.0
        %992 = vmatprep.subr.mxu0 0.0
        %993 = vmatpush1.msra.mxu0 0.0
        %994 = vmatprep.subr.mxu0 0.0
        %995 = vmatpush1.msra.mxu0 0.0
        %996 = vmatprep.subr.mxu0 0.0
        %997 = vmatpush1.msra.mxu0 0.0
        %998 = vmatprep.subr.mxu0 0.0
        %999 = vmatpush1.msra.mxu0 0.0
        %1000 = vmatprep.subr.mxu0 0.0
        %1001 = vmatpush1.msra.mxu0 0.0
        %1002 = vmatprep.mubr.f32.mxu0 0.0
        %1003 = vmatmul.mubr.f32.gmra.mrb[0].mxu0 %v850
        %v1004 = vpop.f32.mrb[0].mxu0
        %v1005 = vadd.f32 0.0, %v1004
        %v1006 = vpop.f32.mrb[0].mxu0
        %1007 = vmatprep.mubr.f32.mxu0 0.0
        %1008 = vmatmul.mubr.f32.gmra.mrb[0].mxu0 %v853
        %v1009 = vpop.f32.mrb[0].mxu0
        %v1010 = vadd.f32 0.0, %v1009
        %v1011 = vpop.f32.mrb[0].mxu0
        %1012 = vdwg.mxu0
        %1015 = vrot.lane.b32.xlu0 %v462, 112
        %v1016 = vpop.permute.xlu0 %1015
        %1017 = vrot.lane.b32.xlu0 %v467, 112
        %v1018 = vpop.permute.xlu0 %1017
        %1021 = vmatprep.subr.mxu0 0.0
        %1022 = vmatpush1.msra.mxu0 %v1016
        %1023 = vmatprep.subr.mxu0 0.0
        %1024 = vmatpush1.msra.mxu0 %v1018
        %1025 = vmatprep.subr.mxu0 0.0
        %1026 = vmatpush1.msra.mxu0 0.0
        %1027 = vmatprep.subr.mxu0 0.0
        %1028 = vmatpush1.msra.mxu0 0.0
        %1029 = vmatprep.subr.mxu0 0.0
        %1030 = vmatpush1.msra.mxu0 0.0
        %1031 = vmatprep.subr.mxu0 0.0
        %1032 = vmatpush1.msra.mxu0 0.0
        %1033 = vmatprep.subr.mxu0 0.0
        %1034 = vmatpush1.msra.mxu0 0.0
        %1035 = vmatprep.subr.mxu0 0.0
        %1036 = vmatpush1.msra.mxu0 0.0
        %1037 = vmatprep.subr.mxu0 0.0
        %1038 = vmatpush1.msra.mxu0 0.0
        %1039 = vmatprep.subr.mxu0 0.0
        %1040 = vmatpush1.msra.mxu0 0.0
        %1041 = vmatprep.subr.mxu0 0.0
        %1042 = vmatpush1.msra.mxu0 0.0
        %1043 = vmatprep.subr.mxu0 0.0
        %1044 = vmatpush1.msra.mxu0 0.0
        %1045 = vmatprep.subr.mxu0 0.0
        %1046 = vmatpush1.msra.mxu0 0.0
        %1047 = vmatprep.subr.mxu0 0.0
        %1048 = vmatpush1.msra.mxu0 0.0
        %1049 = vmatprep.subr.mxu0 0.0
        %1050 = vmatpush1.msra.mxu0 0.0
        %1051 = vmatprep.subr.mxu0 0.0
        %1052 = vmatpush1.msra.mxu0 0.0
        %1053 = vmatprep.subr.mxu0 0.0
        %1054 = vmatpush1.msra.mxu0 0.0
        %1055 = vmatprep.subr.mxu0 0.0
        %1056 = vmatpush1.msra.mxu0 0.0
        %1057 = vmatprep.subr.mxu0 0.0
        %1058 = vmatpush1.msra.mxu0 0.0
        %1059 = vmatprep.subr.mxu0 0.0
        %1060 = vmatpush1.msra.mxu0 0.0
        %1061 = vmatprep.subr.mxu0 0.0
        %1062 = vmatpush1.msra.mxu0 0.0
        %1063 = vmatprep.subr.mxu0 0.0
        %1064 = vmatpush1.msra.mxu0 0.0
        %1065 = vmatprep.subr.mxu0 0.0
        %1066 = vmatpush1.msra.mxu0 0.0
        %1067 = vmatprep.subr.mxu0 0.0
        %1068 = vmatpush1.msra.mxu0 0.0
        %1069 = vmatprep.subr.mxu0 0.0
        %1070 = vmatpush1.msra.mxu0 0.0
        %1071 = vmatprep.subr.mxu0 0.0
        %1072 = vmatpush1.msra.mxu0 0.0
        %1073 = vmatprep.subr.mxu0 0.0
        %1074 = vmatpush1.msra.mxu0 0.0
        %1075 = vmatprep.subr.mxu0 0.0
        %1076 = vmatpush1.msra.mxu0 0.0
        %1077 = vmatprep.subr.mxu0 0.0
        %1078 = vmatpush1.msra.mxu0 0.0
        %1079 = vmatprep.subr.mxu0 0.0
        %1080 = vmatpush1.msra.mxu0 0.0
        %1081 = vmatprep.subr.mxu0 0.0
        %1082 = vmatpush1.msra.mxu0 0.0
        %1083 = vmatprep.subr.mxu0 0.0
        %1084 = vmatpush1.msra.mxu0 0.0
        %1085 = vmatprep.mubr.f32.mxu0 0.0
        %1086 = vmatmul.mubr.f32.gmra.mrb[0].mxu0 %v850
        %v1087 = vpop.f32.mrb[0].mxu0
        %v1088 = vadd.f32 0.0, %v1087
        %v1089 = vpop.f32.mrb[0].mxu0
        %1090 = vmatprep.mubr.f32.mxu0 0.0
        %1091 = vmatmul.mubr.f32.gmra.mrb[0].mxu0 %v853
        %v1092 = vpop.f32.mrb[0].mxu0
        %v1093 = vadd.f32 0.0, %v1092
        %v1094 = vpop.f32.mrb[0].mxu0
        %1095 = vdwg.mxu0
        %1098 = vrot.lane.b32.xlu0 %v472, 112
        %v1099 = vpop.permute.xlu0 %1098
        %1100 = vrot.lane.b32.xlu0 %v477, 112
        %v1101 = vpop.permute.xlu0 %1100
        %1104 = vmatprep.subr.mxu0 0.0
        %1105 = vmatpush1.msra.mxu0 %v1099
        %1106 = vmatprep.subr.mxu0 0.0
        %1107 = vmatpush1.msra.mxu0 %v1101
        %1108 = vmatprep.subr.mxu0 0.0
        %1109 = vmatpush1.msra.mxu0 0.0
        %1110 = vmatprep.subr.mxu0 0.0
        %1111 = vmatpush1.msra.mxu0 0.0
        %1112 = vmatprep.subr.mxu0 0.0
        %1113 = vmatpush1.msra.mxu0 0.0
        %1114 = vmatprep.subr.mxu0 0.0
        %1115 = vmatpush1.msra.mxu0 0.0
        %1116 = vmatprep.subr.mxu0 0.0
        %1117 = vmatpush1.msra.mxu0 0.0
        %1118 = vmatprep.subr.mxu0 0.0
        %1119 = vmatpush1.msra.mxu0 0.0
        %1120 = vmatprep.subr.mxu0 0.0
        %1121 = vmatpush1.msra.mxu0 0.0
        %1122 = vmatprep.subr.mxu0 0.0
        %1123 = vmatpush1.msra.mxu0 0.0
        %1124 = vmatprep.subr.mxu0 0.0
        %1125 = vmatpush1.msra.mxu0 0.0
        %1126 = vmatprep.subr.mxu0 0.0
        %1127 = vmatpush1.msra.mxu0 0.0
        %1128 = vmatprep.subr.mxu0 0.0
        %1129 = vmatpush1.msra.mxu0 0.0
        %1130 = vmatprep.subr.mxu0 0.0
        %1131 = vmatpush1.msra.mxu0 0.0
        %1132 = vmatprep.subr.mxu0 0.0
        %1133 = vmatpush1.msra.mxu0 0.0
        %1134 = vmatprep.subr.mxu0 0.0
        %1135 = vmatpush1.msra.mxu0 0.0
        %1136 = vmatprep.subr.mxu0 0.0
        %1137 = vmatpush1.msra.mxu0 0.0
        %1138 = vmatprep.subr.mxu0 0.0
        %1139 = vmatpush1.msra.mxu0 0.0
        %1140 = vmatprep.subr.mxu0 0.0
        %1141 = vmatpush1.msra.mxu0 0.0
        %1142 = vmatprep.subr.mxu0 0.0
        %1143 = vmatpush1.msra.mxu0 0.0
        %1144 = vmatprep.subr.mxu0 0.0
        %1145 = vmatpush1.msra.mxu0 0.0
        %1146 = vmatprep.subr.mxu0 0.0
        %1147 = vmatpush1.msra.mxu0 0.0
        %1148 = vmatprep.subr.mxu0 0.0
        %1149 = vmatpush1.msra.mxu0 0.0
        %1150 = vmatprep.subr.mxu0 0.0
        %1151 = vmatpush1.msra.mxu0 0.0
        %1152 = vmatprep.subr.mxu0 0.0
        %1153 = vmatpush1.msra.mxu0 0.0
        %1154 = vmatprep.subr.mxu0 0.0
        %1155 = vmatpush1.msra.mxu0 0.0
        %1156 = vmatprep.subr.mxu0 0.0
        %1157 = vmatpush1.msra.mxu0 0.0
        %1158 = vmatprep.subr.mxu0 0.0
        %1159 = vmatpush1.msra.mxu0 0.0
        %1160 = vmatprep.subr.mxu0 0.0
        %1161 = vmatpush1.msra.mxu0 0.0
        %1162 = vmatprep.subr.mxu0 0.0
        %1163 = vmatpush1.msra.mxu0 0.0
        %1164 = vmatprep.subr.mxu0 0.0
        %1165 = vmatpush1.msra.mxu0 0.0
        %1166 = vmatprep.subr.mxu0 0.0
        %1167 = vmatpush1.msra.mxu0 0.0
        %1168 = vmatprep.mubr.f32.mxu0 0.0
        %1169 = vmatmul.mubr.f32.gmra.mrb[0].mxu0 %v850
        %v1170 = vpop.f32.mrb[0].mxu0
        %v1171 = vadd.f32 0.0, %v1170
        %v1172 = vpop.f32.mrb[0].mxu0
        %1173 = vmatprep.mubr.f32.mxu0 0.0
        %1174 = vmatmul.mubr.f32.gmra.mrb[0].mxu0 %v853
        %v1175 = vpop.f32.mrb[0].mxu0
        %v1176 = vadd.f32 0.0, %v1175
        %v1177 = vpop.f32.mrb[0].mxu0
        %1178 = vdwg.mxu0
        %v1179 = vmul.f32 %v922, %v922
        %v1180 = vmul.f32 %v927, %v927
        %v1181 = vmul.f32 %v1005, %v1005
        %v1182 = vmul.f32 %v1010, %v1010
        %v1183 = vmul.f32 %v922, %v1005
        %v1184 = vmul.f32 %v927, %v1010
        %v1185 = vadd.f32 %v1179, %v1181
        %v1186 = vadd.f32 %v1180, %v1182
        %v1187 = vmul.f32 %v1183, 2.0
        %v1188 = vmul.f32 %v1184, 2.0
        %v1189 = vadd.f32 %v1187, 0.0001
        %v1190 = vadd.f32 %v1188, 0.0001
        %v1191 = vadd.f32 %v1185, 0.0001
        %v1192 = vadd.f32 %v1186, 0.0001
        %v1193 = vrcp.pop %v1191
        %v1194 = vrcp.pop %v1192
        %v1195 = vmul.f32 %v1191, %v1193
        %v1196 = vmul.f32 %v1192, %v1194
        %v1197 = vsub.f32 2.0, %v1195
        %v1198 = vsub.f32 2.0, %v1196
        %v1199 = vmul.f32 %v1193, %v1197
        %v1200 = vmul.f32 %v1194, %v1198
        %v1201 = vmul.f32 %v1189, %v1199
        %v1202 = vmul.f32 %v1190, %v1200
        %v1203 = vsub.f32 %v1088, %v1183
        %v1204 = vsub.f32 %v1093, %v1184
        %v1205 = vmul.f32 %v1203, 2.0
        %v1206 = vmul.f32 %v1204, 2.0
        %v1207 = vadd.f32 %v1205, 0.0009
        %v1208 = vadd.f32 %v1206, 0.0009
        %v1209 = vsub.f32 %v1171, %v1185
        %v1210 = vsub.f32 %v1176, %v1186
        %v1211 = vadd.f32 %v1209, 0.0009
        %v1212 = vadd.f32 %v1210, 0.0009
        %v1213 = vrcp.pop %v1211
        %v1214 = vrcp.pop %v1212
        %v1215 = vmul.f32 %v1211, %v1213
        %v1216 = vmul.f32 %v1212, %v1214
        %v1217 = vsub.f32 2.0, %v1215
        %v1218 = vsub.f32 2.0, %v1216
        %v1219 = vmul.f32 %v1213, %v1217
        %v1220 = vmul.f32 %v1214, %v1218
        %v1221 = vmul.f32 %v1207, %v1219
        %v1222 = vmul.f32 %v1208, %v1220
        %v1223 = vmul.f32 %v1201, %v1221
        %v1224 = vmul.f32 %v1202, %v1222
        %v1225 = vmul.f32 %v1223, %v1223
        %v1226 = vmul.f32 %v1224, %v1224
        %v1227 = vmul.f32 %v836, %v1225
        %v1228 = vmul.f32 %v837, %v1226
        %s1229 = scalar_lea.vmem %s275, 16 [#allocation2]
        %v1230 = vld [vmem:[%s1229] sm:$0xff]
        %v1231 = vld [vmem:[%s1229 + $0x8] sm:$0xff]
        %s1232 = scalar_lea.vmem %s284, 16 [#allocation5]
        %v1233 = vld [vmem:[%s1232] sm:$0xff]
        %v1234 = vld [vmem:[%s1232 + $0x8] sm:$0xff]
        %v1235 = vmul.f32 %v1230, %v1233
        %v1236 = vmul.f32 %v1231, %v1234
        %v1237 = vmul.f32 %v1230, %v1230
        %v1238 = vmul.f32 %v1231, %v1231
        %v1239 = vmul.f32 %v1233, %v1233
        %v1240 = vmul.f32 %v1234, %v1234
        %v1241 = vadd.f32 %v1237, %v1239
        %v1242 = vadd.f32 %v1238, %v1240
        %v1243 = vsub.f32 %v1230, %v1233
        %v1244 = vsub.f32 %v1231, %v1234
        %v1245 = vand.u32 2147483647, %v1243
        %v1246 = vand.u32 2147483647, %v1244
        %v1247 = vadd.f32 %v346, %v1245
        %v1248 = vadd.f32 %v347, %v1246
        %1251 = vrot.lane.b32.xlu0 %v348, 96
        %v1252 = vpop.permute.xlu0 %1251
        %1253 = vrot.lane.b32.xlu0 %v349, 96
        %v1254 = vpop.permute.xlu0 %1253
        %v1258 = vsel %vm350, %v1230, 0
        %v1261 = vsel %vm350, %v1231, 0
        %v1264 = vsel %vm350, %v1233, 0
        %v1267 = vsel %vm350, %v1234, 0
        %v1270 = vsel %vm350, %v1235, 0
        %v1273 = vsel %vm350, %v1236, 0
        %v1276 = vsel %vm350, %v1241, 0
        %v1279 = vsel %vm350, %v1242, 0
        %1281 = vmatprep.subr.mxu0 0.0
        %1282 = vmatpush1.msra.mxu0 %v1252
        %1283 = vmatprep.subr.mxu0 0.0
        %1284 = vmatpush1.msra.mxu0 %v1254
        %1285 = vmatprep.subr.mxu0 0.0
        %1286 = vmatpush1.msra.mxu0 0.0
        %1287 = vmatprep.subr.mxu0 0.0
        %1288 = vmatpush1.msra.mxu0 0.0
        %1289 = vmatprep.subr.mxu0 0.0
        %1290 = vmatpush1.msra.mxu0 0.0
        %1291 = vmatprep.subr.mxu0 0.0
        %1292 = vmatpush1.msra.mxu0 0.0
        %1293 = vmatprep.subr.mxu0 0.0
        %1294 = vmatpush1.msra.mxu0 0.0
        %1295 = vmatprep.subr.mxu0 0.0
        %1296 = vmatpush1.msra.mxu0 0.0
        %1297 = vmatprep.subr.mxu0 0.0
        %1298 = vmatpush1.msra.mxu0 0.0
        %1299 = vmatprep.subr.mxu0 0.0
        %1300 = vmatpush1.msra.mxu0 0.0
        %1301 = vmatprep.subr.mxu0 0.0
        %1302 = vmatpush1.msra.mxu0 0.0
        %1303 = vmatprep.subr.mxu0 0.0
        %1304 = vmatpush1.msra.mxu0 0.0
        %1305 = vmatprep.subr.mxu0 0.0
        %1306 = vmatpush1.msra.mxu0 0.0
        %1307 = vmatprep.subr.mxu0 0.0
        %1308 = vmatpush1.msra.mxu0 0.0
        %1309 = vmatprep.subr.mxu0 0.0
        %1310 = vmatpush1.msra.mxu0 0.0
        %1311 = vmatprep.subr.mxu0 0.0
        %1312 = vmatpush1.msra.mxu0 0.0
        %1313 = vmatprep.subr.mxu0 0.0
        %1314 = vmatpush1.msra.mxu0 0.0
        %1315 = vmatprep.subr.mxu0 0.0
        %1316 = vmatpush1.msra.mxu0 0.0
        %1317 = vmatprep.subr.mxu0 0.0
        %1318 = vmatpush1.msra.mxu0 0.0
        %1319 = vmatprep.subr.mxu0 0.0
        %1320 = vmatpush1.msra.mxu0 0.0
        %1321 = vmatprep.subr.mxu0 0.0
        %1322 = vmatpush1.msra.mxu0 0.0
        %1323 = vmatprep.subr.mxu0 0.0
        %1324 = vmatpush1.msra.mxu0 0.0
        %1325 = vmatprep.subr.mxu0 0.0
        %1326 = vmatpush1.msra.mxu0 0.0
        %1327 = vmatprep.subr.mxu0 0.0
        %1328 = vmatpush1.msra.mxu0 0.0
        %1329 = vmatprep.subr.mxu0 0.0
        %1330 = vmatpush1.msra.mxu0 0.0
        %1331 = vmatprep.subr.mxu0 0.0
        %1332 = vmatpush1.msra.mxu0 0.0
        %1333 = vmatprep.subr.mxu0 0.0
        %1334 = vmatpush1.msra.mxu0 0.0
        %1335 = vmatprep.subr.mxu0 0.0
        %1336 = vmatpush1.msra.mxu0 0.0
        %1337 = vmatprep.subr.mxu0 0.0
        %1338 = vmatpush1.msra.mxu0 0.0
        %1339 = vmatprep.subr.mxu0 0.0
        %1340 = vmatpush1.msra.mxu0 0.0
        %1341 = vmatprep.subr.mxu0 0.0
        %1342 = vmatpush1.msra.mxu0 0.0
        %1343 = vmatprep.subr.mxu0 0.0
        %1344 = vmatpush1.msra.mxu0 0.0
        %1345 = vmatprep.mubr.f32.mxu0 0.0
        %1346 = vmatmul.mubr.f32.gmra.mrb[0].mxu0 %v1258
        %v1347 = vpop.f32.mrb[0].mxu0
        %v1348 = vadd.f32 0.0, %v1347
        %v1349 = vpop.f32.mrb[0].mxu0
        %1350 = vmatprep.mubr.f32.mxu0 0.0
        %1351 = vmatmul.mubr.f32.gmra.mrb[0].mxu0 %v1261
        %v1352 = vpop.f32.mrb[0].mxu0
        %v1353 = vadd.f32 0.0, %v1352
        %v1354 = vpop.f32.mrb[0].mxu0
        %1355 = vmatprep.mubr.f32.mxu0 0.0
        %1356 = vmatmul.mubr.f32.gmra.mrb[0].mxu0 %v1264
        %v1357 = vpop.f32.mrb[0].mxu0
        %v1358 = vadd.f32 0.0, %v1357
        %v1359 = vpop.f32.mrb[0].mxu0
        %1360 = vmatprep.mubr.f32.mxu0 0.0
        %1361 = vmatmul.mubr.f32.gmra.mrb[0].mxu0 %v1267
        %v1362 = vpop.f32.mrb[0].mxu0
        %v1363 = vadd.f32 0.0, %v1362
        %v1364 = vpop.f32.mrb[0].mxu0
        %1365 = vmatprep.mubr.f32.mxu0 0.0
        %1366 = vmatmul.mubr.f32.gmra.mrb[0].mxu0 %v1270
        %v1367 = vpop.f32.mrb[0].mxu0
        %v1368 = vadd.f32 0.0, %v1367
        %v1369 = vpop.f32.mrb[0].mxu0
        %1370 = vmatprep.mubr.f32.mxu0 0.0
        %1371 = vmatmul.mubr.f32.gmra.mrb[0].mxu0 %v1273
        %v1372 = vpop.f32.mrb[0].mxu0
        %v1373 = vadd.f32 0.0, %v1372
        %v1374 = vpop.f32.mrb[0].mxu0
        %1375 = vmatprep.mubr.f32.mxu0 0.0
        %1376 = vmatmul.mubr.f32.gmra.mrb[0].mxu0 %v1276
        %v1377 = vpop.f32.mrb[0].mxu0
        %v1378 = vadd.f32 0.0, %v1377
        %v1379 = vpop.f32.mrb[0].mxu0
        %1380 = vmatprep.mubr.f32.mxu0 0.0
        %1381 = vmatmul.mubr.f32.gmra.mrb[0].mxu0 %v1279
        %v1382 = vpop.f32.mrb[0].mxu0
        %v1383 = vadd.f32 0.0, %v1382
        %v1384 = vpop.f32.mrb[0].mxu0
        %1385 = vdwg.mxu0
        %1386 = vmatprep.subr.mxu0 0.0
        %1387 = vmatpush1.msra.mxu0 %v1348
        %1388 = vmatprep.subr.mxu0 0.0
        %1389 = vmatpush1.msra.mxu0 %v1353
        %1390 = vmatprep.subr.mxu0 0.0
        %1391 = vmatpush1.msra.mxu0 0.0
        %1392 = vmatprep.subr.mxu0 0.0
        %1393 = vmatpush1.msra.mxu0 0.0
        %1394 = vmatprep.subr.mxu0 0.0
        %1395 = vmatpush1.msra.mxu0 0.0
        %1396 = vmatprep.subr.mxu0 0.0
        %1397 = vmatpush1.msra.mxu0 0.0
        %1398 = vmatprep.subr.mxu0 0.0
        %1399 = vmatpush1.msra.mxu0 0.0
        %1400 = vmatprep.subr.mxu0 0.0
        %1401 = vmatpush1.msra.mxu0 0.0
        %1402 = vmatprep.subr.mxu0 0.0
        %1403 = vmatpush1.msra.mxu0 0.0
        %1404 = vmatprep.subr.mxu0 0.0
        %1405 = vmatpush1.msra.mxu0 0.0
        %1406 = vmatprep.subr.mxu0 0.0
        %1407 = vmatpush1.msra.mxu0 0.0
        %1408 = vmatprep.subr.mxu0 0.0
        %1409 = vmatpush1.msra.mxu0 0.0
        %1410 = vmatprep.subr.mxu0 0.0
        %1411 = vmatpush1.msra.mxu0 0.0
        %1412 = vmatprep.subr.mxu0 0.0
        %1413 = vmatpush1.msra.mxu0 0.0
        %1414 = vmatprep.subr.mxu0 0.0
        %1415 = vmatpush1.msra.mxu0 0.0
        %1416 = vmatprep.subr.mxu0 0.0
        %1417 = vmatpush1.msra.mxu0 0.0
        %1418 = vmatprep.subr.mxu0 0.0
        %1419 = vmatpush1.msra.mxu0 0.0
        %1420 = vmatprep.subr.mxu0 0.0
        %1421 = vmatpush1.msra.mxu0 0.0
        %1422 = vmatprep.subr.mxu0 0.0
        %1423 = vmatpush1.msra.mxu0 0.0
        %1424 = vmatprep.subr.mxu0 0.0
        %1425 = vmatpush1.msra.mxu0 0.0
        %1426 = vmatprep.subr.mxu0 0.0
        %1427 = vmatpush1.msra.mxu0 0.0
        %1428 = vmatprep.subr.mxu0 0.0
        %1429 = vmatpush1.msra.mxu0 0.0
        %1430 = vmatprep.subr.mxu0 0.0
        %1431 = vmatpush1.msra.mxu0 0.0
        %1432 = vmatprep.subr.mxu0 0.0
        %1433 = vmatpush1.msra.mxu0 0.0
        %1434 = vmatprep.subr.mxu0 0.0
        %1435 = vmatpush1.msra.mxu0 0.0
        %1436 = vmatprep.subr.mxu0 0.0
        %1437 = vmatpush1.msra.mxu0 0.0
        %1438 = vmatprep.subr.mxu0 0.0
        %1439 = vmatpush1.msra.mxu0 0.0
        %1440 = vmatprep.subr.mxu0 0.0
        %1441 = vmatpush1.msra.mxu0 0.0
        %1442 = vmatprep.subr.mxu0 0.0
        %1443 = vmatpush1.msra.mxu0 0.0
        %1444 = vmatprep.subr.mxu0 0.0
        %1445 = vmatpush1.msra.mxu0 0.0
        %1446 = vmatprep.subr.mxu0 0.0
        %1447 = vmatpush1.msra.mxu0 0.0
        %1448 = vmatprep.subr.mxu0 0.0
        %1449 = vmatpush1.msra.mxu0 0.0
        %1450 = vmatprep.mubr.f32.mxu0 0.0
        %1451 = vmatmul.mubr.f32.gmra.mrb[0].mxu0 %v850
        %v1452 = vpop.f32.mrb[0].mxu0
        %v1453 = vadd.f32 0.0, %v1452
        %v1454 = vpop.f32.mrb[0].mxu0
        %1455 = vmatprep.mubr.f32.mxu0 0.0
        %1456 = vmatmul.mubr.f32.gmra.mrb[0].mxu0 %v853
        %v1457 = vpop.f32.mrb[0].mxu0
        %v1458 = vadd.f32 0.0, %v1457
        %v1459 = vpop.f32.mrb[0].mxu0
        %1460 = vdwg.mxu0
        %1461 = vmatprep.subr.mxu0 0.0
        %1462 = vmatpush1.msra.mxu0 %v1358
        %1463 = vmatprep.subr.mxu0 0.0
        %1464 = vmatpush1.msra.mxu0 %v1363
        %1465 = vmatprep.subr.mxu0 0.0
        %1466 = vmatpush1.msra.mxu0 0.0
        %1467 = vmatprep.subr.mxu0 0.0
        %1468 = vmatpush1.msra.mxu0 0.0
        %1469 = vmatprep.subr.mxu0 0.0
        %1470 = vmatpush1.msra.mxu0 0.0
        %1471 = vmatprep.subr.mxu0 0.0
        %1472 = vmatpush1.msra.mxu0 0.0
        %1473 = vmatprep.subr.mxu0 0.0
        %1474 = vmatpush1.msra.mxu0 0.0
        %1475 = vmatprep.subr.mxu0 0.0
        %1476 = vmatpush1.msra.mxu0 0.0
        %1477 = vmatprep.subr.mxu0 0.0
        %1478 = vmatpush1.msra.mxu0 0.0
        %1479 = vmatprep.subr.mxu0 0.0
        %1480 = vmatpush1.msra.mxu0 0.0
        %1481 = vmatprep.subr.mxu0 0.0
        %1482 = vmatpush1.msra.mxu0 0.0
        %1483 = vmatprep.subr.mxu0 0.0
        %1484 = vmatpush1.msra.mxu0 0.0
        %1485 = vmatprep.subr.mxu0 0.0
        %1486 = vmatpush1.msra.mxu0 0.0
        %1487 = vmatprep.subr.mxu0 0.0
        %1488 = vmatpush1.msra.mxu0 0.0
        %1489 = vmatprep.subr.mxu0 0.0
        %1490 = vmatpush1.msra.mxu0 0.0
        %1491 = vmatprep.subr.mxu0 0.0
        %1492 = vmatpush1.msra.mxu0 0.0
        %1493 = vmatprep.subr.mxu0 0.0
        %1494 = vmatpush1.msra.mxu0 0.0
        %1495 = vmatprep.subr.mxu0 0.0
        %1496 = vmatpush1.msra.mxu0 0.0
        %1497 = vmatprep.subr.mxu0 0.0
        %1498 = vmatpush1.msra.mxu0 0.0
        %1499 = vmatprep.subr.mxu0 0.0
        %1500 = vmatpush1.msra.mxu0 0.0
        %1501 = vmatprep.subr.mxu0 0.0
        %1502 = vmatpush1.msra.mxu0 0.0
        %1503 = vmatprep.subr.mxu0 0.0
        %1504 = vmatpush1.msra.mxu0 0.0
        %1505 = vmatprep.subr.mxu0 0.0
        %1506 = vmatpush1.msra.mxu0 0.0
        %1507 = vmatprep.subr.mxu0 0.0
        %1508 = vmatpush1.msra.mxu0 0.0
        %1509 = vmatprep.subr.mxu0 0.0
        %1510 = vmatpush1.msra.mxu0 0.0
        %1511 = vmatprep.subr.mxu0 0.0
        %1512 = vmatpush1.msra.mxu0 0.0
        %1513 = vmatprep.subr.mxu0 0.0
        %1514 = vmatpush1.msra.mxu0 0.0
        %1515 = vmatprep.subr.mxu0 0.0
        %1516 = vmatpush1.msra.mxu0 0.0
        %1517 = vmatprep.subr.mxu0 0.0
        %1518 = vmatpush1.msra.mxu0 0.0
        %1519 = vmatprep.subr.mxu0 0.0
        %1520 = vmatpush1.msra.mxu0 0.0
        %1521 = vmatprep.subr.mxu0 0.0
        %1522 = vmatpush1.msra.mxu0 0.0
        %1523 = vmatprep.subr.mxu0 0.0
        %1524 = vmatpush1.msra.mxu0 0.0
        %1525 = vmatprep.mubr.f32.mxu0 0.0
        %1526 = vmatmul.mubr.f32.gmra.mrb[0].mxu0 %v850
        %v1527 = vpop.f32.mrb[0].mxu0
        %v1528 = vadd.f32 0.0, %v1527
        %v1529 = vpop.f32.mrb[0].mxu0
        %1530 = vmatprep.mubr.f32.mxu0 0.0
        %1531 = vmatmul.mubr.f32.gmra.mrb[0].mxu0 %v853
        %v1532 = vpop.f32.mrb[0].mxu0
        %v1533 = vadd.f32 0.0, %v1532
        %v1534 = vpop.f32.mrb[0].mxu0
        %1535 = vdwg.mxu0
        %1536 = vmatprep.subr.mxu0 0.0
        %1537 = vmatpush1.msra.mxu0 %v1368
        %1538 = vmatprep.subr.mxu0 0.0
        %1539 = vmatpush1.msra.mxu0 %v1373
        %1540 = vmatprep.subr.mxu0 0.0
        %1541 = vmatpush1.msra.mxu0 0.0
        %1542 = vmatprep.subr.mxu0 0.0
        %1543 = vmatpush1.msra.mxu0 0.0
        %1544 = vmatprep.subr.mxu0 0.0
        %1545 = vmatpush1.msra.mxu0 0.0
        %1546 = vmatprep.subr.mxu0 0.0
        %1547 = vmatpush1.msra.mxu0 0.0
        %1548 = vmatprep.subr.mxu0 0.0
        %1549 = vmatpush1.msra.mxu0 0.0
        %1550 = vmatprep.subr.mxu0 0.0
        %1551 = vmatpush1.msra.mxu0 0.0
        %1552 = vmatprep.subr.mxu0 0.0
        %1553 = vmatpush1.msra.mxu0 0.0
        %1554 = vmatprep.subr.mxu0 0.0
        %1555 = vmatpush1.msra.mxu0 0.0
        %1556 = vmatprep.subr.mxu0 0.0
        %1557 = vmatpush1.msra.mxu0 0.0
        %1558 = vmatprep.subr.mxu0 0.0
        %1559 = vmatpush1.msra.mxu0 0.0
        %1560 = vmatprep.subr.mxu0 0.0
        %1561 = vmatpush1.msra.mxu0 0.0
        %1562 = vmatprep.subr.mxu0 0.0
        %1563 = vmatpush1.msra.mxu0 0.0
        %1564 = vmatprep.subr.mxu0 0.0
        %1565 = vmatpush1.msra.mxu0 0.0
        %1566 = vmatprep.subr.mxu0 0.0
        %1567 = vmatpush1.msra.mxu0 0.0
        %1568 = vmatprep.subr.mxu0 0.0
        %1569 = vmatpush1.msra.mxu0 0.0
        %1570 = vmatprep.subr.mxu0 0.0
        %1571 = vmatpush1.msra.mxu0 0.0
        %1572 = vmatprep.subr.mxu0 0.0
        %1573 = vmatpush1.msra.mxu0 0.0
        %1574 = vmatprep.subr.mxu0 0.0
        %1575 = vmatpush1.msra.mxu0 0.0
        %1576 = vmatprep.subr.mxu0 0.0
        %1577 = vmatpush1.msra.mxu0 0.0
        %1578 = vmatprep.subr.mxu0 0.0
        %1579 = vmatpush1.msra.mxu0 0.0
        %1580 = vmatprep.subr.mxu0 0.0
        %1581 = vmatpush1.msra.mxu0 0.0
        %1582 = vmatprep.subr.mxu0 0.0
        %1583 = vmatpush1.msra.mxu0 0.0
        %1584 = vmatprep.subr.mxu0 0.0
        %1585 = vmatpush1.msra.mxu0 0.0
        %1586 = vmatprep.subr.mxu0 0.0
        %1587 = vmatpush1.msra.mxu0 0.0
        %1588 = vmatprep.subr.mxu0 0.0
        %1589 = vmatpush1.msra.mxu0 0.0
        %1590 = vmatprep.subr.mxu0 0.0
        %1591 = vmatpush1.msra.mxu0 0.0
        %1592 = vmatprep.subr.mxu0 0.0
        %1593 = vmatpush1.msra.mxu0 0.0
        %1594 = vmatprep.subr.mxu0 0.0
        %1595 = vmatpush1.msra.mxu0 0.0
        %1596 = vmatprep.subr.mxu0 0.0
        %1597 = vmatpush1.msra.mxu0 0.0
        %1598 = vmatprep.subr.mxu0 0.0
        %1599 = vmatpush1.msra.mxu0 0.0
        %1600 = vmatprep.mubr.f32.mxu0 0.0
        %1601 = vmatmul.mubr.f32.gmra.mrb[0].mxu0 %v850
        %v1602 = vpop.f32.mrb[0].mxu0
        %v1603 = vadd.f32 0.0, %v1602
        %v1604 = vpop.f32.mrb[0].mxu0
        %1605 = vmatprep.mubr.f32.mxu0 0.0
        %1606 = vmatmul.mubr.f32.gmra.mrb[0].mxu0 %v853
        %v1607 = vpop.f32.mrb[0].mxu0
        %v1608 = vadd.f32 0.0, %v1607
        %v1609 = vpop.f32.mrb[0].mxu0
        %1610 = vdwg.mxu0
        %1611 = vmatprep.subr.mxu0 0.0
        %1612 = vmatpush1.msra.mxu0 %v1378
        %1613 = vmatprep.subr.mxu0 0.0
        %1614 = vmatpush1.msra.mxu0 %v1383
        %1615 = vmatprep.subr.mxu0 0.0
        %1616 = vmatpush1.msra.mxu0 0.0
        %1617 = vmatprep.subr.mxu0 0.0
        %1618 = vmatpush1.msra.mxu0 0.0
        %1619 = vmatprep.subr.mxu0 0.0
        %1620 = vmatpush1.msra.mxu0 0.0
        %1621 = vmatprep.subr.mxu0 0.0
        %1622 = vmatpush1.msra.mxu0 0.0
        %1623 = vmatprep.subr.mxu0 0.0
        %1624 = vmatpush1.msra.mxu0 0.0
        %1625 = vmatprep.subr.mxu0 0.0
        %1626 = vmatpush1.msra.mxu0 0.0
        %1627 = vmatprep.subr.mxu0 0.0
        %1628 = vmatpush1.msra.mxu0 0.0
        %1629 = vmatprep.subr.mxu0 0.0
        %1630 = vmatpush1.msra.mxu0 0.0
        %1631 = vmatprep.subr.mxu0 0.0
        %1632 = vmatpush1.msra.mxu0 0.0
        %1633 = vmatprep.subr.mxu0 0.0
        %1634 = vmatpush1.msra.mxu0 0.0
        %1635 = vmatprep.subr.mxu0 0.0
        %1636 = vmatpush1.msra.mxu0 0.0
        %1637 = vmatprep.subr.mxu0 0.0
        %1638 = vmatpush1.msra.mxu0 0.0
        %1639 = vmatprep.subr.mxu0 0.0
        %1640 = vmatpush1.msra.mxu0 0.0
        %1641 = vmatprep.subr.mxu0 0.0
        %1642 = vmatpush1.msra.mxu0 0.0
        %1643 = vmatprep.subr.mxu0 0.0
        %1644 = vmatpush1.msra.mxu0 0.0
        %1645 = vmatprep.subr.mxu0 0.0
        %1646 = vmatpush1.msra.mxu0 0.0
        %1647 = vmatprep.subr.mxu0 0.0
        %1648 = vmatpush1.msra.mxu0 0.0
        %1649 = vmatprep.subr.mxu0 0.0
        %1650 = vmatpush1.msra.mxu0 0.0
        %1651 = vmatprep.subr.mxu0 0.0
        %1652 = vmatpush1.msra.mxu0 0.0
        %1653 = vmatprep.subr.mxu0 0.0
        %1654 = vmatpush1.msra.mxu0 0.0
        %1655 = vmatprep.subr.mxu0 0.0
        %1656 = vmatpush1.msra.mxu0 0.0
        %1657 = vmatprep.subr.mxu0 0.0
        %1658 = vmatpush1.msra.mxu0 0.0
        %1659 = vmatprep.subr.mxu0 0.0
        %1660 = vmatpush1.msra.mxu0 0.0
        %1661 = vmatprep.subr.mxu0 0.0
        %1662 = vmatpush1.msra.mxu0 0.0
        %1663 = vmatprep.subr.mxu0 0.0
        %1664 = vmatpush1.msra.mxu0 0.0
        %1665 = vmatprep.subr.mxu0 0.0
        %1666 = vmatpush1.msra.mxu0 0.0
        %1667 = vmatprep.subr.mxu0 0.0
        %1668 = vmatpush1.msra.mxu0 0.0
        %1669 = vmatprep.subr.mxu0 0.0
        %1670 = vmatpush1.msra.mxu0 0.0
        %1671 = vmatprep.subr.mxu0 0.0
        %1672 = vmatpush1.msra.mxu0 0.0
        %1673 = vmatprep.subr.mxu0 0.0
        %1674 = vmatpush1.msra.mxu0 0.0
        %1675 = vmatprep.mubr.f32.mxu0 0.0
        %1676 = vmatmul.mubr.f32.gmra.mrb[0].mxu0 %v850
        %v1677 = vpop.f32.mrb[0].mxu0
        %v1678 = vadd.f32 0.0, %v1677
        %v1679 = vpop.f32.mrb[0].mxu0
        %1680 = vmatprep.mubr.f32.mxu0 0.0
        %1681 = vmatmul.mubr.f32.gmra.mrb[0].mxu0 %v853
        %v1682 = vpop.f32.mrb[0].mxu0
        %v1683 = vadd.f32 0.0, %v1682
        %v1684 = vpop.f32.mrb[0].mxu0
        %1685 = vdwg.mxu0
        %v1686 = vmul.f32 %v1453, %v1453
        %v1687 = vmul.f32 %v1458, %v1458
        %v1688 = vmul.f32 %v1528, %v1528
        %v1689 = vmul.f32 %v1533, %v1533
        %v1690 = vmul.f32 %v1453, %v1528
        %v1691 = vmul.f32 %v1458, %v1533
        %v1692 = vadd.f32 %v1686, %v1688
        %v1693 = vadd.f32 %v1687, %v1689
        %v1694 = vmul.f32 %v1690, 2.0
        %v1695 = vmul.f32 %v1691, 2.0
        %v1696 = vadd.f32 %v1694, 0.0001
        %v1697 = vadd.f32 %v1695, 0.0001
        %v1698 = vadd.f32 %v1692, 0.0001
        %v1699 = vadd.f32 %v1693, 0.0001
        %v1700 = vrcp.pop %v1698
        %v1701 = vrcp.pop %v1699
        %v1702 = vmul.f32 %v1698, %v1700
        %v1703 = vmul.f32 %v1699, %v1701
        %v1704 = vsub.f32 2.0, %v1702
        %v1705 = vsub.f32 2.0, %v1703
        %v1706 = vmul.f32 %v1700, %v1704
        %v1707 = vmul.f32 %v1701, %v1705
        %v1708 = vmul.f32 %v1696, %v1706
        %v1709 = vmul.f32 %v1697, %v1707
        %v1710 = vsub.f32 %v1603, %v1690
        %v1711 = vsub.f32 %v1608, %v1691
        %v1712 = vmul.f32 %v1710, 2.0
        %v1713 = vmul.f32 %v1711, 2.0
        %v1714 = vadd.f32 %v1712, 0.0009
        %v1715 = vadd.f32 %v1713, 0.0009
        %v1716 = vsub.f32 %v1678, %v1692
        %v1717 = vsub.f32 %v1683, %v1693
        %v1718 = vadd.f32 %v1716, 0.0009
        %v1719 = vadd.f32 %v1717, 0.0009
        %v1720 = vrcp.pop %v1718
        %v1721 = vrcp.pop %v1719
        %v1722 = vmul.f32 %v1718, %v1720
        %v1723 = vmul.f32 %v1719, %v1721
        %v1724 = vsub.f32 2.0, %v1722
        %v1725 = vsub.f32 2.0, %v1723
        %v1726 = vmul.f32 %v1720, %v1724
        %v1727 = vmul.f32 %v1721, %v1725
        %v1728 = vmul.f32 %v1714, %v1726
        %v1729 = vmul.f32 %v1715, %v1727
        %v1730 = vmul.f32 %v1708, %v1728
        %v1731 = vmul.f32 %v1709, %v1729
        %v1732 = vmul.f32 %v1227, %v1730
        %v1733 = vmul.f32 %v1228, %v1731
        %s1734 = scalar_lea.vmem [#allocation7], 32
        %v1735 = vld [vmem:[%s1734] sm:$0xff]
        %v1736 = vld [vmem:[%s1734 + $0x8] sm:$0xff]
        %1739 = vrot.lane.b32.xlu0 %v1348, 112
        %v1740 = vpop.permute.xlu0 %1739
        %1741 = vrot.lane.b32.xlu0 %v1353, 112
        %v1742 = vpop.permute.xlu0 %1741
        %v1746 = vsel %vm350, %v1735, 0
        %v1749 = vsel %vm350, %v1736, 0
        %1751 = vmatprep.subr.mxu0 0.0
        %1752 = vmatpush1.msra.mxu0 %v1740
        %1753 = vmatprep.subr.mxu0 0.0
        %1754 = vmatpush1.msra.mxu0 %v1742
        %1755 = vmatprep.subr.mxu0 0.0
        %1756 = vmatpush1.msra.mxu0 0.0
        %1757 = vmatprep.subr.mxu0 0.0
        %1758 = vmatpush1.msra.mxu0 0.0
        %1759 = vmatprep.subr.mxu0 0.0
        %1760 = vmatpush1.msra.mxu0 0.0
        %1761 = vmatprep.subr.mxu0 0.0
        %1762 = vmatpush1.msra.mxu0 0.0
        %1763 = vmatprep.subr.mxu0 0.0
        %1764 = vmatpush1.msra.mxu0 0.0
        %1765 = vmatprep.subr.mxu0 0.0
        %1766 = vmatpush1.msra.mxu0 0.0
        %1767 = vmatprep.subr.mxu0 0.0
        %1768 = vmatpush1.msra.mxu0 0.0
        %1769 = vmatprep.subr.mxu0 0.0
        %1770 = vmatpush1.msra.mxu0 0.0
        %1771 = vmatprep.subr.mxu0 0.0
        %1772 = vmatpush1.msra.mxu0 0.0
        %1773 = vmatprep.subr.mxu0 0.0
        %1774 = vmatpush1.msra.mxu0 0.0
        %1775 = vmatprep.subr.mxu0 0.0
        %1776 = vmatpush1.msra.mxu0 0.0
        %1777 = vmatprep.subr.mxu0 0.0
        %1778 = vmatpush1.msra.mxu0 0.0
        %1779 = vmatprep.subr.mxu0 0.0
        %1780 = vmatpush1.msra.mxu0 0.0
        %1781 = vmatprep.subr.mxu0 0.0
        %1782 = vmatpush1.msra.mxu0 0.0
        %1783 = vmatprep.subr.mxu0 0.0
        %1784 = vmatpush1.msra.mxu0 0.0
        %1785 = vmatprep.subr.mxu0 0.0
        %1786 = vmatpush1.msra.mxu0 0.0
        %1787 = vmatprep.subr.mxu0 0.0
        %1788 = vmatpush1.msra.mxu0 0.0
        %1789 = vmatprep.subr.mxu0 0.0
        %1790 = vmatpush1.msra.mxu0 0.0
        %1791 = vmatprep.subr.mxu0 0.0
        %1792 = vmatpush1.msra.mxu0 0.0
        %1793 = vmatprep.subr.mxu0 0.0
        %1794 = vmatpush1.msra.mxu0 0.0
        %1795 = vmatprep.subr.mxu0 0.0
        %1796 = vmatpush1.msra.mxu0 0.0
        %1797 = vmatprep.subr.mxu0 0.0
        %1798 = vmatpush1.msra.mxu0 0.0
        %1799 = vmatprep.subr.mxu0 0.0
        %1800 = vmatpush1.msra.mxu0 0.0
        %1801 = vmatprep.subr.mxu0 0.0
        %1802 = vmatpush1.msra.mxu0 0.0
        %1803 = vmatprep.subr.mxu0 0.0
        %1804 = vmatpush1.msra.mxu0 0.0
        %1805 = vmatprep.subr.mxu0 0.0
        %1806 = vmatpush1.msra.mxu0 0.0
        %1807 = vmatprep.subr.mxu0 0.0
        %1808 = vmatpush1.msra.mxu0 0.0
        %1809 = vmatprep.subr.mxu0 0.0
        %1810 = vmatpush1.msra.mxu0 0.0
        %1811 = vmatprep.subr.mxu0 0.0
        %1812 = vmatpush1.msra.mxu0 0.0
        %1813 = vmatprep.subr.mxu0 0.0
        %1814 = vmatpush1.msra.mxu0 0.0
        %1815 = vmatprep.mubr.f32.mxu0 0.0
        %1816 = vmatmul.mubr.f32.gmra.mrb[0].mxu0 %v1746
        %v1817 = vpop.f32.mrb[0].mxu0
        %v1818 = vadd.f32 0.0, %v1817
        %v1819 = vpop.f32.mrb[0].mxu0
        %1820 = vmatprep.mubr.f32.mxu0 0.0
        %1821 = vmatmul.mubr.f32.gmra.mrb[0].mxu0 %v1749
        %v1822 = vpop.f32.mrb[0].mxu0
        %v1823 = vadd.f32 0.0, %v1822
        %v1824 = vpop.f32.mrb[0].mxu0
        %1825 = vdwg.mxu0
        %1828 = vrot.lane.b32.xlu0 %v1358, 112
        %v1829 = vpop.permute.xlu0 %1828
        %1830 = vrot.lane.b32.xlu0 %v1363, 112
        %v1831 = vpop.permute.xlu0 %1830
        %1834 = vmatprep.subr.mxu0 0.0
        %1835 = vmatpush1.msra.mxu0 %v1829
        %1836 = vmatprep.subr.mxu0 0.0
        %1837 = vmatpush1.msra.mxu0 %v1831
        %1838 = vmatprep.subr.mxu0 0.0
        %1839 = vmatpush1.msra.mxu0 0.0
        %1840 = vmatprep.subr.mxu0 0.0
        %1841 = vmatpush1.msra.mxu0 0.0
        %1842 = vmatprep.subr.mxu0 0.0
        %1843 = vmatpush1.msra.mxu0 0.0
        %1844 = vmatprep.subr.mxu0 0.0
        %1845 = vmatpush1.msra.mxu0 0.0
        %1846 = vmatprep.subr.mxu0 0.0
        %1847 = vmatpush1.msra.mxu0 0.0
        %1848 = vmatprep.subr.mxu0 0.0
        %1849 = vmatpush1.msra.mxu0 0.0
        %1850 = vmatprep.subr.mxu0 0.0
        %1851 = vmatpush1.msra.mxu0 0.0
        %1852 = vmatprep.subr.mxu0 0.0
        %1853 = vmatpush1.msra.mxu0 0.0
        %1854 = vmatprep.subr.mxu0 0.0
        %1855 = vmatpush1.msra.mxu0 0.0
        %1856 = vmatprep.subr.mxu0 0.0
        %1857 = vmatpush1.msra.mxu0 0.0
        %1858 = vmatprep.subr.mxu0 0.0
        %1859 = vmatpush1.msra.mxu0 0.0
        %1860 = vmatprep.subr.mxu0 0.0
        %1861 = vmatpush1.msra.mxu0 0.0
        %1862 = vmatprep.subr.mxu0 0.0
        %1863 = vmatpush1.msra.mxu0 0.0
        %1864 = vmatprep.subr.mxu0 0.0
        %1865 = vmatpush1.msra.mxu0 0.0
        %1866 = vmatprep.subr.mxu0 0.0
        %1867 = vmatpush1.msra.mxu0 0.0
        %1868 = vmatprep.subr.mxu0 0.0
        %1869 = vmatpush1.msra.mxu0 0.0
        %1870 = vmatprep.subr.mxu0 0.0
        %1871 = vmatpush1.msra.mxu0 0.0
        %1872 = vmatprep.subr.mxu0 0.0
        %1873 = vmatpush1.msra.mxu0 0.0
        %1874 = vmatprep.subr.mxu0 0.0
        %1875 = vmatpush1.msra.mxu0 0.0
        %1876 = vmatprep.subr.mxu0 0.0
        %1877 = vmatpush1.msra.mxu0 0.0
        %1878 = vmatprep.subr.mxu0 0.0
        %1879 = vmatpush1.msra.mxu0 0.0
        %1880 = vmatprep.subr.mxu0 0.0
        %1881 = vmatpush1.msra.mxu0 0.0
        %1882 = vmatprep.subr.mxu0 0.0
        %1883 = vmatpush1.msra.mxu0 0.0
        %1884 = vmatprep.subr.mxu0 0.0
        %1885 = vmatpush1.msra.mxu0 0.0
        %1886 = vmatprep.subr.mxu0 0.0
        %1887 = vmatpush1.msra.mxu0 0.0
        %1888 = vmatprep.subr.mxu0 0.0
        %1889 = vmatpush1.msra.mxu0 0.0
        %1890 = vmatprep.subr.mxu0 0.0
        %1891 = vmatpush1.msra.mxu0 0.0
        %1892 = vmatprep.subr.mxu0 0.0
        %1893 = vmatpush1.msra.mxu0 0.0
        %1894 = vmatprep.subr.mxu0 0.0
        %1895 = vmatpush1.msra.mxu0 0.0
        %1896 = vmatprep.subr.mxu0 0.0
        %1897 = vmatpush1.msra.mxu0 0.0
        %1898 = vmatprep.mubr.f32.mxu0 0.0
        %1899 = vmatmul.mubr.f32.gmra.mrb[0].mxu0 %v1746
        %v1900 = vpop.f32.mrb[0].mxu0
        %v1901 = vadd.f32 0.0, %v1900
        %v1902 = vpop.f32.mrb[0].mxu0
        %1903 = vmatprep.mubr.f32.mxu0 0.0
        %1904 = vmatmul.mubr.f32.gmra.mrb[0].mxu0 %v1749
        %v1905 = vpop.f32.mrb[0].mxu0
        %v1906 = vadd.f32 0.0, %v1905
        %v1907 = vpop.f32.mrb[0].mxu0
        %1908 = vdwg.mxu0
        %1911 = vrot.lane.b32.xlu0 %v1368, 112
        %v1912 = vpop.permute.xlu0 %1911
        %1913 = vrot.lane.b32.xlu0 %v1373, 112
        %v1914 = vpop.permute.xlu0 %1913
        %1917 = vmatprep.subr.mxu0 0.0
        %1918 = vmatpush1.msra.mxu0 %v1912
        %1919 = vmatprep.subr.mxu0 0.0
        %1920 = vmatpush1.msra.mxu0 %v1914
        %1921 = vmatprep.subr.mxu0 0.0
        %1922 = vmatpush1.msra.mxu0 0.0
        %1923 = vmatprep.subr.mxu0 0.0
        %1924 = vmatpush1.msra.mxu0 0.0
        %1925 = vmatprep.subr.mxu0 0.0
        %1926 = vmatpush1.msra.mxu0 0.0
        %1927 = vmatprep.subr.mxu0 0.0
        %1928 = vmatpush1.msra.mxu0 0.0
        %1929 = vmatprep.subr.mxu0 0.0
        %1930 = vmatpush1.msra.mxu0 0.0
        %1931 = vmatprep.subr.mxu0 0.0
        %1932 = vmatpush1.msra.mxu0 0.0
        %1933 = vmatprep.subr.mxu0 0.0
        %1934 = vmatpush1.msra.mxu0 0.0
        %1935 = vmatprep.subr.mxu0 0.0
        %1936 = vmatpush1.msra.mxu0 0.0
        %1937 = vmatprep.subr.mxu0 0.0
        %1938 = vmatpush1.msra.mxu0 0.0
        %1939 = vmatprep.subr.mxu0 0.0
        %1940 = vmatpush1.msra.mxu0 0.0
        %1941 = vmatprep.subr.mxu0 0.0
        %1942 = vmatpush1.msra.mxu0 0.0
        %1943 = vmatprep.subr.mxu0 0.0
        %1944 = vmatpush1.msra.mxu0 0.0
        %1945 = vmatprep.subr.mxu0 0.0
        %1946 = vmatpush1.msra.mxu0 0.0
        %1947 = vmatprep.subr.mxu0 0.0
        %1948 = vmatpush1.msra.mxu0 0.0
        %1949 = vmatprep.subr.mxu0 0.0
        %1950 = vmatpush1.msra.mxu0 0.0
        %1951 = vmatprep.subr.mxu0 0.0
        %1952 = vmatpush1.msra.mxu0 0.0
        %1953 = vmatprep.subr.mxu0 0.0
        %1954 = vmatpush1.msra.mxu0 0.0
        %1955 = vmatprep.subr.mxu0 0.0
        %1956 = vmatpush1.msra.mxu0 0.0
        %1957 = vmatprep.subr.mxu0 0.0
        %1958 = vmatpush1.msra.mxu0 0.0
        %1959 = vmatprep.subr.mxu0 0.0
        %1960 = vmatpush1.msra.mxu0 0.0
        %1961 = vmatprep.subr.mxu0 0.0
        %1962 = vmatpush1.msra.mxu0 0.0
        %1963 = vmatprep.subr.mxu0 0.0
        %1964 = vmatpush1.msra.mxu0 0.0
        %1965 = vmatprep.subr.mxu0 0.0
        %1966 = vmatpush1.msra.mxu0 0.0
        %1967 = vmatprep.subr.mxu0 0.0
        %1968 = vmatpush1.msra.mxu0 0.0
        %1969 = vmatprep.subr.mxu0 0.0
        %1970 = vmatpush1.msra.mxu0 0.0
        %1971 = vmatprep.subr.mxu0 0.0
        %1972 = vmatpush1.msra.mxu0 0.0
        %1973 = vmatprep.subr.mxu0 0.0
        %1974 = vmatpush1.msra.mxu0 0.0
        %1975 = vmatprep.subr.mxu0 0.0
        %1976 = vmatpush1.msra.mxu0 0.0
        %1977 = vmatprep.subr.mxu0 0.0
        %1978 = vmatpush1.msra.mxu0 0.0
        %1979 = vmatprep.subr.mxu0 0.0
        %1980 = vmatpush1.msra.mxu0 0.0
        %1981 = vmatprep.mubr.f32.mxu0 0.0
        %1982 = vmatmul.mubr.f32.gmra.mrb[0].mxu0 %v1746
        %v1983 = vpop.f32.mrb[0].mxu0
        %v1984 = vadd.f32 0.0, %v1983
        %v1985 = vpop.f32.mrb[0].mxu0
        %1986 = vmatprep.mubr.f32.mxu0 0.0
        %1987 = vmatmul.mubr.f32.gmra.mrb[0].mxu0 %v1749
        %v1988 = vpop.f32.mrb[0].mxu0
        %v1989 = vadd.f32 0.0, %v1988
        %v1990 = vpop.f32.mrb[0].mxu0
        %1991 = vdwg.mxu0
        %1994 = vrot.lane.b32.xlu0 %v1378, 112
        %v1995 = vpop.permute.xlu0 %1994
        %1996 = vrot.lane.b32.xlu0 %v1383, 112
        %v1997 = vpop.permute.xlu0 %1996
        %2000 = vmatprep.subr.mxu0 0.0
        %2001 = vmatpush1.msra.mxu0 %v1995
        %2002 = vmatprep.subr.mxu0 0.0
        %2003 = vmatpush1.msra.mxu0 %v1997
        %2004 = vmatprep.subr.mxu0 0.0
        %2005 = vmatpush1.msra.mxu0 0.0
        %2006 = vmatprep.subr.mxu0 0.0
        %2007 = vmatpush1.msra.mxu0 0.0
        %2008 = vmatprep.subr.mxu0 0.0
        %2009 = vmatpush1.msra.mxu0 0.0
        %2010 = vmatprep.subr.mxu0 0.0
        %2011 = vmatpush1.msra.mxu0 0.0
        %2012 = vmatprep.subr.mxu0 0.0
        %2013 = vmatpush1.msra.mxu0 0.0
        %2014 = vmatprep.subr.mxu0 0.0
        %2015 = vmatpush1.msra.mxu0 0.0
        %2016 = vmatprep.subr.mxu0 0.0
        %2017 = vmatpush1.msra.mxu0 0.0
        %2018 = vmatprep.subr.mxu0 0.0
        %2019 = vmatpush1.msra.mxu0 0.0
        %2020 = vmatprep.subr.mxu0 0.0
        %2021 = vmatpush1.msra.mxu0 0.0
        %2022 = vmatprep.subr.mxu0 0.0
        %2023 = vmatpush1.msra.mxu0 0.0
        %2024 = vmatprep.subr.mxu0 0.0
        %2025 = vmatpush1.msra.mxu0 0.0
        %2026 = vmatprep.subr.mxu0 0.0
        %2027 = vmatpush1.msra.mxu0 0.0
        %2028 = vmatprep.subr.mxu0 0.0
        %2029 = vmatpush1.msra.mxu0 0.0
        %2030 = vmatprep.subr.mxu0 0.0
        %2031 = vmatpush1.msra.mxu0 0.0
        %2032 = vmatprep.subr.mxu0 0.0
        %2033 = vmatpush1.msra.mxu0 0.0
        %2034 = vmatprep.subr.mxu0 0.0
        %2035 = vmatpush1.msra.mxu0 0.0
        %2036 = vmatprep.subr.mxu0 0.0
        %2037 = vmatpush1.msra.mxu0 0.0
        %2038 = vmatprep.subr.mxu0 0.0
        %2039 = vmatpush1.msra.mxu0 0.0
        %2040 = vmatprep.subr.mxu0 0.0
        %2041 = vmatpush1.msra.mxu0 0.0
        %2042 = vmatprep.subr.mxu0 0.0
        %2043 = vmatpush1.msra.mxu0 0.0
        %2044 = vmatprep.subr.mxu0 0.0
        %2045 = vmatpush1.msra.mxu0 0.0
        %2046 = vmatprep.subr.mxu0 0.0
        %2047 = vmatpush1.msra.mxu0 0.0
        %2048 = vmatprep.subr.mxu0 0.0
        %2049 = vmatpush1.msra.mxu0 0.0
        %2050 = vmatprep.subr.mxu0 0.0
        %2051 = vmatpush1.msra.mxu0 0.0
        %2052 = vmatprep.subr.mxu0 0.0
        %2053 = vmatpush1.msra.mxu0 0.0
        %2054 = vmatprep.subr.mxu0 0.0
        %2055 = vmatpush1.msra.mxu0 0.0
        %2056 = vmatprep.subr.mxu0 0.0
        %2057 = vmatpush1.msra.mxu0 0.0
        %2058 = vmatprep.subr.mxu0 0.0
        %2059 = vmatpush1.msra.mxu0 0.0
        %2060 = vmatprep.subr.mxu0 0.0
        %2061 = vmatpush1.msra.mxu0 0.0
        %2062 = vmatprep.subr.mxu0 0.0
        %2063 = vmatpush1.msra.mxu0 0.0
        %2064 = vmatprep.mubr.f32.mxu0 0.0
        %2065 = vmatmul.mubr.f32.gmra.mrb[0].mxu0 %v1746
        %v2066 = vpop.f32.mrb[0].mxu0
        %v2067 = vadd.f32 0.0, %v2066
        %v2068 = vpop.f32.mrb[0].mxu0
        %2069 = vmatprep.mubr.f32.mxu0 0.0
        %2070 = vmatmul.mubr.f32.gmra.mrb[0].mxu0 %v1749
        %v2071 = vpop.f32.mrb[0].mxu0
        %v2072 = vadd.f32 0.0, %v2071
        %v2073 = vpop.f32.mrb[0].mxu0
        %2074 = vdwg.mxu0
        %v2075 = vmul.f32 %v1818, %v1818
        %v2076 = vmul.f32 %v1823, %v1823
        %v2077 = vmul.f32 %v1901, %v1901
        %v2078 = vmul.f32 %v1906, %v1906
        %v2079 = vmul.f32 %v1818, %v1901
        %v2080 = vmul.f32 %v1823, %v1906
        %v2081 = vadd.f32 %v2075, %v2077
        %v2082 = vadd.f32 %v2076, %v2078
        %v2083 = vmul.f32 %v2079, 2.0
        %v2084 = vmul.f32 %v2080, 2.0
        %v2085 = vadd.f32 %v2083, 0.0001
        %v2086 = vadd.f32 %v2084, 0.0001
        %v2087 = vadd.f32 %v2081, 0.0001
        %v2088 = vadd.f32 %v2082, 0.0001
        %v2089 = vrcp.pop %v2087
        %v2090 = vrcp.pop %v2088
        %v2091 = vmul.f32 %v2087, %v2089
        %v2092 = vmul.f32 %v2088, %v2090
        %v2093 = vsub.f32 2.0, %v2091
        %v2094 = vsub.f32 2.0, %v2092
        %v2095 = vmul.f32 %v2089, %v2093
        %v2096 = vmul.f32 %v2090, %v2094
        %v2097 = vmul.f32 %v2085, %v2095
        %v2098 = vmul.f32 %v2086, %v2096
        %v2099 = vsub.f32 %v1984, %v2079
        %v2100 = vsub.f32 %v1989, %v2080
        %v2101 = vmul.f32 %v2099, 2.0
        %v2102 = vmul.f32 %v2100, 2.0
        %v2103 = vadd.f32 %v2101, 0.0009
        %v2104 = vadd.f32 %v2102, 0.0009
        %v2105 = vsub.f32 %v2067, %v2081
        %v2106 = vsub.f32 %v2072, %v2082
        %v2107 = vadd.f32 %v2105, 0.0009
        %v2108 = vadd.f32 %v2106, 0.0009
        %v2109 = vrcp.pop %v2107
        %v2110 = vrcp.pop %v2108
        %v2111 = vmul.f32 %v2107, %v2109
        %v2112 = vmul.f32 %v2108, %v2110
        %v2113 = vsub.f32 2.0, %v2111
        %v2114 = vsub.f32 2.0, %v2112
        %v2115 = vmul.f32 %v2109, %v2113
        %v2116 = vmul.f32 %v2110, %v2114
        %v2117 = vmul.f32 %v2103, %v2115
        %v2118 = vmul.f32 %v2104, %v2116
        %v2119 = vmul.f32 %v2097, %v2117
        %v2120 = vmul.f32 %v2098, %v2118
        %v2121 = vmul.f32 %v2119, %v2119
        %v2122 = vmul.f32 %v2120, %v2120
        %v2123 = vmul.f32 %v2121, %v2119
        %v2124 = vmul.f32 %v2122, %v2120
        %v2125 = vmul.f32 %v1732, %v2123
        %v2126 = vmul.f32 %v1733, %v2124
        %s2127 = scalar_lea.vmem [#allocation7], 48
        %v2128 = vld [vmem:[%s2127] sm:$0xff]
        %v2129 = vld [vmem:[%s2127 + $0x8] sm:$0xff]
        %2130 = vrot.lane.b32.xlu0 %v1348, 96
        %v2131 = vpop.permute.xlu0 %2130
        %2132 = vrot.lane.b32.xlu0 %v1353, 96
        %v2133 = vpop.permute.xlu0 %2132
        %v2137 = vsel %vm350, %v2128, 0
        %v2140 = vsel %vm350, %v2129, 0
        %2142 = vmatprep.subr.mxu0 0.0
        %2143 = vmatpush1.msra.mxu0 %v2131
        %2144 = vmatprep.subr.mxu0 0.0
        %2145 = vmatpush1.msra.mxu0 %v2133
        %2146 = vmatprep.subr.mxu0 0.0
        %2147 = vmatpush1.msra.mxu0 0.0
        %2148 = vmatprep.subr.mxu0 0.0
        %2149 = vmatpush1.msra.mxu0 0.0
        %2150 = vmatprep.subr.mxu0 0.0
        %2151 = vmatpush1.msra.mxu0 0.0
        %2152 = vmatprep.subr.mxu0 0.0
        %2153 = vmatpush1.msra.mxu0 0.0
        %2154 = vmatprep.subr.mxu0 0.0
        %2155 = vmatpush1.msra.mxu0 0.0
        %2156 = vmatprep.subr.mxu0 0.0
        %2157 = vmatpush1.msra.mxu0 0.0
        %2158 = vmatprep.subr.mxu0 0.0
        %2159 = vmatpush1.msra.mxu0 0.0
        %2160 = vmatprep.subr.mxu0 0.0
        %2161 = vmatpush1.msra.mxu0 0.0
        %2162 = vmatprep.subr.mxu0 0.0
        %2163 = vmatpush1.msra.mxu0 0.0
        %2164 = vmatprep.subr.mxu0 0.0
        %2165 = vmatpush1.msra.mxu0 0.0
        %2166 = vmatprep.subr.mxu0 0.0
        %2167 = vmatpush1.msra.mxu0 0.0
        %2168 = vmatprep.subr.mxu0 0.0
        %2169 = vmatpush1.msra.mxu0 0.0
        %2170 = vmatprep.subr.mxu0 0.0
        %2171 = vmatpush1.msra.mxu0 0.0
        %2172 = vmatprep.subr.mxu0 0.0
        %2173 = vmatpush1.msra.mxu0 0.0
        %2174 = vmatprep.subr.mxu0 0.0
        %2175 = vmatpush1.msra.mxu0 0.0
        %2176 = vmatprep.subr.mxu0 0.0
        %2177 = vmatpush1.msra.mxu0 0.0
        %2178 = vmatprep.subr.mxu0 0.0
        %2179 = vmatpush1.msra.mxu0 0.0
        %2180 = vmatprep.subr.mxu0 0.0
        %2181 = vmatpush1.msra.mxu0 0.0
        %2182 = vmatprep.subr.mxu0 0.0
        %2183 = vmatpush1.msra.mxu0 0.0
        %2184 = vmatprep.subr.mxu0 0.0
        %2185 = vmatpush1.msra.mxu0 0.0
        %2186 = vmatprep.subr.mxu0 0.0
        %2187 = vmatpush1.msra.mxu0 0.0
        %2188 = vmatprep.subr.mxu0 0.0
        %2189 = vmatpush1.msra.mxu0 0.0
        %2190 = vmatprep.subr.mxu0 0.0
        %2191 = vmatpush1.msra.mxu0 0.0
        %2192 = vmatprep.subr.mxu0 0.0
        %2193 = vmatpush1.msra.mxu0 0.0
        %2194 = vmatprep.subr.mxu0 0.0
        %2195 = vmatpush1.msra.mxu0 0.0
        %2196 = vmatprep.subr.mxu0 0.0
        %2197 = vmatpush1.msra.mxu0 0.0
        %2198 = vmatprep.subr.mxu0 0.0
        %2199 = vmatpush1.msra.mxu0 0.0
        %2200 = vmatprep.subr.mxu0 0.0
        %2201 = vmatpush1.msra.mxu0 0.0
        %2202 = vmatprep.subr.mxu0 0.0
        %2203 = vmatpush1.msra.mxu0 0.0
        %2204 = vmatprep.subr.mxu0 0.0
        %2205 = vmatpush1.msra.mxu0 0.0
        %2206 = vmatprep.mubr.f32.mxu0 0.0
        %2207 = vmatmul.mubr.f32.gmra.mrb[0].mxu0 %v2137
        %v2208 = vpop.f32.mrb[0].mxu0
        %v2209 = vadd.f32 0.0, %v2208
        %v2210 = vpop.f32.mrb[0].mxu0
        %2211 = vmatprep.mubr.f32.mxu0 0.0
        %2212 = vmatmul.mubr.f32.gmra.mrb[0].mxu0 %v2140
        %v2213 = vpop.f32.mrb[0].mxu0
        %v2214 = vadd.f32 0.0, %v2213
        %v2215 = vpop.f32.mrb[0].mxu0
        %2216 = vdwg.mxu0
        %2217 = vrot.lane.b32.xlu0 %v1358, 96
        %v2218 = vpop.permute.xlu0 %2217
        %2219 = vrot.lane.b32.xlu0 %v1363, 96
        %v2220 = vpop.permute.xlu0 %2219
        %2223 = vmatprep.subr.mxu0 0.0
        %2224 = vmatpush1.msra.mxu0 %v2218
        %2225 = vmatprep.subr.mxu0 0.0
        %2226 = vmatpush1.msra.mxu0 %v2220
        %2227 = vmatprep.subr.mxu0 0.0
        %2228 = vmatpush1.msra.mxu0 0.0
        %2229 = vmatprep.subr.mxu0 0.0
        %2230 = vmatpush1.msra.mxu0 0.0
        %2231 = vmatprep.subr.mxu0 0.0
        %2232 = vmatpush1.msra.mxu0 0.0
        %2233 = vmatprep.subr.mxu0 0.0
        %2234 = vmatpush1.msra.mxu0 0.0
        %2235 = vmatprep.subr.mxu0 0.0
        %2236 = vmatpush1.msra.mxu0 0.0
        %2237 = vmatprep.subr.mxu0 0.0
        %2238 = vmatpush1.msra.mxu0 0.0
        %2239 = vmatprep.subr.mxu0 0.0
        %2240 = vmatpush1.msra.mxu0 0.0
        %2241 = vmatprep.subr.mxu0 0.0
        %2242 = vmatpush1.msra.mxu0 0.0
        %2243 = vmatprep.subr.mxu0 0.0
        %2244 = vmatpush1.msra.mxu0 0.0
        %2245 = vmatprep.subr.mxu0 0.0
        %2246 = vmatpush1.msra.mxu0 0.0
        %2247 = vmatprep.subr.mxu0 0.0
        %2248 = vmatpush1.msra.mxu0 0.0
        %2249 = vmatprep.subr.mxu0 0.0
        %2250 = vmatpush1.msra.mxu0 0.0
        %2251 = vmatprep.subr.mxu0 0.0
        %2252 = vmatpush1.msra.mxu0 0.0
        %2253 = vmatprep.subr.mxu0 0.0
        %2254 = vmatpush1.msra.mxu0 0.0
        %2255 = vmatprep.subr.mxu0 0.0
        %2256 = vmatpush1.msra.mxu0 0.0
        %2257 = vmatprep.subr.mxu0 0.0
        %2258 = vmatpush1.msra.mxu0 0.0
        %2259 = vmatprep.subr.mxu0 0.0
        %2260 = vmatpush1.msra.mxu0 0.0
        %2261 = vmatprep.subr.mxu0 0.0
        %2262 = vmatpush1.msra.mxu0 0.0
        %2263 = vmatprep.subr.mxu0 0.0
        %2264 = vmatpush1.msra.mxu0 0.0
        %2265 = vmatprep.subr.mxu0 0.0
        %2266 = vmatpush1.msra.mxu0 0.0
        %2267 = vmatprep.subr.mxu0 0.0
        %2268 = vmatpush1.msra.mxu0 0.0
        %2269 = vmatprep.subr.mxu0 0.0
        %2270 = vmatpush1.msra.mxu0 0.0
        %2271 = vmatprep.subr.mxu0 0.0
        %2272 = vmatpush1.msra.mxu0 0.0
        %2273 = vmatprep.subr.mxu0 0.0
        %2274 = vmatpush1.msra.mxu0 0.0
        %2275 = vmatprep.subr.mxu0 0.0
        %2276 = vmatpush1.msra.mxu0 0.0
        %2277 = vmatprep.subr.mxu0 0.0
        %2278 = vmatpush1.msra.mxu0 0.0
        %2279 = vmatprep.subr.mxu0 0.0
        %2280 = vmatpush1.msra.mxu0 0.0
        %2281 = vmatprep.subr.mxu0 0.0
        %2282 = vmatpush1.msra.mxu0 0.0
        %2283 = vmatprep.subr.mxu0 0.0
        %2284 = vmatpush1.msra.mxu0 0.0
        %2285 = vmatprep.subr.mxu0 0.0
        %2286 = vmatpush1.msra.mxu0 0.0
        %2287 = vmatprep.mubr.f32.mxu0 0.0
        %2288 = vmatmul.mubr.f32.gmra.mrb[0].mxu0 %v2137
        %v2289 = vpop.f32.mrb[0].mxu0
        %v2290 = vadd.f32 0.0, %v2289
        %v2291 = vpop.f32.mrb[0].mxu0
        %2292 = vmatprep.mubr.f32.mxu0 0.0
        %2293 = vmatmul.mubr.f32.gmra.mrb[0].mxu0 %v2140
        %v2294 = vpop.f32.mrb[0].mxu0
        %v2295 = vadd.f32 0.0, %v2294
        %v2296 = vpop.f32.mrb[0].mxu0
        %2297 = vdwg.mxu0
        %2298 = vrot.lane.b32.xlu0 %v1368, 96
        %v2299 = vpop.permute.xlu0 %2298
        %2300 = vrot.lane.b32.xlu0 %v1373, 96
        %v2301 = vpop.permute.xlu0 %2300
        %2304 = vmatprep.subr.mxu0 0.0
        %2305 = vmatpush1.msra.mxu0 %v2299
        %2306 = vmatprep.subr.mxu0 0.0
        %2307 = vmatpush1.msra.mxu0 %v2301
        %2308 = vmatprep.subr.mxu0 0.0
        %2309 = vmatpush1.msra.mxu0 0.0
        %2310 = vmatprep.subr.mxu0 0.0
        %2311 = vmatpush1.msra.mxu0 0.0
        %2312 = vmatprep.subr.mxu0 0.0
        %2313 = vmatpush1.msra.mxu0 0.0
        %2314 = vmatprep.subr.mxu0 0.0
        %2315 = vmatpush1.msra.mxu0 0.0
        %2316 = vmatprep.subr.mxu0 0.0
        %2317 = vmatpush1.msra.mxu0 0.0
        %2318 = vmatprep.subr.mxu0 0.0
        %2319 = vmatpush1.msra.mxu0 0.0
        %2320 = vmatprep.subr.mxu0 0.0
        %2321 = vmatpush1.msra.mxu0 0.0
        %2322 = vmatprep.subr.mxu0 0.0
        %2323 = vmatpush1.msra.mxu0 0.0
        %2324 = vmatprep.subr.mxu0 0.0
        %2325 = vmatpush1.msra.mxu0 0.0
        %2326 = vmatprep.subr.mxu0 0.0
        %2327 = vmatpush1.msra.mxu0 0.0
        %2328 = vmatprep.subr.mxu0 0.0
        %2329 = vmatpush1.msra.mxu0 0.0
        %2330 = vmatprep.subr.mxu0 0.0
        %2331 = vmatpush1.msra.mxu0 0.0
        %2332 = vmatprep.subr.mxu0 0.0
        %2333 = vmatpush1.msra.mxu0 0.0
        %2334 = vmatprep.subr.mxu0 0.0
        %2335 = vmatpush1.msra.mxu0 0.0
        %2336 = vmatprep.subr.mxu0 0.0
        %2337 = vmatpush1.msra.mxu0 0.0
        %2338 = vmatprep.subr.mxu0 0.0
        %2339 = vmatpush1.msra.mxu0 0.0
        %2340 = vmatprep.subr.mxu0 0.0
        %2341 = vmatpush1.msra.mxu0 0.0
        %2342 = vmatprep.subr.mxu0 0.0
        %2343 = vmatpush1.msra.mxu0 0.0
        %2344 = vmatprep.subr.mxu0 0.0
        %2345 = vmatpush1.msra.mxu0 0.0
        %2346 = vmatprep.subr.mxu0 0.0
        %2347 = vmatpush1.msra.mxu0 0.0
        %2348 = vmatprep.subr.mxu0 0.0
        %2349 = vmatpush1.msra.mxu0 0.0
        %2350 = vmatprep.subr.mxu0 0.0
        %2351 = vmatpush1.msra.mxu0 0.0
        %2352 = vmatprep.subr.mxu0 0.0
        %2353 = vmatpush1.msra.mxu0 0.0
        %2354 = vmatprep.subr.mxu0 0.0
        %2355 = vmatpush1.msra.mxu0 0.0
        %2356 = vmatprep.subr.mxu0 0.0
        %2357 = vmatpush1.msra.mxu0 0.0
        %2358 = vmatprep.subr.mxu0 0.0
        %2359 = vmatpush1.msra.mxu0 0.0
        %2360 = vmatprep.subr.mxu0 0.0
        %2361 = vmatpush1.msra.mxu0 0.0
        %2362 = vmatprep.subr.mxu0 0.0
        %2363 = vmatpush1.msra.mxu0 0.0
        %2364 = vmatprep.subr.mxu0 0.0
        %2365 = vmatpush1.msra.mxu0 0.0
        %2366 = vmatprep.subr.mxu0 0.0
        %2367 = vmatpush1.msra.mxu0 0.0
        %2368 = vmatprep.mubr.f32.mxu0 0.0
        %2369 = vmatmul.mubr.f32.gmra.mrb[0].mxu0 %v2137
        %v2370 = vpop.f32.mrb[0].mxu0
        %v2371 = vadd.f32 0.0, %v2370
        %v2372 = vpop.f32.mrb[0].mxu0
        %2373 = vmatprep.mubr.f32.mxu0 0.0
        %2374 = vmatmul.mubr.f32.gmra.mrb[0].mxu0 %v2140
        %v2375 = vpop.f32.mrb[0].mxu0
        %v2376 = vadd.f32 0.0, %v2375
        %v2377 = vpop.f32.mrb[0].mxu0
        %2378 = vdwg.mxu0
        %2379 = vrot.lane.b32.xlu0 %v1378, 96
        %v2380 = vpop.permute.xlu0 %2379
        %2381 = vrot.lane.b32.xlu0 %v1383, 96
        %v2382 = vpop.permute.xlu0 %2381
        %2385 = vmatprep.subr.mxu0 0.0
        %2386 = vmatpush1.msra.mxu0 %v2380
        %2387 = vmatprep.subr.mxu0 0.0
        %2388 = vmatpush1.msra.mxu0 %v2382
        %2389 = vmatprep.subr.mxu0 0.0
        %2390 = vmatpush1.msra.mxu0 0.0
        %2391 = vmatprep.subr.mxu0 0.0
        %2392 = vmatpush1.msra.mxu0 0.0
        %2393 = vmatprep.subr.mxu0 0.0
        %2394 = vmatpush1.msra.mxu0 0.0
        %2395 = vmatprep.subr.mxu0 0.0
        %2396 = vmatpush1.msra.mxu0 0.0
        %2397 = vmatprep.subr.mxu0 0.0
        %2398 = vmatpush1.msra.mxu0 0.0
        %2399 = vmatprep.subr.mxu0 0.0
        %2400 = vmatpush1.msra.mxu0 0.0
        %2401 = vmatprep.subr.mxu0 0.0
        %2402 = vmatpush1.msra.mxu0 0.0
        %2403 = vmatprep.subr.mxu0 0.0
        %2404 = vmatpush1.msra.mxu0 0.0
        %2405 = vmatprep.subr.mxu0 0.0
        %2406 = vmatpush1.msra.mxu0 0.0
        %2407 = vmatprep.subr.mxu0 0.0
        %2408 = vmatpush1.msra.mxu0 0.0
        %2409 = vmatprep.subr.mxu0 0.0
        %2410 = vmatpush1.msra.mxu0 0.0
        %2411 = vmatprep.subr.mxu0 0.0
        %2412 = vmatpush1.msra.mxu0 0.0
        %2413 = vmatprep.subr.mxu0 0.0
        %2414 = vmatpush1.msra.mxu0 0.0
        %2415 = vmatprep.subr.mxu0 0.0
        %2416 = vmatpush1.msra.mxu0 0.0
        %2417 = vmatprep.subr.mxu0 0.0
        %2418 = vmatpush1.msra.mxu0 0.0
        %2419 = vmatprep.subr.mxu0 0.0
        %2420 = vmatpush1.msra.mxu0 0.0
        %2421 = vmatprep.subr.mxu0 0.0
        %2422 = vmatpush1.msra.mxu0 0.0
        %2423 = vmatprep.subr.mxu0 0.0
        %2424 = vmatpush1.msra.mxu0 0.0
        %2425 = vmatprep.subr.mxu0 0.0
        %2426 = vmatpush1.msra.mxu0 0.0
        %2427 = vmatprep.subr.mxu0 0.0
        %2428 = vmatpush1.msra.mxu0 0.0
        %2429 = vmatprep.subr.mxu0 0.0
        %2430 = vmatpush1.msra.mxu0 0.0
        %2431 = vmatprep.subr.mxu0 0.0
        %2432 = vmatpush1.msra.mxu0 0.0
        %2433 = vmatprep.subr.mxu0 0.0
        %2434 = vmatpush1.msra.mxu0 0.0
        %2435 = vmatprep.subr.mxu0 0.0
        %2436 = vmatpush1.msra.mxu0 0.0
        %2437 = vmatprep.subr.mxu0 0.0
        %2438 = vmatpush1.msra.mxu0 0.0
        %2439 = vmatprep.subr.mxu0 0.0
        %2440 = vmatpush1.msra.mxu0 0.0
        %2441 = vmatprep.subr.mxu0 0.0
        %2442 = vmatpush1.msra.mxu0 0.0
        %2443 = vmatprep.subr.mxu0 0.0
        %2444 = vmatpush1.msra.mxu0 0.0
        %2445 = vmatprep.subr.mxu0 0.0
        %2446 = vmatpush1.msra.mxu0 0.0
        %2447 = vmatprep.subr.mxu0 0.0
        %2448 = vmatpush1.msra.mxu0 0.0
        %2449 = vmatprep.mubr.f32.mxu0 0.0
        %2450 = vmatmul.mubr.f32.gmra.mrb[0].mxu0 %v2137
        %v2451 = vpop.f32.mrb[0].mxu0
        %v2452 = vadd.f32 0.0, %v2451
        %v2453 = vpop.f32.mrb[0].mxu0
        %2454 = vmatprep.mubr.f32.mxu0 0.0
        %2455 = vmatmul.mubr.f32.gmra.mrb[0].mxu0 %v2140
        %v2456 = vpop.f32.mrb[0].mxu0
        %v2457 = vadd.f32 0.0, %v2456
        %v2458 = vpop.f32.mrb[0].mxu0
        %2459 = vdwg.mxu0
        %v2460 = vmul.f32 %v2209, %v2209
        %v2461 = vmul.f32 %v2214, %v2214
        %v2462 = vmul.f32 %v2290, %v2290
        %v2463 = vmul.f32 %v2295, %v2295
        %v2464 = vmul.f32 %v2209, %v2290
        %v2465 = vmul.f32 %v2214, %v2295
        %v2466 = vadd.f32 %v2460, %v2462
        %v2467 = vadd.f32 %v2461, %v2463
        %v2468 = vmul.f32 %v2464, 2.0
        %v2469 = vmul.f32 %v2465, 2.0
        %v2470 = vadd.f32 %v2468, 0.0001
        %v2471 = vadd.f32 %v2469, 0.0001
        %v2472 = vadd.f32 %v2466, 0.0001
        %v2473 = vadd.f32 %v2467, 0.0001
        %v2474 = vrcp.pop %v2472
        %v2475 = vrcp.pop %v2473
        %v2476 = vmul.f32 %v2472, %v2474
        %v2477 = vmul.f32 %v2473, %v2475
        %v2478 = vsub.f32 2.0, %v2476
        %v2479 = vsub.f32 2.0, %v2477
        %v2480 = vmul.f32 %v2474, %v2478
        %v2481 = vmul.f32 %v2475, %v2479
        %v2482 = vmul.f32 %v2470, %v2480
        %v2483 = vmul.f32 %v2471, %v2481
        %v2484 = vsub.f32 %v2371, %v2464
        %v2485 = vsub.f32 %v2376, %v2465
        %v2486 = vmul.f32 %v2484, 2.0
        %v2487 = vmul.f32 %v2485, 2.0
        %v2488 = vadd.f32 %v2486, 0.0009
        %v2489 = vadd.f32 %v2487, 0.0009
        %v2490 = vsub.f32 %v2452, %v2466
        %v2491 = vsub.f32 %v2457, %v2467
        %v2492 = vadd.f32 %v2490, 0.0009
        %v2493 = vadd.f32 %v2491, 0.0009
        %v2494 = vrcp.pop %v2492
        %v2495 = vrcp.pop %v2493
        %v2496 = vmul.f32 %v2492, %v2494
        %v2497 = vmul.f32 %v2493, %v2495
        %v2498 = vsub.f32 2.0, %v2496
        %v2499 = vsub.f32 2.0, %v2497
        %v2500 = vmul.f32 %v2494, %v2498
        %v2501 = vmul.f32 %v2495, %v2499
        %v2502 = vmul.f32 %v2488, %v2500
        %v2503 = vmul.f32 %v2489, %v2501
        %v2504 = vmul.f32 %v2482, %v2502
        %v2505 = vmul.f32 %v2483, %v2503
        %v2506 = vmul.f32 %v2125, %v2504
        %v2507 = vmul.f32 %v2126, %v2505
        %s2508 = scalar_lea.vmem %s275, 32 [#allocation2]
        %v2509 = vld [vmem:[%s2508] sm:$0xff]
        %v2510 = vld [vmem:[%s2508 + $0x8] sm:$0xff]
        %s2511 = scalar_lea.vmem %s284, 32 [#allocation5]
        %v2512 = vld [vmem:[%s2511] sm:$0xff]
        %v2513 = vld [vmem:[%s2511 + $0x8] sm:$0xff]
        %v2514 = vmul.f32 %v2509, %v2512
        %v2515 = vmul.f32 %v2510, %v2513
        %v2516 = vmul.f32 %v2509, %v2509
        %v2517 = vmul.f32 %v2510, %v2510
        %v2518 = vmul.f32 %v2512, %v2512
        %v2519 = vmul.f32 %v2513, %v2513
        %v2520 = vadd.f32 %v2516, %v2518
        %v2521 = vadd.f32 %v2517, %v2519
        %v2522 = vsub.f32 %v2509, %v2512
        %v2523 = vsub.f32 %v2510, %v2513
        %v2524 = vand.u32 2147483647, %v2522
        %v2525 = vand.u32 2147483647, %v2523
        %v2526 = vadd.f32 %v1247, %v2524
        %v2527 = vadd.f32 %v1248, %v2525
        %2528 = vrot.lane.b32.xlu0 %v348, 48
        %v2529 = vpop.permute.xlu0 %2528
        %2530 = vrot.lane.b32.xlu0 %v349, 48
        %v2531 = vpop.permute.xlu0 %2530
        %v2535 = vsel %vm350, %v2509, 0
        %v2538 = vsel %vm350, %v2510, 0
        %v2541 = vsel %vm350, %v2512, 0
        %v2544 = vsel %vm350, %v2513, 0
        %v2547 = vsel %vm350, %v2514, 0
        %v2550 = vsel %vm350, %v2515, 0
        %v2553 = vsel %vm350, %v2520, 0
        %v2556 = vsel %vm350, %v2521, 0
        %2558 = vmatprep.subr.mxu0 0.0
        %2559 = vmatpush1.msra.mxu0 %v2529
        %2560 = vmatprep.subr.mxu0 0.0
        %2561 = vmatpush1.msra.mxu0 %v2531
        %2562 = vmatprep.subr.mxu0 0.0
        %2563 = vmatpush1.msra.mxu0 0.0
        %2564 = vmatprep.subr.mxu0 0.0
        %2565 = vmatpush1.msra.mxu0 0.0
        %2566 = vmatprep.subr.mxu0 0.0
        %2567 = vmatpush1.msra.mxu0 0.0
        %2568 = vmatprep.subr.mxu0 0.0
        %2569 = vmatpush1.msra.mxu0 0.0
        %2570 = vmatprep.subr.mxu0 0.0
        %2571 = vmatpush1.msra.mxu0 0.0
        %2572 = vmatprep.subr.mxu0 0.0
        %2573 = vmatpush1.msra.mxu0 0.0
        %2574 = vmatprep.subr.mxu0 0.0
        %2575 = vmatpush1.msra.mxu0 0.0
        %2576 = vmatprep.subr.mxu0 0.0
        %2577 = vmatpush1.msra.mxu0 0.0
        %2578 = vmatprep.subr.mxu0 0.0
        %2579 = vmatpush1.msra.mxu0 0.0
        %2580 = vmatprep.subr.mxu0 0.0
        %2581 = vmatpush1.msra.mxu0 0.0
        %2582 = vmatprep.subr.mxu0 0.0
        %2583 = vmatpush1.msra.mxu0 0.0
        %2584 = vmatprep.subr.mxu0 0.0
        %2585 = vmatpush1.msra.mxu0 0.0
        %2586 = vmatprep.subr.mxu0 0.0
        %2587 = vmatpush1.msra.mxu0 0.0
        %2588 = vmatprep.subr.mxu0 0.0
        %2589 = vmatpush1.msra.mxu0 0.0
        %2590 = vmatprep.subr.mxu0 0.0
        %2591 = vmatpush1.msra.mxu0 0.0
        %2592 = vmatprep.subr.mxu0 0.0
        %2593 = vmatpush1.msra.mxu0 0.0
        %2594 = vmatprep.subr.mxu0 0.0
        %2595 = vmatpush1.msra.mxu0 0.0
        %2596 = vmatprep.subr.mxu0 0.0
        %2597 = vmatpush1.msra.mxu0 0.0
        %2598 = vmatprep.subr.mxu0 0.0
        %2599 = vmatpush1.msra.mxu0 0.0
        %2600 = vmatprep.subr.mxu0 0.0
        %2601 = vmatpush1.msra.mxu0 0.0
        %2602 = vmatprep.subr.mxu0 0.0
        %2603 = vmatpush1.msra.mxu0 0.0
        %2604 = vmatprep.subr.mxu0 0.0
        %2605 = vmatpush1.msra.mxu0 0.0
        %2606 = vmatprep.subr.mxu0 0.0
        %2607 = vmatpush1.msra.mxu0 0.0
        %2608 = vmatprep.subr.mxu0 0.0
        %2609 = vmatpush1.msra.mxu0 0.0
        %2610 = vmatprep.subr.mxu0 0.0
        %2611 = vmatpush1.msra.mxu0 0.0
        %2612 = vmatprep.subr.mxu0 0.0
        %2613 = vmatpush1.msra.mxu0 0.0
        %2614 = vmatprep.subr.mxu0 0.0
        %2615 = vmatpush1.msra.mxu0 0.0
        %2616 = vmatprep.subr.mxu0 0.0
        %2617 = vmatpush1.msra.mxu0 0.0
        %2618 = vmatprep.subr.mxu0 0.0
        %2619 = vmatpush1.msra.mxu0 0.0
        %2620 = vmatprep.subr.mxu0 0.0
        %2621 = vmatpush1.msra.mxu0 0.0
        %2622 = vmatprep.mubr.f32.mxu0 0.0
        %2623 = vmatmul.mubr.f32.gmra.mrb[0].mxu0 %v2535
        %v2624 = vpop.f32.mrb[0].mxu0
        %v2625 = vadd.f32 0.0, %v2624
        %v2626 = vpop.f32.mrb[0].mxu0
        %2627 = vmatprep.mubr.f32.mxu0 0.0
        %2628 = vmatmul.mubr.f32.gmra.mrb[0].mxu0 %v2538
        %v2629 = vpop.f32.mrb[0].mxu0
        %v2630 = vadd.f32 0.0, %v2629
        %v2631 = vpop.f32.mrb[0].mxu0
        %2632 = vmatprep.mubr.f32.mxu0 0.0
        %2633 = vmatmul.mubr.f32.gmra.mrb[0].mxu0 %v2541
        %v2634 = vpop.f32.mrb[0].mxu0
        %v2635 = vadd.f32 0.0, %v2634
        %v2636 = vpop.f32.mrb[0].mxu0
        %2637 = vmatprep.mubr.f32.mxu0 0.0
        %2638 = vmatmul.mubr.f32.gmra.mrb[0].mxu0 %v2544
        %v2639 = vpop.f32.mrb[0].mxu0
        %v2640 = vadd.f32 0.0, %v2639
        %v2641 = vpop.f32.mrb[0].mxu0
        %2642 = vmatprep.mubr.f32.mxu0 0.0
        %2643 = vmatmul.mubr.f32.gmra.mrb[0].mxu0 %v2547
        %v2644 = vpop.f32.mrb[0].mxu0
        %v2645 = vadd.f32 0.0, %v2644
        %v2646 = vpop.f32.mrb[0].mxu0
        %2647 = vmatprep.mubr.f32.mxu0 0.0
        %2648 = vmatmul.mubr.f32.gmra.mrb[0].mxu0 %v2550
        %v2649 = vpop.f32.mrb[0].mxu0
        %v2650 = vadd.f32 0.0, %v2649
        %v2651 = vpop.f32.mrb[0].mxu0
        %2652 = vmatprep.mubr.f32.mxu0 0.0
        %2653 = vmatmul.mubr.f32.gmra.mrb[0].mxu0 %v2553
        %v2654 = vpop.f32.mrb[0].mxu0
        %v2655 = vadd.f32 0.0, %v2654
        %v2656 = vpop.f32.mrb[0].mxu0
        %2657 = vmatprep.mubr.f32.mxu0 0.0
        %2658 = vmatmul.mubr.f32.gmra.mrb[0].mxu0 %v2556
        %v2659 = vpop.f32.mrb[0].mxu0
        %v2660 = vadd.f32 0.0, %v2659
        %v2661 = vpop.f32.mrb[0].mxu0
        %2662 = vdwg.mxu0
        %2663 = vmatprep.subr.mxu0 0.0
        %2664 = vmatpush1.msra.mxu0 %v2625
        %2665 = vmatprep.subr.mxu0 0.0
        %2666 = vmatpush1.msra.mxu0 %v2630
        %2667 = vmatprep.subr.mxu0 0.0
        %2668 = vmatpush1.msra.mxu0 0.0
        %2669 = vmatprep.subr.mxu0 0.0
        %2670 = vmatpush1.msra.mxu0 0.0
        %2671 = vmatprep.subr.mxu0 0.0
        %2672 = vmatpush1.msra.mxu0 0.0
        %2673 = vmatprep.subr.mxu0 0.0
        %2674 = vmatpush1.msra.mxu0 0.0
        %2675 = vmatprep.subr.mxu0 0.0
        %2676 = vmatpush1.msra.mxu0 0.0
        %2677 = vmatprep.subr.mxu0 0.0
        %2678 = vmatpush1.msra.mxu0 0.0
        %2679 = vmatprep.subr.mxu0 0.0
        %2680 = vmatpush1.msra.mxu0 0.0
        %2681 = vmatprep.subr.mxu0 0.0
        %2682 = vmatpush1.msra.mxu0 0.0
        %2683 = vmatprep.subr.mxu0 0.0
        %2684 = vmatpush1.msra.mxu0 0.0
        %2685 = vmatprep.subr.mxu0 0.0
        %2686 = vmatpush1.msra.mxu0 0.0
        %2687 = vmatprep.subr.mxu0 0.0
        %2688 = vmatpush1.msra.mxu0 0.0
        %2689 = vmatprep.subr.mxu0 0.0
        %2690 = vmatpush1.msra.mxu0 0.0
        %2691 = vmatprep.subr.mxu0 0.0
        %2692 = vmatpush1.msra.mxu0 0.0
        %2693 = vmatprep.subr.mxu0 0.0
        %2694 = vmatpush1.msra.mxu0 0.0
        %2695 = vmatprep.subr.mxu0 0.0
        %2696 = vmatpush1.msra.mxu0 0.0
        %2697 = vmatprep.subr.mxu0 0.0
        %2698 = vmatpush1.msra.mxu0 0.0
        %2699 = vmatprep.subr.mxu0 0.0
        %2700 = vmatpush1.msra.mxu0 0.0
        %2701 = vmatprep.subr.mxu0 0.0
        %2702 = vmatpush1.msra.mxu0 0.0
        %2703 = vmatprep.subr.mxu0 0.0
        %2704 = vmatpush1.msra.mxu0 0.0
        %2705 = vmatprep.subr.mxu0 0.0
        %2706 = vmatpush1.msra.mxu0 0.0
        %2707 = vmatprep.subr.mxu0 0.0
        %2708 = vmatpush1.msra.mxu0 0.0
        %2709 = vmatprep.subr.mxu0 0.0
        %2710 = vmatpush1.msra.mxu0 0.0
        %2711 = vmatprep.subr.mxu0 0.0
        %2712 = vmatpush1.msra.mxu0 0.0
        %2713 = vmatprep.subr.mxu0 0.0
        %2714 = vmatpush1.msra.mxu0 0.0
        %2715 = vmatprep.subr.mxu0 0.0
        %2716 = vmatpush1.msra.mxu0 0.0
        %2717 = vmatprep.subr.mxu0 0.0
        %2718 = vmatpush1.msra.mxu0 0.0
        %2719 = vmatprep.subr.mxu0 0.0
        %2720 = vmatpush1.msra.mxu0 0.0
        %2721 = vmatprep.subr.mxu0 0.0
        %2722 = vmatpush1.msra.mxu0 0.0
        %2723 = vmatprep.subr.mxu0 0.0
        %2724 = vmatpush1.msra.mxu0 0.0
        %2725 = vmatprep.subr.mxu0 0.0
        %2726 = vmatpush1.msra.mxu0 0.0
        %2727 = vmatprep.mubr.f32.mxu0 0.0
        %2728 = vmatmul.mubr.f32.gmra.mrb[0].mxu0 %v2137
        %v2729 = vpop.f32.mrb[0].mxu0
        %v2730 = vadd.f32 0.0, %v2729
        %v2731 = vpop.f32.mrb[0].mxu0
        %2732 = vmatprep.mubr.f32.mxu0 0.0
        %2733 = vmatmul.mubr.f32.gmra.mrb[0].mxu0 %v2140
        %v2734 = vpop.f32.mrb[0].mxu0
        %v2735 = vadd.f32 0.0, %v2734
        %v2736 = vpop.f32.mrb[0].mxu0
        %2737 = vdwg.mxu0
        %2738 = vmatprep.subr.mxu0 0.0
        %2739 = vmatpush1.msra.mxu0 %v2635
        %2740 = vmatprep.subr.mxu0 0.0
        %2741 = vmatpush1.msra.mxu0 %v2640
        %2742 = vmatprep.subr.mxu0 0.0
        %2743 = vmatpush1.msra.mxu0 0.0
        %2744 = vmatprep.subr.mxu0 0.0
        %2745 = vmatpush1.msra.mxu0 0.0
        %2746 = vmatprep.subr.mxu0 0.0
        %2747 = vmatpush1.msra.mxu0 0.0
        %2748 = vmatprep.subr.mxu0 0.0
        %2749 = vmatpush1.msra.mxu0 0.0
        %2750 = vmatprep.subr.mxu0 0.0
        %2751 = vmatpush1.msra.mxu0 0.0
        %2752 = vmatprep.subr.mxu0 0.0
        %2753 = vmatpush1.msra.mxu0 0.0
        %2754 = vmatprep.subr.mxu0 0.0
        %2755 = vmatpush1.msra.mxu0 0.0
        %2756 = vmatprep.subr.mxu0 0.0
        %2757 = vmatpush1.msra.mxu0 0.0
        %2758 = vmatprep.subr.mxu0 0.0
        %2759 = vmatpush1.msra.mxu0 0.0
        %2760 = vmatprep.subr.mxu0 0.0
        %2761 = vmatpush1.msra.mxu0 0.0
        %2762 = vmatprep.subr.mxu0 0.0
        %2763 = vmatpush1.msra.mxu0 0.0
        %2764 = vmatprep.subr.mxu0 0.0
        %2765 = vmatpush1.msra.mxu0 0.0
        %2766 = vmatprep.subr.mxu0 0.0
        %2767 = vmatpush1.msra.mxu0 0.0
        %2768 = vmatprep.subr.mxu0 0.0
        %2769 = vmatpush1.msra.mxu0 0.0
        %2770 = vmatprep.subr.mxu0 0.0
        %2771 = vmatpush1.msra.mxu0 0.0
        %2772 = vmatprep.subr.mxu0 0.0
        %2773 = vmatpush1.msra.mxu0 0.0
        %2774 = vmatprep.subr.mxu0 0.0
        %2775 = vmatpush1.msra.mxu0 0.0
        %2776 = vmatprep.subr.mxu0 0.0
        %2777 = vmatpush1.msra.mxu0 0.0
        %2778 = vmatprep.subr.mxu0 0.0
        %2779 = vmatpush1.msra.mxu0 0.0
        %2780 = vmatprep.subr.mxu0 0.0
        %2781 = vmatpush1.msra.mxu0 0.0
        %2782 = vmatprep.subr.mxu0 0.0
        %2783 = vmatpush1.msra.mxu0 0.0
        %2784 = vmatprep.subr.mxu0 0.0
        %2785 = vmatpush1.msra.mxu0 0.0
        %2786 = vmatprep.subr.mxu0 0.0
        %2787 = vmatpush1.msra.mxu0 0.0
        %2788 = vmatprep.subr.mxu0 0.0
        %2789 = vmatpush1.msra.mxu0 0.0
        %2790 = vmatprep.subr.mxu0 0.0
        %2791 = vmatpush1.msra.mxu0 0.0
        %2792 = vmatprep.subr.mxu0 0.0
        %2793 = vmatpush1.msra.mxu0 0.0
        %2794 = vmatprep.subr.mxu0 0.0
        %2795 = vmatpush1.msra.mxu0 0.0
        %2796 = vmatprep.subr.mxu0 0.0
        %2797 = vmatpush1.msra.mxu0 0.0
        %2798 = vmatprep.subr.mxu0 0.0
        %2799 = vmatpush1.msra.mxu0 0.0
        %2800 = vmatprep.subr.mxu0 0.0
        %2801 = vmatpush1.msra.mxu0 0.0
        %2802 = vmatprep.mubr.f32.mxu0 0.0
        %2803 = vmatmul.mubr.f32.gmra.mrb[0].mxu0 %v2137
        %v2804 = vpop.f32.mrb[0].mxu0
        %v2805 = vadd.f32 0.0, %v2804
        %v2806 = vpop.f32.mrb[0].mxu0
        %2807 = vmatprep.mubr.f32.mxu0 0.0
        %2808 = vmatmul.mubr.f32.gmra.mrb[0].mxu0 %v2140
        %v2809 = vpop.f32.mrb[0].mxu0
        %v2810 = vadd.f32 0.0, %v2809
        %v2811 = vpop.f32.mrb[0].mxu0
        %2812 = vdwg.mxu0
        %2813 = vmatprep.subr.mxu0 0.0
        %2814 = vmatpush1.msra.mxu0 %v2645
        %2815 = vmatprep.subr.mxu0 0.0
        %2816 = vmatpush1.msra.mxu0 %v2650
        %2817 = vmatprep.subr.mxu0 0.0
        %2818 = vmatpush1.msra.mxu0 0.0
        %2819 = vmatprep.subr.mxu0 0.0
        %2820 = vmatpush1.msra.mxu0 0.0
        %2821 = vmatprep.subr.mxu0 0.0
        %2822 = vmatpush1.msra.mxu0 0.0
        %2823 = vmatprep.subr.mxu0 0.0
        %2824 = vmatpush1.msra.mxu0 0.0
        %2825 = vmatprep.subr.mxu0 0.0
        %2826 = vmatpush1.msra.mxu0 0.0
        %2827 = vmatprep.subr.mxu0 0.0
        %2828 = vmatpush1.msra.mxu0 0.0
        %2829 = vmatprep.subr.mxu0 0.0
        %2830 = vmatpush1.msra.mxu0 0.0
        %2831 = vmatprep.subr.mxu0 0.0
        %2832 = vmatpush1.msra.mxu0 0.0
        %2833 = vmatprep.subr.mxu0 0.0
        %2834 = vmatpush1.msra.mxu0 0.0
        %2835 = vmatprep.subr.mxu0 0.0
        %2836 = vmatpush1.msra.mxu0 0.0
        %2837 = vmatprep.subr.mxu0 0.0
        %2838 = vmatpush1.msra.mxu0 0.0
        %2839 = vmatprep.subr.mxu0 0.0
        %2840 = vmatpush1.msra.mxu0 0.0
        %2841 = vmatprep.subr.mxu0 0.0
        %2842 = vmatpush1.msra.mxu0 0.0
        %2843 = vmatprep.subr.mxu0 0.0
        %2844 = vmatpush1.msra.mxu0 0.0
        %2845 = vmatprep.subr.mxu0 0.0
        %2846 = vmatpush1.msra.mxu0 0.0
        %2847 = vmatprep.subr.mxu0 0.0
        %2848 = vmatpush1.msra.mxu0 0.0
        %2849 = vmatprep.subr.mxu0 0.0
        %2850 = vmatpush1.msra.mxu0 0.0
        %2851 = vmatprep.subr.mxu0 0.0
        %2852 = vmatpush1.msra.mxu0 0.0
        %2853 = vmatprep.subr.mxu0 0.0
        %2854 = vmatpush1.msra.mxu0 0.0
        %2855 = vmatprep.subr.mxu0 0.0
        %2856 = vmatpush1.msra.mxu0 0.0
        %2857 = vmatprep.subr.mxu0 0.0
        %2858 = vmatpush1.msra.mxu0 0.0
        %2859 = vmatprep.subr.mxu0 0.0
        %2860 = vmatpush1.msra.mxu0 0.0
        %2861 = vmatprep.subr.mxu0 0.0
        %2862 = vmatpush1.msra.mxu0 0.0
        %2863 = vmatprep.subr.mxu0 0.0
        %2864 = vmatpush1.msra.mxu0 0.0
        %2865 = vmatprep.subr.mxu0 0.0
        %2866 = vmatpush1.msra.mxu0 0.0
        %2867 = vmatprep.subr.mxu0 0.0
        %2868 = vmatpush1.msra.mxu0 0.0
        %2869 = vmatprep.subr.mxu0 0.0
        %2870 = vmatpush1.msra.mxu0 0.0
        %2871 = vmatprep.subr.mxu0 0.0
        %2872 = vmatpush1.msra.mxu0 0.0
        %2873 = vmatprep.subr.mxu0 0.0
        %2874 = vmatpush1.msra.mxu0 0.0
        %2875 = vmatprep.subr.mxu0 0.0
        %2876 = vmatpush1.msra.mxu0 0.0
        %2877 = vmatprep.mubr.f32.mxu0 0.0
        %2878 = vmatmul.mubr.f32.gmra.mrb[0].mxu0 %v2137
        %v2879 = vpop.f32.mrb[0].mxu0
        %v2880 = vadd.f32 0.0, %v2879
        %v2881 = vpop.f32.mrb[0].mxu0
        %2882 = vmatprep.mubr.f32.mxu0 0.0
        %2883 = vmatmul.mubr.f32.gmra.mrb[0].mxu0 %v2140
        %v2884 = vpop.f32.mrb[0].mxu0
        %v2885 = vadd.f32 0.0, %v2884
        %v2886 = vpop.f32.mrb[0].mxu0
        %2887 = vdwg.mxu0
        %2888 = vmatprep.subr.mxu0 0.0
        %2889 = vmatpush1.msra.mxu0 %v2655
        %2890 = vmatprep.subr.mxu0 0.0
        %2891 = vmatpush1.msra.mxu0 %v2660
        %2892 = vmatprep.subr.mxu0 0.0
        %2893 = vmatpush1.msra.mxu0 0.0
        %2894 = vmatprep.subr.mxu0 0.0
        %2895 = vmatpush1.msra.mxu0 0.0
        %2896 = vmatprep.subr.mxu0 0.0
        %2897 = vmatpush1.msra.mxu0 0.0
        %2898 = vmatprep.subr.mxu0 0.0
        %2899 = vmatpush1.msra.mxu0 0.0
        %2900 = vmatprep.subr.mxu0 0.0
        %2901 = vmatpush1.msra.mxu0 0.0
        %2902 = vmatprep.subr.mxu0 0.0
        %2903 = vmatpush1.msra.mxu0 0.0
        %2904 = vmatprep.subr.mxu0 0.0
        %2905 = vmatpush1.msra.mxu0 0.0
        %2906 = vmatprep.subr.mxu0 0.0
        %2907 = vmatpush1.msra.mxu0 0.0
        %2908 = vmatprep.subr.mxu0 0.0
        %2909 = vmatpush1.msra.mxu0 0.0
        %2910 = vmatprep.subr.mxu0 0.0
        %2911 = vmatpush1.msra.mxu0 0.0
        %2912 = vmatprep.subr.mxu0 0.0
        %2913 = vmatpush1.msra.mxu0 0.0
        %2914 = vmatprep.subr.mxu0 0.0
        %2915 = vmatpush1.msra.mxu0 0.0
        %2916 = vmatprep.subr.mxu0 0.0
        %2917 = vmatpush1.msra.mxu0 0.0
        %2918 = vmatprep.subr.mxu0 0.0
        %2919 = vmatpush1.msra.mxu0 0.0
        %2920 = vmatprep.subr.mxu0 0.0
        %2921 = vmatpush1.msra.mxu0 0.0
        %2922 = vmatprep.subr.mxu0 0.0
        %2923 = vmatpush1.msra.mxu0 0.0
        %2924 = vmatprep.subr.mxu0 0.0
        %2925 = vmatpush1.msra.mxu0 0.0
        %2926 = vmatprep.subr.mxu0 0.0
        %2927 = vmatpush1.msra.mxu0 0.0
        %2928 = vmatprep.subr.mxu0 0.0
        %2929 = vmatpush1.msra.mxu0 0.0
        %2930 = vmatprep.subr.mxu0 0.0
        %2931 = vmatpush1.msra.mxu0 0.0
        %2932 = vmatprep.subr.mxu0 0.0
        %2933 = vmatpush1.msra.mxu0 0.0
        %2934 = vmatprep.subr.mxu0 0.0
        %2935 = vmatpush1.msra.mxu0 0.0
        %2936 = vmatprep.subr.mxu0 0.0
        %2937 = vmatpush1.msra.mxu0 0.0
        %2938 = vmatprep.subr.mxu0 0.0
        %2939 = vmatpush1.msra.mxu0 0.0
        %2940 = vmatprep.subr.mxu0 0.0
        %2941 = vmatpush1.msra.mxu0 0.0
        %2942 = vmatprep.subr.mxu0 0.0
        %2943 = vmatpush1.msra.mxu0 0.0
        %2944 = vmatprep.subr.mxu0 0.0
        %2945 = vmatpush1.msra.mxu0 0.0
        %2946 = vmatprep.subr.mxu0 0.0
        %2947 = vmatpush1.msra.mxu0 0.0
        %2948 = vmatprep.subr.mxu0 0.0
        %2949 = vmatpush1.msra.mxu0 0.0
        %2950 = vmatprep.subr.mxu0 0.0
        %2951 = vmatpush1.msra.mxu0 0.0
        %2952 = vmatprep.mubr.f32.mxu0 0.0
        %2953 = vmatmul.mubr.f32.gmra.mrb[0].mxu0 %v2137
        %v2954 = vpop.f32.mrb[0].mxu0
        %v2955 = vadd.f32 0.0, %v2954
        %v2956 = vpop.f32.mrb[0].mxu0
        %2957 = vmatprep.mubr.f32.mxu0 0.0
        %2958 = vmatmul.mubr.f32.gmra.mrb[0].mxu0 %v2140
        %v2959 = vpop.f32.mrb[0].mxu0
        %v2960 = vadd.f32 0.0, %v2959
        %v2961 = vpop.f32.mrb[0].mxu0
        %2962 = vdwg.mxu0
        %v2963 = vmul.f32 %v2730, %v2730
        %v2964 = vmul.f32 %v2735, %v2735
        %v2965 = vmul.f32 %v2805, %v2805
        %v2966 = vmul.f32 %v2810, %v2810
        %v2967 = vmul.f32 %v2730, %v2805
        %v2968 = vmul.f32 %v2735, %v2810
        %v2969 = vadd.f32 %v2963, %v2965
        %v2970 = vadd.f32 %v2964, %v2966
        %v2971 = vmul.f32 %v2967, 2.0
        %v2972 = vmul.f32 %v2968, 2.0
        %v2973 = vadd.f32 %v2971, 0.0001
        %v2974 = vadd.f32 %v2972, 0.0001
        %v2975 = vadd.f32 %v2969, 0.0001
        %v2976 = vadd.f32 %v2970, 0.0001
        %v2977 = vrcp.pop %v2975
        %v2978 = vrcp.pop %v2976
        %v2979 = vmul.f32 %v2975, %v2977
        %v2980 = vmul.f32 %v2976, %v2978
        %v2981 = vsub.f32 2.0, %v2979
        %v2982 = vsub.f32 2.0, %v2980
        %v2983 = vmul.f32 %v2977, %v2981
        %v2984 = vmul.f32 %v2978, %v2982
        %v2985 = vmul.f32 %v2973, %v2983
        %v2986 = vmul.f32 %v2974, %v2984
        %v2987 = vsub.f32 %v2880, %v2967
        %v2988 = vsub.f32 %v2885, %v2968
        %v2989 = vmul.f32 %v2987, 2.0
        %v2990 = vmul.f32 %v2988, 2.0
        %v2991 = vadd.f32 %v2989, 0.0009
        %v2992 = vadd.f32 %v2990, 0.0009
        %v2993 = vsub.f32 %v2955, %v2969
        %v2994 = vsub.f32 %v2960, %v2970
        %v2995 = vadd.f32 %v2993, 0.0009
        %v2996 = vadd.f32 %v2994, 0.0009
        %v2997 = vrcp.pop %v2995
        %v2998 = vrcp.pop %v2996
        %v2999 = vmul.f32 %v2995, %v2997
        %v3000 = vmul.f32 %v2996, %v2998
        %v3001 = vsub.f32 2.0, %v2999
        %v3002 = vsub.f32 2.0, %v3000
        %v3003 = vmul.f32 %v2997, %v3001
        %v3004 = vmul.f32 %v2998, %v3002
        %v3005 = vmul.f32 %v2991, %v3003
        %v3006 = vmul.f32 %v2992, %v3004
        %v3007 = vmul.f32 %v2985, %v3005
        %v3008 = vmul.f32 %v2986, %v3006
        %v3009 = vmul.f32 %v3007, %v3007
        %v3010 = vmul.f32 %v3008, %v3008
        %v3011 = vmul.f32 %v2506, %v3009
        %v3012 = vmul.f32 %v2507, %v3010
        %s3013 = scalar_lea.vmem [#allocation7], 64
        %v3014 = vld [vmem:[%s3013] sm:$0xff]
        %v3015 = vld [vmem:[%s3013 + $0x8] sm:$0xff]
        %3018 = vrot.lane.b32.xlu0 %v2625, 112
        %v3019 = vpop.permute.xlu0 %3018
        %3020 = vrot.lane.b32.xlu0 %v2630, 112
        %v3021 = vpop.permute.xlu0 %3020
        %v3025 = vsel %vm350, %v3014, 0
        %v3028 = vsel %vm350, %v3015, 0
        %3030 = vmatprep.subr.mxu0 0.0
        %3031 = vmatpush1.msra.mxu0 %v3019
        %3032 = vmatprep.subr.mxu0 0.0
        %3033 = vmatpush1.msra.mxu0 %v3021
        %3034 = vmatprep.subr.mxu0 0.0
        %3035 = vmatpush1.msra.mxu0 0.0
        %3036 = vmatprep.subr.mxu0 0.0
        %3037 = vmatpush1.msra.mxu0 0.0
        %3038 = vmatprep.subr.mxu0 0.0
        %3039 = vmatpush1.msra.mxu0 0.0
        %3040 = vmatprep.subr.mxu0 0.0
        %3041 = vmatpush1.msra.mxu0 0.0
        %3042 = vmatprep.subr.mxu0 0.0
        %3043 = vmatpush1.msra.mxu0 0.0
        %3044 = vmatprep.subr.mxu0 0.0
        %3045 = vmatpush1.msra.mxu0 0.0
        %3046 = vmatprep.subr.mxu0 0.0
        %3047 = vmatpush1.msra.mxu0 0.0
        %3048 = vmatprep.subr.mxu0 0.0
        %3049 = vmatpush1.msra.mxu0 0.0
        %3050 = vmatprep.subr.mxu0 0.0
        %3051 = vmatpush1.msra.mxu0 0.0
        %3052 = vmatprep.subr.mxu0 0.0
        %3053 = vmatpush1.msra.mxu0 0.0
        %3054 = vmatprep.subr.mxu0 0.0
        %3055 = vmatpush1.msra.mxu0 0.0
        %3056 = vmatprep.subr.mxu0 0.0
        %3057 = vmatpush1.msra.mxu0 0.0
        %3058 = vmatprep.subr.mxu0 0.0
        %3059 = vmatpush1.msra.mxu0 0.0
        %3060 = vmatprep.subr.mxu0 0.0
        %3061 = vmatpush1.msra.mxu0 0.0
        %3062 = vmatprep.subr.mxu0 0.0
        %3063 = vmatpush1.msra.mxu0 0.0
        %3064 = vmatprep.subr.mxu0 0.0
        %3065 = vmatpush1.msra.mxu0 0.0
        %3066 = vmatprep.subr.mxu0 0.0
        %3067 = vmatpush1.msra.mxu0 0.0
        %3068 = vmatprep.subr.mxu0 0.0
        %3069 = vmatpush1.msra.mxu0 0.0
        %3070 = vmatprep.subr.mxu0 0.0
        %3071 = vmatpush1.msra.mxu0 0.0
        %3072 = vmatprep.subr.mxu0 0.0
        %3073 = vmatpush1.msra.mxu0 0.0
        %3074 = vmatprep.subr.mxu0 0.0
        %3075 = vmatpush1.msra.mxu0 0.0
        %3076 = vmatprep.subr.mxu0 0.0
        %3077 = vmatpush1.msra.mxu0 0.0
        %3078 = vmatprep.subr.mxu0 0.0
        %3079 = vmatpush1.msra.mxu0 0.0
        %3080 = vmatprep.subr.mxu0 0.0
        %3081 = vmatpush1.msra.mxu0 0.0
        %3082 = vmatprep.subr.mxu0 0.0
        %3083 = vmatpush1.msra.mxu0 0.0
        %3084 = vmatprep.subr.mxu0 0.0
        %3085 = vmatpush1.msra.mxu0 0.0
        %3086 = vmatprep.subr.mxu0 0.0
        %3087 = vmatpush1.msra.mxu0 0.0
        %3088 = vmatprep.subr.mxu0 0.0
        %3089 = vmatpush1.msra.mxu0 0.0
        %3090 = vmatprep.subr.mxu0 0.0
        %3091 = vmatpush1.msra.mxu0 0.0
        %3092 = vmatprep.subr.mxu0 0.0
        %3093 = vmatpush1.msra.mxu0 0.0
        %3094 = vmatprep.mubr.f32.mxu0 0.0
        %3095 = vmatmul.mubr.f32.gmra.mrb[0].mxu0 %v3025
        %v3096 = vpop.f32.mrb[0].mxu0
        %v3097 = vadd.f32 0.0, %v3096
        %v3098 = vpop.f32.mrb[0].mxu0
        %3099 = vmatprep.mubr.f32.mxu0 0.0
        %3100 = vmatmul.mubr.f32.gmra.mrb[0].mxu0 %v3028
        %v3101 = vpop.f32.mrb[0].mxu0
        %v3102 = vadd.f32 0.0, %v3101
        %v3103 = vpop.f32.mrb[0].mxu0
        %3104 = vdwg.mxu0
        %3107 = vrot.lane.b32.xlu0 %v2635, 112
        %v3108 = vpop.permute.xlu0 %3107
        %3109 = vrot.lane.b32.xlu0 %v2640, 112
        %v3110 = vpop.permute.xlu0 %3109
        %3113 = vmatprep.subr.mxu0 0.0
        %3114 = vmatpush1.msra.mxu0 %v3108
        %3115 = vmatprep.subr.mxu0 0.0
        %3116 = vmatpush1.msra.mxu0 %v3110
        %3117 = vmatprep.subr.mxu0 0.0
        %3118 = vmatpush1.msra.mxu0 0.0
        %3119 = vmatprep.subr.mxu0 0.0
        %3120 = vmatpush1.msra.mxu0 0.0
        %3121 = vmatprep.subr.mxu0 0.0
        %3122 = vmatpush1.msra.mxu0 0.0
        %3123 = vmatprep.subr.mxu0 0.0
        %3124 = vmatpush1.msra.mxu0 0.0
        %3125 = vmatprep.subr.mxu0 0.0
        %3126 = vmatpush1.msra.mxu0 0.0
        %3127 = vmatprep.subr.mxu0 0.0
        %3128 = vmatpush1.msra.mxu0 0.0
        %3129 = vmatprep.subr.mxu0 0.0
        %3130 = vmatpush1.msra.mxu0 0.0
        %3131 = vmatprep.subr.mxu0 0.0
        %3132 = vmatpush1.msra.mxu0 0.0
        %3133 = vmatprep.subr.mxu0 0.0
        %3134 = vmatpush1.msra.mxu0 0.0
        %3135 = vmatprep.subr.mxu0 0.0
        %3136 = vmatpush1.msra.mxu0 0.0
        %3137 = vmatprep.subr.mxu0 0.0
        %3138 = vmatpush1.msra.mxu0 0.0
        %3139 = vmatprep.subr.mxu0 0.0
        %3140 = vmatpush1.msra.mxu0 0.0
        %3141 = vmatprep.subr.mxu0 0.0
        %3142 = vmatpush1.msra.mxu0 0.0
        %3143 = vmatprep.subr.mxu0 0.0
        %3144 = vmatpush1.msra.mxu0 0.0
        %3145 = vmatprep.subr.mxu0 0.0
        %3146 = vmatpush1.msra.mxu0 0.0
        %3147 = vmatprep.subr.mxu0 0.0
        %3148 = vmatpush1.msra.mxu0 0.0
        %3149 = vmatprep.subr.mxu0 0.0
        %3150 = vmatpush1.msra.mxu0 0.0
        %3151 = vmatprep.subr.mxu0 0.0
        %3152 = vmatpush1.msra.mxu0 0.0
        %3153 = vmatprep.subr.mxu0 0.0
        %3154 = vmatpush1.msra.mxu0 0.0
        %3155 = vmatprep.subr.mxu0 0.0
        %3156 = vmatpush1.msra.mxu0 0.0
        %3157 = vmatprep.subr.mxu0 0.0
        %3158 = vmatpush1.msra.mxu0 0.0
        %3159 = vmatprep.subr.mxu0 0.0
        %3160 = vmatpush1.msra.mxu0 0.0
        %3161 = vmatprep.subr.mxu0 0.0
        %3162 = vmatpush1.msra.mxu0 0.0
        %3163 = vmatprep.subr.mxu0 0.0
        %3164 = vmatpush1.msra.mxu0 0.0
        %3165 = vmatprep.subr.mxu0 0.0
        %3166 = vmatpush1.msra.mxu0 0.0
        %3167 = vmatprep.subr.mxu0 0.0
        %3168 = vmatpush1.msra.mxu0 0.0
        %3169 = vmatprep.subr.mxu0 0.0
        %3170 = vmatpush1.msra.mxu0 0.0
        %3171 = vmatprep.subr.mxu0 0.0
        %3172 = vmatpush1.msra.mxu0 0.0
        %3173 = vmatprep.subr.mxu0 0.0
        %3174 = vmatpush1.msra.mxu0 0.0
        %3175 = vmatprep.subr.mxu0 0.0
        %3176 = vmatpush1.msra.mxu0 0.0
        %3177 = vmatprep.mubr.f32.mxu0 0.0
        %3178 = vmatmul.mubr.f32.gmra.mrb[0].mxu0 %v3025
        %v3179 = vpop.f32.mrb[0].mxu0
        %v3180 = vadd.f32 0.0, %v3179
        %v3181 = vpop.f32.mrb[0].mxu0
        %3182 = vmatprep.mubr.f32.mxu0 0.0
        %3183 = vmatmul.mubr.f32.gmra.mrb[0].mxu0 %v3028
        %v3184 = vpop.f32.mrb[0].mxu0
        %v3185 = vadd.f32 0.0, %v3184
        %v3186 = vpop.f32.mrb[0].mxu0
        %3187 = vdwg.mxu0
        %3190 = vrot.lane.b32.xlu0 %v2645, 112
        %v3191 = vpop.permute.xlu0 %3190
        %3192 = vrot.lane.b32.xlu0 %v2650, 112
        %v3193 = vpop.permute.xlu0 %3192
        %3196 = vmatprep.subr.mxu0 0.0
        %3197 = vmatpush1.msra.mxu0 %v3191
        %3198 = vmatprep.subr.mxu0 0.0
        %3199 = vmatpush1.msra.mxu0 %v3193
        %3200 = vmatprep.subr.mxu0 0.0
        %3201 = vmatpush1.msra.mxu0 0.0
        %3202 = vmatprep.subr.mxu0 0.0
        %3203 = vmatpush1.msra.mxu0 0.0
        %3204 = vmatprep.subr.mxu0 0.0
        %3205 = vmatpush1.msra.mxu0 0.0
        %3206 = vmatprep.subr.mxu0 0.0
        %3207 = vmatpush1.msra.mxu0 0.0
        %3208 = vmatprep.subr.mxu0 0.0
        %3209 = vmatpush1.msra.mxu0 0.0
        %3210 = vmatprep.subr.mxu0 0.0
        %3211 = vmatpush1.msra.mxu0 0.0
        %3212 = vmatprep.subr.mxu0 0.0
        %3213 = vmatpush1.msra.mxu0 0.0
        %3214 = vmatprep.subr.mxu0 0.0
        %3215 = vmatpush1.msra.mxu0 0.0
        %3216 = vmatprep.subr.mxu0 0.0
        %3217 = vmatpush1.msra.mxu0 0.0
        %3218 = vmatprep.subr.mxu0 0.0
        %3219 = vmatpush1.msra.mxu0 0.0
        %3220 = vmatprep.subr.mxu0 0.0
        %3221 = vmatpush1.msra.mxu0 0.0
        %3222 = vmatprep.subr.mxu0 0.0
        %3223 = vmatpush1.msra.mxu0 0.0
        %3224 = vmatprep.subr.mxu0 0.0
        %3225 = vmatpush1.msra.mxu0 0.0
        %3226 = vmatprep.subr.mxu0 0.0
        %3227 = vmatpush1.msra.mxu0 0.0
        %3228 = vmatprep.subr.mxu0 0.0
        %3229 = vmatpush1.msra.mxu0 0.0
        %3230 = vmatprep.subr.mxu0 0.0
        %3231 = vmatpush1.msra.mxu0 0.0
        %3232 = vmatprep.subr.mxu0 0.0
        %3233 = vmatpush1.msra.mxu0 0.0
        %3234 = vmatprep.subr.mxu0 0.0
        %3235 = vmatpush1.msra.mxu0 0.0
        %3236 = vmatprep.subr.mxu0 0.0
        %3237 = vmatpush1.msra.mxu0 0.0
        %3238 = vmatprep.subr.mxu0 0.0
        %3239 = vmatpush1.msra.mxu0 0.0
        %3240 = vmatprep.subr.mxu0 0.0
        %3241 = vmatpush1.msra.mxu0 0.0
        %3242 = vmatprep.subr.mxu0 0.0
        %3243 = vmatpush1.msra.mxu0 0.0
        %3244 = vmatprep.subr.mxu0 0.0
        %3245 = vmatpush1.msra.mxu0 0.0
        %3246 = vmatprep.subr.mxu0 0.0
        %3247 = vmatpush1.msra.mxu0 0.0
        %3248 = vmatprep.subr.mxu0 0.0
        %3249 = vmatpush1.msra.mxu0 0.0
        %3250 = vmatprep.subr.mxu0 0.0
        %3251 = vmatpush1.msra.mxu0 0.0
        %3252 = vmatprep.subr.mxu0 0.0
        %3253 = vmatpush1.msra.mxu0 0.0
        %3254 = vmatprep.subr.mxu0 0.0
        %3255 = vmatpush1.msra.mxu0 0.0
        %3256 = vmatprep.subr.mxu0 0.0
        %3257 = vmatpush1.msra.mxu0 0.0
        %3258 = vmatprep.subr.mxu0 0.0
        %3259 = vmatpush1.msra.mxu0 0.0
        %3260 = vmatprep.mubr.f32.mxu0 0.0
        %3261 = vmatmul.mubr.f32.gmra.mrb[0].mxu0 %v3025
        %v3262 = vpop.f32.mrb[0].mxu0
        %v3263 = vadd.f32 0.0, %v3262
        %v3264 = vpop.f32.mrb[0].mxu0
        %3265 = vmatprep.mubr.f32.mxu0 0.0
        %3266 = vmatmul.mubr.f32.gmra.mrb[0].mxu0 %v3028
        %v3267 = vpop.f32.mrb[0].mxu0
        %v3268 = vadd.f32 0.0, %v3267
        %v3269 = vpop.f32.mrb[0].mxu0
        %3270 = vdwg.mxu0
        %3273 = vrot.lane.b32.xlu0 %v2655, 112
        %v3274 = vpop.permute.xlu0 %3273
        %3275 = vrot.lane.b32.xlu0 %v2660, 112
        %v3276 = vpop.permute.xlu0 %3275
        %3279 = vmatprep.subr.mxu0 0.0
        %3280 = vmatpush1.msra.mxu0 %v3274
        %3281 = vmatprep.subr.mxu0 0.0
        %3282 = vmatpush1.msra.mxu0 %v3276
        %3283 = vmatprep.subr.mxu0 0.0
        %3284 = vmatpush1.msra.mxu0 0.0
        %3285 = vmatprep.subr.mxu0 0.0
        %3286 = vmatpush1.msra.mxu0 0.0
        %3287 = vmatprep.subr.mxu0 0.0
        %3288 = vmatpush1.msra.mxu0 0.0
        %3289 = vmatprep.subr.mxu0 0.0
        %3290 = vmatpush1.msra.mxu0 0.0
        %3291 = vmatprep.subr.mxu0 0.0
        %3292 = vmatpush1.msra.mxu0 0.0
        %3293 = vmatprep.subr.mxu0 0.0
        %3294 = vmatpush1.msra.mxu0 0.0
        %3295 = vmatprep.subr.mxu0 0.0
        %3296 = vmatpush1.msra.mxu0 0.0
        %3297 = vmatprep.subr.mxu0 0.0
        %3298 = vmatpush1.msra.mxu0 0.0
        %3299 = vmatprep.subr.mxu0 0.0
        %3300 = vmatpush1.msra.mxu0 0.0
        %3301 = vmatprep.subr.mxu0 0.0
        %3302 = vmatpush1.msra.mxu0 0.0
        %3303 = vmatprep.subr.mxu0 0.0
        %3304 = vmatpush1.msra.mxu0 0.0
        %3305 = vmatprep.subr.mxu0 0.0
        %3306 = vmatpush1.msra.mxu0 0.0
        %3307 = vmatprep.subr.mxu0 0.0
        %3308 = vmatpush1.msra.mxu0 0.0
        %3309 = vmatprep.subr.mxu0 0.0
        %3310 = vmatpush1.msra.mxu0 0.0
        %3311 = vmatprep.subr.mxu0 0.0
        %3312 = vmatpush1.msra.mxu0 0.0
        %3313 = vmatprep.subr.mxu0 0.0
        %3314 = vmatpush1.msra.mxu0 0.0
        %3315 = vmatprep.subr.mxu0 0.0
        %3316 = vmatpush1.msra.mxu0 0.0
        %3317 = vmatprep.subr.mxu0 0.0
        %3318 = vmatpush1.msra.mxu0 0.0
        %3319 = vmatprep.subr.mxu0 0.0
        %3320 = vmatpush1.msra.mxu0 0.0
        %3321 = vmatprep.subr.mxu0 0.0
        %3322 = vmatpush1.msra.mxu0 0.0
        %3323 = vmatprep.subr.mxu0 0.0
        %3324 = vmatpush1.msra.mxu0 0.0
        %3325 = vmatprep.subr.mxu0 0.0
        %3326 = vmatpush1.msra.mxu0 0.0
        %3327 = vmatprep.subr.mxu0 0.0
        %3328 = vmatpush1.msra.mxu0 0.0
        %3329 = vmatprep.subr.mxu0 0.0
        %3330 = vmatpush1.msra.mxu0 0.0
        %3331 = vmatprep.subr.mxu0 0.0
        %3332 = vmatpush1.msra.mxu0 0.0
        %3333 = vmatprep.subr.mxu0 0.0
        %3334 = vmatpush1.msra.mxu0 0.0
        %3335 = vmatprep.subr.mxu0 0.0
        %3336 = vmatpush1.msra.mxu0 0.0
        %3337 = vmatprep.subr.mxu0 0.0
        %3338 = vmatpush1.msra.mxu0 0.0
        %3339 = vmatprep.subr.mxu0 0.0
        %3340 = vmatpush1.msra.mxu0 0.0
        %3341 = vmatprep.subr.mxu0 0.0
        %3342 = vmatpush1.msra.mxu0 0.0
        %3343 = vmatprep.mubr.f32.mxu0 0.0
        %3344 = vmatmul.mubr.f32.gmra.mrb[0].mxu0 %v3025
        %v3345 = vpop.f32.mrb[0].mxu0
        %v3346 = vadd.f32 0.0, %v3345
        %v3347 = vpop.f32.mrb[0].mxu0
        %3348 = vmatprep.mubr.f32.mxu0 0.0
        %3349 = vmatmul.mubr.f32.gmra.mrb[0].mxu0 %v3028
        %v3350 = vpop.f32.mrb[0].mxu0
        %v3351 = vadd.f32 0.0, %v3350
        %v3352 = vpop.f32.mrb[0].mxu0
        %3353 = vdwg.mxu0
        %v3354 = vmul.f32 %v3097, %v3097
        %v3355 = vmul.f32 %v3102, %v3102
        %v3356 = vmul.f32 %v3180, %v3180
        %v3357 = vmul.f32 %v3185, %v3185
        %v3358 = vmul.f32 %v3097, %v3180
        %v3359 = vmul.f32 %v3102, %v3185
        %v3360 = vadd.f32 %v3354, %v3356
        %v3361 = vadd.f32 %v3355, %v3357
        %v3362 = vmul.f32 %v3358, 2.0
        %v3363 = vmul.f32 %v3359, 2.0
        %v3364 = vadd.f32 %v3362, 0.0001
        %v3365 = vadd.f32 %v3363, 0.0001
        %v3366 = vadd.f32 %v3360, 0.0001
        %v3367 = vadd.f32 %v3361, 0.0001
        %v3368 = vrcp.pop %v3366
        %v3369 = vrcp.pop %v3367
        %v3370 = vmul.f32 %v3366, %v3368
        %v3371 = vmul.f32 %v3367, %v3369
        %v3372 = vsub.f32 2.0, %v3370
        %v3373 = vsub.f32 2.0, %v3371
        %v3374 = vmul.f32 %v3368, %v3372
        %v3375 = vmul.f32 %v3369, %v3373
        %v3376 = vmul.f32 %v3364, %v3374
        %v3377 = vmul.f32 %v3365, %v3375
        %v3378 = vsub.f32 %v3263, %v3358
        %v3379 = vsub.f32 %v3268, %v3359
        %v3380 = vmul.f32 %v3378, 2.0
        %v3381 = vmul.f32 %v3379, 2.0
        %v3382 = vadd.f32 %v3380, 0.0009
        %v3383 = vadd.f32 %v3381, 0.0009
        %v3384 = vsub.f32 %v3346, %v3360
        %v3385 = vsub.f32 %v3351, %v3361
        %v3386 = vadd.f32 %v3384, 0.0009
        %v3387 = vadd.f32 %v3385, 0.0009
        %v3388 = vrcp.pop %v3386
        %v3389 = vrcp.pop %v3387
        %v3390 = vmul.f32 %v3386, %v3388
        %v3391 = vmul.f32 %v3387, %v3389
        %v3392 = vsub.f32 2.0, %v3390
        %v3393 = vsub.f32 2.0, %v3391
        %v3394 = vmul.f32 %v3388, %v3392
        %v3395 = vmul.f32 %v3389, %v3393
        %v3396 = vmul.f32 %v3382, %v3394
        %v3397 = vmul.f32 %v3383, %v3395
        %v3398 = vmul.f32 %v3376, %v3396
        %v3399 = vmul.f32 %v3377, %v3397
        %v3400 = vmul.f32 %v3398, %v3398
        %v3401 = vmul.f32 %v3399, %v3399
        %v3402 = vmul.f32 %v3400, %v3398
        %v3403 = vmul.f32 %v3401, %v3399
        %v3404 = vmul.f32 %v3011, %v3402
        %v3405 = vmul.f32 %v3012, %v3403
        %v3406 = vld [vmem:[#allocation10] sm:$0xff]
        %v3407 = vld [vmem:[#allocation10 + $0x8] sm:$0xff]
        %v3408 = vmul.f32 %v2526, %v3406
        %v3409 = vmul.f32 %v2527, %v3407
        %v3410 = vmul.f32 %v3404, 5.0
        %v3411 = vmul.f32 %v3405, 5.0
        %v3412 = vsub.f32 %v3408, %v3410
        %v3413 = vsub.f32 %v3409, %v3411
        %v3414 = vsel %vm350, %v3412, 0.0
        %v3415 = vsel %vm350, %v3413, 0.0
        %v3416 = vadd.f32 %v3414, %v3415
        %3417 = vadd.xlane.f32.xlu0 %v3416
        %v3418 = vpop.xlane.xlu0 %3417
        %v3419 = vrot.slane %v3418, 4
        %v3420 = vadd.f32 %v3418, %v3419
        %v3421 = vrot.slane %v3420, 2
        %v3422 = vadd.f32 %v3420, %v3421
        %v3423 = vrot.slane %v3422, 1
        %v3424 = vadd.f32 %v3422, %v3423
        %s3425 = vtos %v3424
        %s3426 = sadd.f32 %s3425, 1280.0
        %v3427 = vstv %s3426
        %v3428 = vadd.f32 %v3427, 0.0
        %3429 = vst [vmem:[%s327] sm:$0xff] %v3428
        %s3430 = sand.u32 %s149, 1
        %s3431 = scalar_lea.sflag [#allocation4], %s3430
        %s3432 = sand.u32 %s149, 1
        %s3433 = smul.addr %s3432, 8
        %s3434 = scalar_lea.vmem [#allocation11], %s3433
        // Predicated region
        $region61: #{tpu_custom_call.1} parent=39 // pred_check
          %p3435 = pneg %p159
        $region62: #{tpu_custom_call.1} parent=39 // pred_check_branch
          %3437 = sbr.rel (%p3435) target = $region64
        $region63: #{tpu_custom_call.1} parent=39 // pred_region
          %s3439 = ssub.s32 128, 128
          %3440 = vsyncadd %s3431, %s3439
          %s3441 = smul.addr %s26, 128
          %s3442 = scalar_lea.hbm %s5, %s3441
          %s3444 = sshll.u32 %s3434, 4
          %s3445 = int_to_ptr.vmem [resolvable:$true] %s3444
          %3447 = dma.vmem_to_hbm [thread:$0]  %s3445, 128, %s3442, %s3431
        $region64: #{tpu_custom_call.1} parent=39 // pred_fallthru
          _
      $region40: #{tpu_custom_call.1} parent=5 // pred_fallthru
        _
      %p3448 = scmp.le.s32.totalorder 2, %s21
      // Predicated region
      $region65: #{tpu_custom_call.1} parent=5 // pred_check
        %p3449 = pneg %p3448
      $region66: #{tpu_custom_call.1} parent=5 // pred_check_branch
        %3451 = sbr.rel (%p3449) target = $region68
      $region67: #{tpu_custom_call.1} parent=5 // pred_region
        %s3452 = ssub.s32 %s21, 2
        // Predicated region
        $region69: #{tpu_custom_call.1} parent=67 // pred_check
          %p3453 = pneg %p165
        $region70: #{tpu_custom_call.1} parent=67 // pred_check_branch
          %3455 = sbr.rel (%p3453) target = $region72
        $region71: #{tpu_custom_call.1} parent=67 // pred_region
          %s3456 = sand.u32 %s150, 1
          %s3457 = scalar_lea.sflag [#allocation4], %s3456
          %s3458 = sand.u32 %s150, 1
          %s3459 = smul.addr %s3458, 8
          %s3460 = scalar_lea.vmem [#allocation11], %s3459
          %3461 = dma.done %s3457, 128
        $region72: #{tpu_custom_call.1} parent=67 // pred_fallthru
          _
      $region68: #{tpu_custom_call.1} parent=5 // pred_fallthru
        _
    $region6: #{tpu_custom_call.1} parent=1 // loop_footer
      %s25 = sadd.s32 1, %s21
    $region7: #{tpu_custom_call.1} parent=1 // loop_footer_branch
      %20 = sbr.rel target = $region3
    $region8: #{tpu_custom_call.1} parent=1 // loop_exit
      _
    %3462 = vsyncpa [#allocation3], 1
    %s3463 = scalar_lea.sflag [#allocation3], 1
    %3464 = vsyncpa %s3463, 1
    %3465 = vsyncpa [#allocation6], 1
    %s3466 = scalar_lea.sflag [#allocation6], 1
    %3467 = vsyncpa %s3466, 1
    %3468 = vsyncpa [#allocation9], 1
    %3469 = vsyncpa [#allocation4], 1
    %s3470 = scalar_lea.sflag [#allocation4], 1
    %3471 = vsyncpa %s3470, 1

</llo_original>
